<compile_context>
chip_gen: v7x
topology: tpu7x:2x2x1
jax: 0.10.0
libtpu: 0.0.40
codegen_flags: <defaults>
</compile_context>

<pallas_src>
import functools

import numpy as np
import jax
import jax.numpy as jnp
from jax.experimental import pallas as pl
from jax.experimental.pallas import tpu as pltpu


def _round_up(x, m):
    return ((x + m - 1) // m) * m


# ----------------------------------------------------------------------------
# Encoder kernel: whole sequence resident in VMEM, unrolled time loop inside.
# ----------------------------------------------------------------------------
def _encoder_kernel(emb_ref, w_ref, b_ref, h_out_ref, c_out_ref):
    S = emb_ref.shape[0]
    Hp = w_ref.shape[1] // 4

    w = w_ref[...]                      # (Ep+Hp, 4Hp), stays in VMEM
    b = b_ref[...]                      # (1, 4Hp)

    def step(t, carry):
        h, c = carry
        x = emb_ref[t]                                    # (B, Ep)
        xh = jnp.concatenate([x, h], axis=1)              # (B, Ep+Hp)
        gates = jnp.dot(xh, w, preferred_element_type=jnp.float32) + b
        i = jax.nn.sigmoid(gates[:, 0 * Hp:1 * Hp])
        f = jax.nn.sigmoid(gates[:, 1 * Hp:2 * Hp])
        g = jnp.tanh(gates[:, 2 * Hp:3 * Hp])
        o = jax.nn.sigmoid(gates[:, 3 * Hp:4 * Hp])
        c_new = f * c + i * g
        h_new = o * jnp.tanh(c_new)
        return h_new, c_new

    h0 = jnp.zeros(h_out_ref.shape, jnp.float32)
    c0 = jnp.zeros(c_out_ref.shape, jnp.float32)
    h, c = jax.lax.fori_loop(0, S, step, (h0, c0), unroll=True)
    h_out_ref[...] = h
    c_out_ref[...] = c


def encoder_forward(emb_src_tbe, enc_w, enc_b):
    """emb_src_tbe: (S, B, Ep) f32 -> (h, c) each (B, Hp)."""
    _, B, _ = emb_src_tbe.shape
    Hp = enc_w.shape[1] // 4
    vmem = pl.BlockSpec(memory_space=pltpu.MemorySpace.VMEM)
    return pl.pallas_call(
        _encoder_kernel,
        out_shape=(jax.ShapeDtypeStruct((B, Hp), jnp.float32),
                   jax.ShapeDtypeStruct((B, Hp), jnp.float32)),
        in_specs=[vmem, vmem, vmem],
        out_specs=(vmem, vmem),
    )(emb_src_tbe, enc_w, enc_b)


# ----------------------------------------------------------------------------
# Fused decoder kernel: grid over decode steps, weights resident, h/c/token
# one-hot carried in VMEM scratch, argmax + embedding lookup in-kernel.
# ----------------------------------------------------------------------------
def _decoder_kernel(tf_ref, trg_oh_ref, emb_ref, w_ref, b_ref, wfc_ref, bfc_ref,
                    h0_ref, c0_ref, logits_ref, h_sc, c_sc, xoh_sc, *, V):
    s = pl.program_id(0)
    Hp = w_ref.shape[1] // 4
    Vp = emb_ref.shape[0]

    @pl.when(s == 0)
    def _():
        h_sc[...] = h0_ref[...]
        c_sc[...] = c0_ref[...]
        xoh_sc[...] = trg_oh_ref[0]          # one-hot of trg[:, 0]

    # Embedding lookup as a one-hot matmul on the MXU (gather stays in-kernel).
    x = jnp.dot(xoh_sc[...], emb_ref[...], preferred_element_type=jnp.float32)

    h = h_sc[...]
    c = c_sc[...]
    xh = jnp.concatenate([x, h], axis=1)                  # (B, Ep+Hp)
    gates = (jnp.dot(xh, w_ref[...], preferred_element_type=jnp.float32)
             + b_ref[...])
    i = jax.nn.sigmoid(gates[:, 0 * Hp:1 * Hp])
    f = jax.nn.sigmoid(gates[:, 1 * Hp:2 * Hp])
    g = jnp.tanh(gates[:, 2 * Hp:3 * Hp])
    o = jax.nn.sigmoid(gates[:, 3 * Hp:4 * Hp])
    c_new = f * c + i * g
    h_new = o * jnp.tanh(c_new)
    h_sc[...] = h_new
    c_sc[...] = c_new

    logits = (jnp.dot(h_new, wfc_ref[...], preferred_element_type=jnp.float32)
              + bfc_ref[...])                             # (B, Vp), lane-dense
    logits_ref[0] = logits

    # Next input token: teacher forcing (trg[:, s+1]) vs argmax of this output.
    lane = jax.lax.broadcasted_iota(jnp.int32, logits.shape, 1)
    masked = jnp.where(lane < V, logits, -1e30)           # ignore padded lanes
    row_max = jnp.max(masked, axis=1, keepdims=True)
    cand = jnp.where(masked == row_max, lane, Vp)
    top1 = jnp.min(cand, axis=1, keepdims=True)           # lowest-index tie-break
    top1_oh = (lane == top1).astype(jnp.float32)
    teach_oh = trg_oh_ref[s + 1]
    tf = tf_ref[s]
    xoh_sc[...] = jnp.where(tf != 0, teach_oh, top1_oh)


def decoder_forward(tf_mask, trg_oh, dec_emb, dec_w, dec_b, fc_w, fc_b, h0, c0,
                    *, tar_vocab):
    """Runs the whole decode loop; returns logits (trg_len-1, B, Vp)."""
    T = tf_mask.shape[0]                 # trg_len - 1
    trg_len, B, Vp = trg_oh.shape
    Hp = h0.shape[1]
    Ep = dec_emb.shape[1]

    return pl.pallas_call(
        functools.partial(_decoder_kernel, V=tar_vocab),
        out_shape=jax.ShapeDtypeStruct((T, B, Vp), jnp.float32),
        grid_spec=pltpu.PrefetchScalarGridSpec(
            num_scalar_prefetch=1,
            grid=(T,),
            in_specs=[
                pl.BlockSpec((trg_len, B, Vp), lambda s, tf: (0, 0, 0)),
                pl.BlockSpec((Vp, Ep), lambda s, tf: (0, 0)),
                pl.BlockSpec((Ep + Hp, 4 * Hp), lambda s, tf: (0, 0)),
                pl.BlockSpec((1, 4 * Hp), lambda s, tf: (0, 0)),
                pl.BlockSpec((Hp, Vp), lambda s, tf: (0, 0)),
                pl.BlockSpec((1, Vp), lambda s, tf: (0, 0)),
                pl.BlockSpec((B, Hp), lambda s, tf: (0, 0)),
                pl.BlockSpec((B, Hp), lambda s, tf: (0, 0)),
            ],
            out_specs=pl.BlockSpec((1, B, Vp), lambda s, tf: (s, 0, 0)),
            scratch_shapes=[pltpu.VMEM((B, Hp), jnp.float32),
                            pltpu.VMEM((B, Hp), jnp.float32),
                            pltpu.VMEM((B, Vp), jnp.float32)]),
        compiler_params=pltpu.CompilerParams(
            dimension_semantics=("arbitrary",)),
    )(tf_mask, trg_oh, dec_emb, dec_w, dec_b, fc_w, fc_b, h0, c0)


# ----------------------------------------------------------------------------
# Parameters: generated at logical sizes (PyTorch-like init), then padded to
# lane/sublane-aligned layouts.  Gate order i, f, g, o; each gate placed at a
# 128-lane-aligned column block; padded rows/cols/biases are zero so the padded
# hidden units stay exactly zero.
# ----------------------------------------------------------------------------
def init_params(key, src_vocab, tar_vocab, embed_dim, hidden_dim):
    Ep = _round_up(embed_dim, 128)
    Hp = _round_up(hidden_dim, 128)
    Vp = _round_up(tar_vocab, 128)

    ks = jax.random.split(key, 12)
    kstd = 1.0 / np.sqrt(hidden_dim)

    def unif(k, shape):
        return jax.random.uniform(k, shape, jnp.float32, -kstd, kstd)

    def fused_lstm_w(k_ih, k_hh):
        w_ih = unif(k_ih, (embed_dim, 4 * hidden_dim))    # (E, 4H), W_ih^T
        w_hh = unif(k_hh, (hidden_dim, 4 * hidden_dim))   # (H, 4H), W_hh^T
        w = jnp.zeros((Ep + Hp, 4 * Hp), jnp.float32)
        for g in range(4):
            w = w.at[:embed_dim, g * Hp:g * Hp + hidden_dim].set(
                w_ih[:, g * hidden_dim:(g + 1) * hidden_dim])
            w = w.at[Ep:Ep + hidden_dim, g * Hp:g * Hp + hidden_dim].set(
                w_hh[:, g * hidden_dim:(g + 1) * hidden_dim])
        return w

    def fused_lstm_b(k1, k2):
        b = unif(k1, (1, 4 * hidden_dim)) + unif(k2, (1, 4 * hidden_dim))
        bp = jnp.zeros((1, 4 * Hp), jnp.float32)
        for g in range(4):
            bp = bp.at[:, g * Hp:g * Hp + hidden_dim].set(
                b[:, g * hidden_dim:(g + 1) * hidden_dim])
        return bp

    # Embeddings: N(0,1), padding_idx=0 row zeroed (nn.Embedding semantics).
    enc_emb = jax.random.normal(ks[0], (src_vocab, embed_dim), jnp.float32)
    enc_emb = enc_emb.at[0].set(0.0)
    enc_emb = jnp.pad(enc_emb, ((0, 0), (0, Ep - embed_dim)))

    dec_emb = jax.random.normal(ks[1], (tar_vocab, embed_dim), jnp.float32)
    dec_emb = dec_emb.at[0].set(0.0)
    dec_emb = jnp.pad(dec_emb, ((0, Vp - tar_vocab), (0, Ep - embed_dim)))

    fc_w = unif(ks[10], (hidden_dim, tar_vocab))          # (H, V) = W^T
    fc_w = jnp.pad(fc_w, ((0, Hp - hidden_dim), (0, Vp - tar_vocab)))
    fc_b = unif(ks[11], (1, tar_vocab))
    fc_b = jnp.pad(fc_b, ((0, 0), (0, Vp - tar_vocab)))

    return {
        "enc_emb": enc_emb,                               # (src_vocab, Ep)
        "dec_emb": dec_emb,                               # (Vp, Ep)
        "enc_w": fused_lstm_w(ks[2], ks[3]),              # (Ep+Hp, 4Hp)
        "enc_b": fused_lstm_b(ks[4], ks[5]),              # (1, 4Hp)
        "dec_w": fused_lstm_w(ks[6], ks[7]),
        "dec_b": fused_lstm_b(ks[8], ks[9]),
        "fc_w": fc_w,                                     # (Hp, Vp)
        "fc_b": fc_b,                                     # (1, Vp)
    }


# ----------------------------------------------------------------------------
# Seq2Seq forward.  Teacher-forcing decisions are a data argument (tf_mask),
# so the whole forward is safely jittable (no Python RNG frozen at trace time).
# ----------------------------------------------------------------------------
@functools.partial(jax.jit, static_argnames=("tar_vocab",))
def seq2seq_forward(params, src, trg, tf_mask, *, tar_vocab):
    """src: (B, S_src) int32, trg: (B, S_trg) int32, tf_mask: (S_trg-1,) int32
       -> (B, S_trg, tar_vocab) float32, outputs[:, 0] == 0."""
    B, trg_len = trg.shape
    Vp = params["dec_emb"].shape[0]

    # ---- Encoder -----------------------------------------------------------
    emb_src = jnp.take(params["enc_emb"], src, axis=0)    # (B, S, Ep) one-time gather
    emb_src = jnp.transpose(emb_src, (1, 0, 2))           # (S, B, Ep) time-major
    hidden, cell = encoder_forward(emb_src, params["enc_w"], params["enc_b"])

    # ---- Decoder (single fused kernel over all steps) ------------------------
    trg_oh = jax.nn.one_hot(trg, Vp, dtype=jnp.float32)   # (B, trg_len, Vp)
    trg_oh = jnp.transpose(trg_oh, (1, 0, 2))             # (trg_len, B, Vp)
    logits = decoder_forward(tf_mask, trg_oh,
                             params["dec_emb"], params["dec_w"], params["dec_b"],
                             params["fc_w"], params["fc_b"],
                             hidden, cell, tar_vocab=tar_vocab)
    logits = logits[:, :, :tar_vocab]                      # strip vocab padding
    outputs = jnp.concatenate(
        [jnp.zeros((1, B, tar_vocab), jnp.float32), logits], axis=0)
    return jnp.transpose(outputs, (1, 0, 2))               # (B, trg_len, V)


if __name__ == "__main__":
    # Small, deterministic example shapes consistent with the module.
    B = 8                  # sublane-aligned batch for f32 tiles
    SRC_LEN = 12
    TRG_LEN = 10
    EMBED_DIM = 64
    HIDDEN_DIM = 64
    SRC_VOCAB = 29
    TAR_VOCAB = 35

    # Teacher forcing decisions precomputed host-side (same count/order as the
    # reference's per-step np.random.random() draws), seeded deterministically.
    np.random.seed(0)
    tf_mask = jnp.asarray(
        (np.random.random(TRG_LEN - 1) < 0.5).astype(np.int32))

    key = jax.random.PRNGKey(0)
    k_params, k_src, k_trg = jax.random.split(key, 3)
    params = init_params(k_params, SRC_VOCAB, TAR_VOCAB, EMBED_DIM, HIDDEN_DIM)
    src = jax.random.randint(k_src, (B, SRC_LEN), 1, SRC_VOCAB, jnp.int32)
    trg = jax.random.randint(k_trg, (B, TRG_LEN), 1, TAR_VOCAB, jnp.int32)

    out = seq2seq_forward(params, src, trg, tf_mask, tar_vocab=TAR_VOCAB)
    out = jax.block_until_ready(out)
    assert out.shape == (B, TRG_LEN, TAR_VOCAB)
    assert bool(jnp.all(out[:, 0] == 0.0))
    assert bool(jnp.all(jnp.isfinite(out)))
    print("KERNEL_OK")
</pallas_src>

<mosaic_0001>
module attributes {stable_mosaic.version = 11 : i64} {
  func.func @_encoder_kernel(%arg0: memref<12x8x128xf32, #tpu.memory_space<vmem>>, %arg1: memref<256x512xf32, #tpu.memory_space<vmem>>, %arg2: memref<1x512xf32, #tpu.memory_space<vmem>>, %arg3: memref<8x128xf32, #tpu.memory_space<vmem>>, %arg4: memref<8x128xf32, #tpu.memory_space<vmem>>) attributes {dimension_semantics = [], scalar_prefetch = 0 : i64, scratch_operands = 0 : i64, tpu.core_type = #tpu.core_type<tc>} {
    %c0 = arith.constant 0 : index
    %c0_0 = arith.constant 0 : index
    %0 = vector.load %arg1[%c0, %c0_0] : memref<256x512xf32, #tpu.memory_space<vmem>>, vector<256x512xf32>
    %c0_1 = arith.constant 0 : index
    %c0_2 = arith.constant 0 : index
    %1 = vector.load %arg2[%c0_1, %c0_2] : memref<1x512xf32, #tpu.memory_space<vmem>>, vector<1x512xf32>
    %cst = arith.constant 0.000000e+00 : f32
    %2 = vector.broadcast %cst : f32 to vector<8x128xf32>
    %cst_3 = arith.constant 0.000000e+00 : f32
    %3 = vector.broadcast %cst_3 : f32 to vector<8x128xf32>
    %c0_i32 = arith.constant 0 : i32
    %4 = arith.index_cast %c0_i32 : i32 to index
    %c0_4 = arith.constant 0 : index
    %c0_5 = arith.constant 0 : index
    %5 = vector.load %arg0[%4, %c0_4, %c0_5] : memref<12x8x128xf32, #tpu.memory_space<vmem>>, vector<1x8x128xf32>
    %6 = vector.shape_cast %5 : vector<1x8x128xf32> to vector<8x128xf32>
    %7 = tpu.concatenate %6, %2 in 1 : vector<8x128xf32>, vector<8x128xf32> -> vector<8x256xf32>
    %cst_6 = arith.constant dense<0.000000e+00> : vector<8x512xf32>
    %8 = tpu.matmul %7, %0, %cst_6 {dimension_numbers = #tpu.dot_dimension_numbers<[1], [0], [0], [1], [0, 0, 1, 1], [], []>} : vector<8x256xf32>, vector<256x512xf32>, vector<8x512xf32> -> vector<8x512xf32>
    %9 = vector.broadcast %1 : vector<1x512xf32> to vector<8x512xf32>
    %10 = arith.addf %8, %9 : vector<8x512xf32>
    %11 = vector.extract_strided_slice %10 {offsets = [0, 0], sizes = [8, 128], strides = [1, 1]} : vector<8x512xf32> to vector<8x128xf32>
    %12 = arith.negf %11 : vector<8x128xf32>
    %13 = math.exp %12 : vector<8x128xf32>
    %cst_7 = arith.constant 1.000000e+00 : f32
    %14 = vector.broadcast %cst_7 : f32 to vector<8x128xf32>
    %15 = arith.addf %14, %13 : vector<8x128xf32>
    %16 = arith.divf %14, %15 : vector<8x128xf32>
    %17 = vector.extract_strided_slice %10 {offsets = [0, 128], sizes = [8, 128], strides = [1, 1]} : vector<8x512xf32> to vector<8x128xf32>
    %18 = arith.negf %17 : vector<8x128xf32>
    %19 = math.exp %18 : vector<8x128xf32>
    %cst_8 = arith.constant 1.000000e+00 : f32
    %20 = vector.broadcast %cst_8 : f32 to vector<8x128xf32>
    %21 = arith.addf %20, %19 : vector<8x128xf32>
    %22 = arith.divf %20, %21 : vector<8x128xf32>
    %23 = vector.extract_strided_slice %10 {offsets = [0, 256], sizes = [8, 128], strides = [1, 1]} : vector<8x512xf32> to vector<8x128xf32>
    %24 = math.tanh %23 : vector<8x128xf32>
    %25 = vector.extract_strided_slice %10 {offsets = [0, 384], sizes = [8, 128], strides = [1, 1]} : vector<8x512xf32> to vector<8x128xf32>
    %26 = arith.negf %25 : vector<8x128xf32>
    %27 = math.exp %26 : vector<8x128xf32>
    %cst_9 = arith.constant 1.000000e+00 : f32
    %28 = vector.broadcast %cst_9 : f32 to vector<8x128xf32>
    %29 = arith.addf %28, %27 : vector<8x128xf32>
    %30 = arith.divf %28, %29 : vector<8x128xf32>
    %31 = arith.mulf %22, %3 : vector<8x128xf32>
    %32 = arith.mulf %16, %24 : vector<8x128xf32>
    %33 = arith.addf %31, %32 : vector<8x128xf32>
    %34 = math.tanh %33 : vector<8x128xf32>
    %35 = arith.mulf %30, %34 : vector<8x128xf32>
    %c1_i32 = arith.constant 1 : i32
    %36 = arith.index_cast %c1_i32 : i32 to index
    %c0_10 = arith.constant 0 : index
    %c0_11 = arith.constant 0 : index
    %37 = vector.load %arg0[%36, %c0_10, %c0_11] : memref<12x8x128xf32, #tpu.memory_space<vmem>>, vector<1x8x128xf32>
    %38 = vector.shape_cast %37 : vector<1x8x128xf32> to vector<8x128xf32>
    %39 = tpu.concatenate %38, %35 in 1 : vector<8x128xf32>, vector<8x128xf32> -> vector<8x256xf32>
    %cst_12 = arith.constant dense<0.000000e+00> : vector<8x512xf32>
    %40 = tpu.matmul %39, %0, %cst_12 {dimension_numbers = #tpu.dot_dimension_numbers<[1], [0], [0], [1], [0, 0, 1, 1], [], []>} : vector<8x256xf32>, vector<256x512xf32>, vector<8x512xf32> -> vector<8x512xf32>
    %41 = vector.broadcast %1 : vector<1x512xf32> to vector<8x512xf32>
    %42 = arith.addf %40, %41 : vector<8x512xf32>
    %43 = vector.extract_strided_slice %42 {offsets = [0, 0], sizes = [8, 128], strides = [1, 1]} : vector<8x512xf32> to vector<8x128xf32>
    %44 = arith.negf %43 : vector<8x128xf32>
    %45 = math.exp %44 : vector<8x128xf32>
    %cst_13 = arith.constant 1.000000e+00 : f32
    %46 = vector.broadcast %cst_13 : f32 to vector<8x128xf32>
    %47 = arith.addf %46, %45 : vector<8x128xf32>
    %48 = arith.divf %46, %47 : vector<8x128xf32>
    %49 = vector.extract_strided_slice %42 {offsets = [0, 128], sizes = [8, 128], strides = [1, 1]} : vector<8x512xf32> to vector<8x128xf32>
    %50 = arith.negf %49 : vector<8x128xf32>
    %51 = math.exp %50 : vector<8x128xf32>
    %cst_14 = arith.constant 1.000000e+00 : f32
    %52 = vector.broadcast %cst_14 : f32 to vector<8x128xf32>
    %53 = arith.addf %52, %51 : vector<8x128xf32>
    %54 = arith.divf %52, %53 : vector<8x128xf32>
    %55 = vector.extract_strided_slice %42 {offsets = [0, 256], sizes = [8, 128], strides = [1, 1]} : vector<8x512xf32> to vector<8x128xf32>
    %56 = math.tanh %55 : vector<8x128xf32>
    %57 = vector.extract_strided_slice %42 {offsets = [0, 384], sizes = [8, 128], strides = [1, 1]} : vector<8x512xf32> to vector<8x128xf32>
    %58 = arith.negf %57 : vector<8x128xf32>
    %59 = math.exp %58 : vector<8x128xf32>
    %cst_15 = arith.constant 1.000000e+00 : f32
    %60 = vector.broadcast %cst_15 : f32 to vector<8x128xf32>
    %61 = arith.addf %60, %59 : vector<8x128xf32>
    %62 = arith.divf %60, %61 : vector<8x128xf32>
    %63 = arith.mulf %54, %33 : vector<8x128xf32>
    %64 = arith.mulf %48, %56 : vector<8x128xf32>
    %65 = arith.addf %63, %64 : vector<8x128xf32>
    %66 = math.tanh %65 : vector<8x128xf32>
    %67 = arith.mulf %62, %66 : vector<8x128xf32>
    %c2_i32 = arith.constant 2 : i32
    %68 = arith.index_cast %c2_i32 : i32 to index
    %c0_16 = arith.constant 0 : index
    %c0_17 = arith.constant 0 : index
    %69 = vector.load %arg0[%68, %c0_16, %c0_17] : memref<12x8x128xf32, #tpu.memory_space<vmem>>, vector<1x8x128xf32>
    %70 = vector.shape_cast %69 : vector<1x8x128xf32> to vector<8x128xf32>
    %71 = tpu.concatenate %70, %67 in 1 : vector<8x128xf32>, vector<8x128xf32> -> vector<8x256xf32>
    %cst_18 = arith.constant dense<0.000000e+00> : vector<8x512xf32>
    %72 = tpu.matmul %71, %0, %cst_18 {dimension_numbers = #tpu.dot_dimension_numbers<[1], [0], [0], [1], [0, 0, 1, 1], [], []>} : vector<8x256xf32>, vector<256x512xf32>, vector<8x512xf32> -> vector<8x512xf32>
    %73 = vector.broadcast %1 : vector<1x512xf32> to vector<8x512xf32>
    %74 = arith.addf %72, %73 : vector<8x512xf32>
    %75 = vector.extract_strided_slice %74 {offsets = [0, 0], sizes = [8, 128], strides = [1, 1]} : vector<8x512xf32> to vector<8x128xf32>
    %76 = arith.negf %75 : vector<8x128xf32>
    %77 = math.exp %76 : vector<8x128xf32>
    %cst_19 = arith.constant 1.000000e+00 : f32
    %78 = vector.broadcast %cst_19 : f32 to vector<8x128xf32>
    %79 = arith.addf %78, %77 : vector<8x128xf32>
    %80 = arith.divf %78, %79 : vector<8x128xf32>
    %81 = vector.extract_strided_slice %74 {offsets = [0, 128], sizes = [8, 128], strides = [1, 1]} : vector<8x512xf32> to vector<8x128xf32>
    %82 = arith.negf %81 : vector<8x128xf32>
    %83 = math.exp %82 : vector<8x128xf32>
    %cst_20 = arith.constant 1.000000e+00 : f32
    %84 = vector.broadcast %cst_20 : f32 to vector<8x128xf32>
    %85 = arith.addf %84, %83 : vector<8x128xf32>
    %86 = arith.divf %84, %85 : vector<8x128xf32>
    %87 = vector.extract_strided_slice %74 {offsets = [0, 256], sizes = [8, 128], strides = [1, 1]} : vector<8x512xf32> to vector<8x128xf32>
    %88 = math.tanh %87 : vector<8x128xf32>
    %89 = vector.extract_strided_slice %74 {offsets = [0, 384], sizes = [8, 128], strides = [1, 1]} : vector<8x512xf32> to vector<8x128xf32>
    %90 = arith.negf %89 : vector<8x128xf32>
    %91 = math.exp %90 : vector<8x128xf32>
    %cst_21 = arith.constant 1.000000e+00 : f32
    %92 = vector.broadcast %cst_21 : f32 to vector<8x128xf32>
    %93 = arith.addf %92, %91 : vector<8x128xf32>
    %94 = arith.divf %92, %93 : vector<8x128xf32>
    %95 = arith.mulf %86, %65 : vector<8x128xf32>
    %96 = arith.mulf %80, %88 : vector<8x128xf32>
    %97 = arith.addf %95, %96 : vector<8x128xf32>
    %98 = math.tanh %97 : vector<8x128xf32>
    %99 = arith.mulf %94, %98 : vector<8x128xf32>
    %c3_i32 = arith.constant 3 : i32
    %100 = arith.index_cast %c3_i32 : i32 to index
    %c0_22 = arith.constant 0 : index
    %c0_23 = arith.constant 0 : index
    %101 = vector.load %arg0[%100, %c0_22, %c0_23] : memref<12x8x128xf32, #tpu.memory_space<vmem>>, vector<1x8x128xf32>
    %102 = vector.shape_cast %101 : vector<1x8x128xf32> to vector<8x128xf32>
    %103 = tpu.concatenate %102, %99 in 1 : vector<8x128xf32>, vector<8x128xf32> -> vector<8x256xf32>
    %cst_24 = arith.constant dense<0.000000e+00> : vector<8x512xf32>
    %104 = tpu.matmul %103, %0, %cst_24 {dimension_numbers = #tpu.dot_dimension_numbers<[1], [0], [0], [1], [0, 0, 1, 1], [], []>} : vector<8x256xf32>, vector<256x512xf32>, vector<8x512xf32> -> vector<8x512xf32>
    %105 = vector.broadcast %1 : vector<1x512xf32> to vector<8x512xf32>
    %106 = arith.addf %104, %105 : vector<8x512xf32>
    %107 = vector.extract_strided_slice %106 {offsets = [0, 0], sizes = [8, 128], strides = [1, 1]} : vector<8x512xf32> to vector<8x128xf32>
    %108 = arith.negf %107 : vector<8x128xf32>
    %109 = math.exp %108 : vector<8x128xf32>
    %cst_25 = arith.constant 1.000000e+00 : f32
    %110 = vector.broadcast %cst_25 : f32 to vector<8x128xf32>
    %111 = arith.addf %110, %109 : vector<8x128xf32>
    %112 = arith.divf %110, %111 : vector<8x128xf32>
    %113 = vector.extract_strided_slice %106 {offsets = [0, 128], sizes = [8, 128], strides = [1, 1]} : vector<8x512xf32> to vector<8x128xf32>
    %114 = arith.negf %113 : vector<8x128xf32>
    %115 = math.exp %114 : vector<8x128xf32>
    %cst_26 = arith.constant 1.000000e+00 : f32
    %116 = vector.broadcast %cst_26 : f32 to vector<8x128xf32>
    %117 = arith.addf %116, %115 : vector<8x128xf32>
    %118 = arith.divf %116, %117 : vector<8x128xf32>
    %119 = vector.extract_strided_slice %106 {offsets = [0, 256], sizes = [8, 128], strides = [1, 1]} : vector<8x512xf32> to vector<8x128xf32>
    %120 = math.tanh %119 : vector<8x128xf32>
    %121 = vector.extract_strided_slice %106 {offsets = [0, 384], sizes = [8, 128], strides = [1, 1]} : vector<8x512xf32> to vector<8x128xf32>
    %122 = arith.negf %121 : vector<8x128xf32>
    %123 = math.exp %122 : vector<8x128xf32>
    %cst_27 = arith.constant 1.000000e+00 : f32
    %124 = vector.broadcast %cst_27 : f32 to vector<8x128xf32>
    %125 = arith.addf %124, %123 : vector<8x128xf32>
    %126 = arith.divf %124, %125 : vector<8x128xf32>
    %127 = arith.mulf %118, %97 : vector<8x128xf32>
    %128 = arith.mulf %112, %120 : vector<8x128xf32>
    %129 = arith.addf %127, %128 : vector<8x128xf32>
    %130 = math.tanh %129 : vector<8x128xf32>
    %131 = arith.mulf %126, %130 : vector<8x128xf32>
    %c4_i32 = arith.constant 4 : i32
    %132 = arith.index_cast %c4_i32 : i32 to index
    %c0_28 = arith.constant 0 : index
    %c0_29 = arith.constant 0 : index
    %133 = vector.load %arg0[%132, %c0_28, %c0_29] : memref<12x8x128xf32, #tpu.memory_space<vmem>>, vector<1x8x128xf32>
    %134 = vector.shape_cast %133 : vector<1x8x128xf32> to vector<8x128xf32>
    %135 = tpu.concatenate %134, %131 in 1 : vector<8x128xf32>, vector<8x128xf32> -> vector<8x256xf32>
    %cst_30 = arith.constant dense<0.000000e+00> : vector<8x512xf32>
    %136 = tpu.matmul %135, %0, %cst_30 {dimension_numbers = #tpu.dot_dimension_numbers<[1], [0], [0], [1], [0, 0, 1, 1], [], []>} : vector<8x256xf32>, vector<256x512xf32>, vector<8x512xf32> -> vector<8x512xf32>
    %137 = vector.broadcast %1 : vector<1x512xf32> to vector<8x512xf32>
    %138 = arith.addf %136, %137 : vector<8x512xf32>
    %139 = vector.extract_strided_slice %138 {offsets = [0, 0], sizes = [8, 128], strides = [1, 1]} : vector<8x512xf32> to vector<8x128xf32>
    %140 = arith.negf %139 : vector<8x128xf32>
    %141 = math.exp %140 : vector<8x128xf32>
    %cst_31 = arith.constant 1.000000e+00 : f32
    %142 = vector.broadcast %cst_31 : f32 to vector<8x128xf32>
    %143 = arith.addf %142, %141 : vector<8x128xf32>
    %144 = arith.divf %142, %143 : vector<8x128xf32>
    %145 = vector.extract_strided_slice %138 {offsets = [0, 128], sizes = [8, 128], strides = [1, 1]} : vector<8x512xf32> to vector<8x128xf32>
    %146 = arith.negf %145 : vector<8x128xf32>
    %147 = math.exp %146 : vector<8x128xf32>
    %cst_32 = arith.constant 1.000000e+00 : f32
    %148 = vector.broadcast %cst_32 : f32 to vector<8x128xf32>
    %149 = arith.addf %148, %147 : vector<8x128xf32>
    %150 = arith.divf %148, %149 : vector<8x128xf32>
    %151 = vector.extract_strided_slice %138 {offsets = [0, 256], sizes = [8, 128], strides = [1, 1]} : vector<8x512xf32> to vector<8x128xf32>
    %152 = math.tanh %151 : vector<8x128xf32>
    %153 = vector.extract_strided_slice %138 {offsets = [0, 384], sizes = [8, 128], strides = [1, 1]} : vector<8x512xf32> to vector<8x128xf32>
    %154 = arith.negf %153 : vector<8x128xf32>
    %155 = math.exp %154 : vector<8x128xf32>
    %cst_33 = arith.constant 1.000000e+00 : f32
    %156 = vector.broadcast %cst_33 : f32 to vector<8x128xf32>
    %157 = arith.addf %156, %155 : vector<8x128xf32>
    %158 = arith.divf %156, %157 : vector<8x128xf32>
    %159 = arith.mulf %150, %129 : vector<8x128xf32>
    %160 = arith.mulf %144, %152 : vector<8x128xf32>
    %161 = arith.addf %159, %160 : vector<8x128xf32>
    %162 = math.tanh %161 : vector<8x128xf32>
    %163 = arith.mulf %158, %162 : vector<8x128xf32>
    %c5_i32 = arith.constant 5 : i32
    %164 = arith.index_cast %c5_i32 : i32 to index
    %c0_34 = arith.constant 0 : index
    %c0_35 = arith.constant 0 : index
    %165 = vector.load %arg0[%164, %c0_34, %c0_35] : memref<12x8x128xf32, #tpu.memory_space<vmem>>, vector<1x8x128xf32>
    %166 = vector.shape_cast %165 : vector<1x8x128xf32> to vector<8x128xf32>
    %167 = tpu.concatenate %166, %163 in 1 : vector<8x128xf32>, vector<8x128xf32> -> vector<8x256xf32>
    %cst_36 = arith.constant dense<0.000000e+00> : vector<8x512xf32>
    %168 = tpu.matmul %167, %0, %cst_36 {dimension_numbers = #tpu.dot_dimension_numbers<[1], [0], [0], [1], [0, 0, 1, 1], [], []>} : vector<8x256xf32>, vector<256x512xf32>, vector<8x512xf32> -> vector<8x512xf32>
    %169 = vector.broadcast %1 : vector<1x512xf32> to vector<8x512xf32>
    %170 = arith.addf %168, %169 : vector<8x512xf32>
    %171 = vector.extract_strided_slice %170 {offsets = [0, 0], sizes = [8, 128], strides = [1, 1]} : vector<8x512xf32> to vector<8x128xf32>
    %172 = arith.negf %171 : vector<8x128xf32>
    %173 = math.exp %172 : vector<8x128xf32>
    %cst_37 = arith.constant 1.000000e+00 : f32
    %174 = vector.broadcast %cst_37 : f32 to vector<8x128xf32>
    %175 = arith.addf %174, %173 : vector<8x128xf32>
    %176 = arith.divf %174, %175 : vector<8x128xf32>
    %177 = vector.extract_strided_slice %170 {offsets = [0, 128], sizes = [8, 128], strides = [1, 1]} : vector<8x512xf32> to vector<8x128xf32>
    %178 = arith.negf %177 : vector<8x128xf32>
    %179 = math.exp %178 : vector<8x128xf32>
    %cst_38 = arith.constant 1.000000e+00 : f32
    %180 = vector.broadcast %cst_38 : f32 to vector<8x128xf32>
    %181 = arith.addf %180, %179 : vector<8x128xf32>
    %182 = arith.divf %180, %181 : vector<8x128xf32>
    %183 = vector.extract_strided_slice %170 {offsets = [0, 256], sizes = [8, 128], strides = [1, 1]} : vector<8x512xf32> to vector<8x128xf32>
    %184 = math.tanh %183 : vector<8x128xf32>
    %185 = vector.extract_strided_slice %170 {offsets = [0, 384], sizes = [8, 128], strides = [1, 1]} : vector<8x512xf32> to vector<8x128xf32>
    %186 = arith.negf %185 : vector<8x128xf32>
    %187 = math.exp %186 : vector<8x128xf32>
    %cst_39 = arith.constant 1.000000e+00 : f32
    %188 = vector.broadcast %cst_39 : f32 to vector<8x128xf32>
    %189 = arith.addf %188, %187 : vector<8x128xf32>
    %190 = arith.divf %188, %189 : vector<8x128xf32>
    %191 = arith.mulf %182, %161 : vector<8x128xf32>
    %192 = arith.mulf %176, %184 : vector<8x128xf32>
    %193 = arith.addf %191, %192 : vector<8x128xf32>
    %194 = math.tanh %193 : vector<8x128xf32>
    %195 = arith.mulf %190, %194 : vector<8x128xf32>
    %c6_i32 = arith.constant 6 : i32
    %196 = arith.index_cast %c6_i32 : i32 to index
    %c0_40 = arith.constant 0 : index
    %c0_41 = arith.constant 0 : index
    %197 = vector.load %arg0[%196, %c0_40, %c0_41] : memref<12x8x128xf32, #tpu.memory_space<vmem>>, vector<1x8x128xf32>
    %198 = vector.shape_cast %197 : vector<1x8x128xf32> to vector<8x128xf32>
    %199 = tpu.concatenate %198, %195 in 1 : vector<8x128xf32>, vector<8x128xf32> -> vector<8x256xf32>
    %cst_42 = arith.constant dense<0.000000e+00> : vector<8x512xf32>
    %200 = tpu.matmul %199, %0, %cst_42 {dimension_numbers = #tpu.dot_dimension_numbers<[1], [0], [0], [1], [0, 0, 1, 1], [], []>} : vector<8x256xf32>, vector<256x512xf32>, vector<8x512xf32> -> vector<8x512xf32>
    %201 = vector.broadcast %1 : vector<1x512xf32> to vector<8x512xf32>
    %202 = arith.addf %200, %201 : vector<8x512xf32>
    %203 = vector.extract_strided_slice %202 {offsets = [0, 0], sizes = [8, 128], strides = [1, 1]} : vector<8x512xf32> to vector<8x128xf32>
    %204 = arith.negf %203 : vector<8x128xf32>
    %205 = math.exp %204 : vector<8x128xf32>
    %cst_43 = arith.constant 1.000000e+00 : f32
    %206 = vector.broadcast %cst_43 : f32 to vector<8x128xf32>
    %207 = arith.addf %206, %205 : vector<8x128xf32>
    %208 = arith.divf %206, %207 : vector<8x128xf32>
    %209 = vector.extract_strided_slice %202 {offsets = [0, 128], sizes = [8, 128], strides = [1, 1]} : vector<8x512xf32> to vector<8x128xf32>
    %210 = arith.negf %209 : vector<8x128xf32>
    %211 = math.exp %210 : vector<8x128xf32>
    %cst_44 = arith.constant 1.000000e+00 : f32
    %212 = vector.broadcast %cst_44 : f32 to vector<8x128xf32>
    %213 = arith.addf %212, %211 : vector<8x128xf32>
    %214 = arith.divf %212, %213 : vector<8x128xf32>
    %215 = vector.extract_strided_slice %202 {offsets = [0, 256], sizes = [8, 128], strides = [1, 1]} : vector<8x512xf32> to vector<8x128xf32>
    %216 = math.tanh %215 : vector<8x128xf32>
    %217 = vector.extract_strided_slice %202 {offsets = [0, 384], sizes = [8, 128], strides = [1, 1]} : vector<8x512xf32> to vector<8x128xf32>
    %218 = arith.negf %217 : vector<8x128xf32>
    %219 = math.exp %218 : vector<8x128xf32>
    %cst_45 = arith.constant 1.000000e+00 : f32
    %220 = vector.broadcast %cst_45 : f32 to vector<8x128xf32>
    %221 = arith.addf %220, %219 : vector<8x128xf32>
    %222 = arith.divf %220, %221 : vector<8x128xf32>
    %223 = arith.mulf %214, %193 : vector<8x128xf32>
    %224 = arith.mulf %208, %216 : vector<8x128xf32>
    %225 = arith.addf %223, %224 : vector<8x128xf32>
    %226 = math.tanh %225 : vector<8x128xf32>
    %227 = arith.mulf %222, %226 : vector<8x128xf32>
    %c7_i32 = arith.constant 7 : i32
    %228 = arith.index_cast %c7_i32 : i32 to index
    %c0_46 = arith.constant 0 : index
    %c0_47 = arith.constant 0 : index
    %229 = vector.load %arg0[%228, %c0_46, %c0_47] : memref<12x8x128xf32, #tpu.memory_space<vmem>>, vector<1x8x128xf32>
    %230 = vector.shape_cast %229 : vector<1x8x128xf32> to vector<8x128xf32>
    %231 = tpu.concatenate %230, %227 in 1 : vector<8x128xf32>, vector<8x128xf32> -> vector<8x256xf32>
    %cst_48 = arith.constant dense<0.000000e+00> : vector<8x512xf32>
    %232 = tpu.matmul %231, %0, %cst_48 {dimension_numbers = #tpu.dot_dimension_numbers<[1], [0], [0], [1], [0, 0, 1, 1], [], []>} : vector<8x256xf32>, vector<256x512xf32>, vector<8x512xf32> -> vector<8x512xf32>
    %233 = vector.broadcast %1 : vector<1x512xf32> to vector<8x512xf32>
    %234 = arith.addf %232, %233 : vector<8x512xf32>
    %235 = vector.extract_strided_slice %234 {offsets = [0, 0], sizes = [8, 128], strides = [1, 1]} : vector<8x512xf32> to vector<8x128xf32>
    %236 = arith.negf %235 : vector<8x128xf32>
    %237 = math.exp %236 : vector<8x128xf32>
    %cst_49 = arith.constant 1.000000e+00 : f32
    %238 = vector.broadcast %cst_49 : f32 to vector<8x128xf32>
    %239 = arith.addf %238, %237 : vector<8x128xf32>
    %240 = arith.divf %238, %239 : vector<8x128xf32>
    %241 = vector.extract_strided_slice %234 {offsets = [0, 128], sizes = [8, 128], strides = [1, 1]} : vector<8x512xf32> to vector<8x128xf32>
    %242 = arith.negf %241 : vector<8x128xf32>
    %243 = math.exp %242 : vector<8x128xf32>
    %cst_50 = arith.constant 1.000000e+00 : f32
    %244 = vector.broadcast %cst_50 : f32 to vector<8x128xf32>
    %245 = arith.addf %244, %243 : vector<8x128xf32>
    %246 = arith.divf %244, %245 : vector<8x128xf32>
    %247 = vector.extract_strided_slice %234 {offsets = [0, 256], sizes = [8, 128], strides = [1, 1]} : vector<8x512xf32> to vector<8x128xf32>
    %248 = math.tanh %247 : vector<8x128xf32>
    %249 = vector.extract_strided_slice %234 {offsets = [0, 384], sizes = [8, 128], strides = [1, 1]} : vector<8x512xf32> to vector<8x128xf32>
    %250 = arith.negf %249 : vector<8x128xf32>
    %251 = math.exp %250 : vector<8x128xf32>
    %cst_51 = arith.constant 1.000000e+00 : f32
    %252 = vector.broadcast %cst_51 : f32 to vector<8x128xf32>
    %253 = arith.addf %252, %251 : vector<8x128xf32>
    %254 = arith.divf %252, %253 : vector<8x128xf32>
    %255 = arith.mulf %246, %225 : vector<8x128xf32>
    %256 = arith.mulf %240, %248 : vector<8x128xf32>
    %257 = arith.addf %255, %256 : vector<8x128xf32>
    %258 = math.tanh %257 : vector<8x128xf32>
    %259 = arith.mulf %254, %258 : vector<8x128xf32>
    %c8_i32 = arith.constant 8 : i32
    %260 = arith.index_cast %c8_i32 : i32 to index
    %c0_52 = arith.constant 0 : index
    %c0_53 = arith.constant 0 : index
    %261 = vector.load %arg0[%260, %c0_52, %c0_53] : memref<12x8x128xf32, #tpu.memory_space<vmem>>, vector<1x8x128xf32>
    %262 = vector.shape_cast %261 : vector<1x8x128xf32> to vector<8x128xf32>
    %263 = tpu.concatenate %262, %259 in 1 : vector<8x128xf32>, vector<8x128xf32> -> vector<8x256xf32>
    %cst_54 = arith.constant dense<0.000000e+00> : vector<8x512xf32>
    %264 = tpu.matmul %263, %0, %cst_54 {dimension_numbers = #tpu.dot_dimension_numbers<[1], [0], [0], [1], [0, 0, 1, 1], [], []>} : vector<8x256xf32>, vector<256x512xf32>, vector<8x512xf32> -> vector<8x512xf32>
    %265 = vector.broadcast %1 : vector<1x512xf32> to vector<8x512xf32>
    %266 = arith.addf %264, %265 : vector<8x512xf32>
    %267 = vector.extract_strided_slice %266 {offsets = [0, 0], sizes = [8, 128], strides = [1, 1]} : vector<8x512xf32> to vector<8x128xf32>
    %268 = arith.negf %267 : vector<8x128xf32>
    %269 = math.exp %268 : vector<8x128xf32>
    %cst_55 = arith.constant 1.000000e+00 : f32
    %270 = vector.broadcast %cst_55 : f32 to vector<8x128xf32>
    %271 = arith.addf %270, %269 : vector<8x128xf32>
    %272 = arith.divf %270, %271 : vector<8x128xf32>
    %273 = vector.extract_strided_slice %266 {offsets = [0, 128], sizes = [8, 128], strides = [1, 1]} : vector<8x512xf32> to vector<8x128xf32>
    %274 = arith.negf %273 : vector<8x128xf32>
    %275 = math.exp %274 : vector<8x128xf32>
    %cst_56 = arith.constant 1.000000e+00 : f32
    %276 = vector.broadcast %cst_56 : f32 to vector<8x128xf32>
    %277 = arith.addf %276, %275 : vector<8x128xf32>
    %278 = arith.divf %276, %277 : vector<8x128xf32>
    %279 = vector.extract_strided_slice %266 {offsets = [0, 256], sizes = [8, 128], strides = [1, 1]} : vector<8x512xf32> to vector<8x128xf32>
    %280 = math.tanh %279 : vector<8x128xf32>
    %281 = vector.extract_strided_slice %266 {offsets = [0, 384], sizes = [8, 128], strides = [1, 1]} : vector<8x512xf32> to vector<8x128xf32>
    %282 = arith.negf %281 : vector<8x128xf32>
    %283 = math.exp %282 : vector<8x128xf32>
    %cst_57 = arith.constant 1.000000e+00 : f32
    %284 = vector.broadcast %cst_57 : f32 to vector<8x128xf32>
    %285 = arith.addf %284, %283 : vector<8x128xf32>
    %286 = arith.divf %284, %285 : vector<8x128xf32>
    %287 = arith.mulf %278, %257 : vector<8x128xf32>
    %288 = arith.mulf %272, %280 : vector<8x128xf32>
    %289 = arith.addf %287, %288 : vector<8x128xf32>
    %290 = math.tanh %289 : vector<8x128xf32>
    %291 = arith.mulf %286, %290 : vector<8x128xf32>
    %c9_i32 = arith.constant 9 : i32
    %292 = arith.index_cast %c9_i32 : i32 to index
    %c0_58 = arith.constant 0 : index
    %c0_59 = arith.constant 0 : index
    %293 = vector.load %arg0[%292, %c0_58, %c0_59] : memref<12x8x128xf32, #tpu.memory_space<vmem>>, vector<1x8x128xf32>
    %294 = vector.shape_cast %293 : vector<1x8x128xf32> to vector<8x128xf32>
    %295 = tpu.concatenate %294, %291 in 1 : vector<8x128xf32>, vector<8x128xf32> -> vector<8x256xf32>
    %cst_60 = arith.constant dense<0.000000e+00> : vector<8x512xf32>
    %296 = tpu.matmul %295, %0, %cst_60 {dimension_numbers = #tpu.dot_dimension_numbers<[1], [0], [0], [1], [0, 0, 1, 1], [], []>} : vector<8x256xf32>, vector<256x512xf32>, vector<8x512xf32> -> vector<8x512xf32>
    %297 = vector.broadcast %1 : vector<1x512xf32> to vector<8x512xf32>
    %298 = arith.addf %296, %297 : vector<8x512xf32>
    %299 = vector.extract_strided_slice %298 {offsets = [0, 0], sizes = [8, 128], strides = [1, 1]} : vector<8x512xf32> to vector<8x128xf32>
    %300 = arith.negf %299 : vector<8x128xf32>
    %301 = math.exp %300 : vector<8x128xf32>
    %cst_61 = arith.constant 1.000000e+00 : f32
    %302 = vector.broadcast %cst_61 : f32 to vector<8x128xf32>
    %303 = arith.addf %302, %301 : vector<8x128xf32>
    %304 = arith.divf %302, %303 : vector<8x128xf32>
    %305 = vector.extract_strided_slice %298 {offsets = [0, 128], sizes = [8, 128], strides = [1, 1]} : vector<8x512xf32> to vector<8x128xf32>
    %306 = arith.negf %305 : vector<8x128xf32>
    %307 = math.exp %306 : vector<8x128xf32>
    %cst_62 = arith.constant 1.000000e+00 : f32
    %308 = vector.broadcast %cst_62 : f32 to vector<8x128xf32>
    %309 = arith.addf %308, %307 : vector<8x128xf32>
    %310 = arith.divf %308, %309 : vector<8x128xf32>
    %311 = vector.extract_strided_slice %298 {offsets = [0, 256], sizes = [8, 128], strides = [1, 1]} : vector<8x512xf32> to vector<8x128xf32>
    %312 = math.tanh %311 : vector<8x128xf32>
    %313 = vector.extract_strided_slice %298 {offsets = [0, 384], sizes = [8, 128], strides = [1, 1]} : vector<8x512xf32> to vector<8x128xf32>
    %314 = arith.negf %313 : vector<8x128xf32>
    %315 = math.exp %314 : vector<8x128xf32>
    %cst_63 = arith.constant 1.000000e+00 : f32
    %316 = vector.broadcast %cst_63 : f32 to vector<8x128xf32>
    %317 = arith.addf %316, %315 : vector<8x128xf32>
    %318 = arith.divf %316, %317 : vector<8x128xf32>
    %319 = arith.mulf %310, %289 : vector<8x128xf32>
    %320 = arith.mulf %304, %312 : vector<8x128xf32>
    %321 = arith.addf %319, %320 : vector<8x128xf32>
    %322 = math.tanh %321 : vector<8x128xf32>
    %323 = arith.mulf %318, %322 : vector<8x128xf32>
    %c10_i32 = arith.constant 10 : i32
    %324 = arith.index_cast %c10_i32 : i32 to index
    %c0_64 = arith.constant 0 : index
    %c0_65 = arith.constant 0 : index
    %325 = vector.load %arg0[%324, %c0_64, %c0_65] : memref<12x8x128xf32, #tpu.memory_space<vmem>>, vector<1x8x128xf32>
    %326 = vector.shape_cast %325 : vector<1x8x128xf32> to vector<8x128xf32>
    %327 = tpu.concatenate %326, %323 in 1 : vector<8x128xf32>, vector<8x128xf32> -> vector<8x256xf32>
    %cst_66 = arith.constant dense<0.000000e+00> : vector<8x512xf32>
    %328 = tpu.matmul %327, %0, %cst_66 {dimension_numbers = #tpu.dot_dimension_numbers<[1], [0], [0], [1], [0, 0, 1, 1], [], []>} : vector<8x256xf32>, vector<256x512xf32>, vector<8x512xf32> -> vector<8x512xf32>
    %329 = vector.broadcast %1 : vector<1x512xf32> to vector<8x512xf32>
    %330 = arith.addf %328, %329 : vector<8x512xf32>
    %331 = vector.extract_strided_slice %330 {offsets = [0, 0], sizes = [8, 128], strides = [1, 1]} : vector<8x512xf32> to vector<8x128xf32>
    %332 = arith.negf %331 : vector<8x128xf32>
    %333 = math.exp %332 : vector<8x128xf32>
    %cst_67 = arith.constant 1.000000e+00 : f32
    %334 = vector.broadcast %cst_67 : f32 to vector<8x128xf32>
    %335 = arith.addf %334, %333 : vector<8x128xf32>
    %336 = arith.divf %334, %335 : vector<8x128xf32>
    %337 = vector.extract_strided_slice %330 {offsets = [0, 128], sizes = [8, 128], strides = [1, 1]} : vector<8x512xf32> to vector<8x128xf32>
    %338 = arith.negf %337 : vector<8x128xf32>
    %339 = math.exp %338 : vector<8x128xf32>
    %cst_68 = arith.constant 1.000000e+00 : f32
    %340 = vector.broadcast %cst_68 : f32 to vector<8x128xf32>
    %341 = arith.addf %340, %339 : vector<8x128xf32>
    %342 = arith.divf %340, %341 : vector<8x128xf32>
    %343 = vector.extract_strided_slice %330 {offsets = [0, 256], sizes = [8, 128], strides = [1, 1]} : vector<8x512xf32> to vector<8x128xf32>
    %344 = math.tanh %343 : vector<8x128xf32>
    %345 = vector.extract_strided_slice %330 {offsets = [0, 384], sizes = [8, 128], strides = [1, 1]} : vector<8x512xf32> to vector<8x128xf32>
    %346 = arith.negf %345 : vector<8x128xf32>
    %347 = math.exp %346 : vector<8x128xf32>
    %cst_69 = arith.constant 1.000000e+00 : f32
    %348 = vector.broadcast %cst_69 : f32 to vector<8x128xf32>
    %349 = arith.addf %348, %347 : vector<8x128xf32>
    %350 = arith.divf %348, %349 : vector<8x128xf32>
    %351 = arith.mulf %342, %321 : vector<8x128xf32>
    %352 = arith.mulf %336, %344 : vector<8x128xf32>
    %353 = arith.addf %351, %352 : vector<8x128xf32>
    %354 = math.tanh %353 : vector<8x128xf32>
    %355 = arith.mulf %350, %354 : vector<8x128xf32>
    %c11_i32 = arith.constant 11 : i32
    %356 = arith.index_cast %c11_i32 : i32 to index
    %c0_70 = arith.constant 0 : index
    %c0_71 = arith.constant 0 : index
    %357 = vector.load %arg0[%356, %c0_70, %c0_71] : memref<12x8x128xf32, #tpu.memory_space<vmem>>, vector<1x8x128xf32>
    %358 = vector.shape_cast %357 : vector<1x8x128xf32> to vector<8x128xf32>
    %359 = tpu.concatenate %358, %355 in 1 : vector<8x128xf32>, vector<8x128xf32> -> vector<8x256xf32>
    %cst_72 = arith.constant dense<0.000000e+00> : vector<8x512xf32>
    %360 = tpu.matmul %359, %0, %cst_72 {dimension_numbers = #tpu.dot_dimension_numbers<[1], [0], [0], [1], [0, 0, 1, 1], [], []>} : vector<8x256xf32>, vector<256x512xf32>, vector<8x512xf32> -> vector<8x512xf32>
    %361 = vector.broadcast %1 : vector<1x512xf32> to vector<8x512xf32>
    %362 = arith.addf %360, %361 : vector<8x512xf32>
    %363 = vector.extract_strided_slice %362 {offsets = [0, 0], sizes = [8, 128], strides = [1, 1]} : vector<8x512xf32> to vector<8x128xf32>
    %364 = arith.negf %363 : vector<8x128xf32>
    %365 = math.exp %364 : vector<8x128xf32>
    %cst_73 = arith.constant 1.000000e+00 : f32
    %366 = vector.broadcast %cst_73 : f32 to vector<8x128xf32>
    %367 = arith.addf %366, %365 : vector<8x128xf32>
    %368 = arith.divf %366, %367 : vector<8x128xf32>
    %369 = vector.extract_strided_slice %362 {offsets = [0, 128], sizes = [8, 128], strides = [1, 1]} : vector<8x512xf32> to vector<8x128xf32>
    %370 = arith.negf %369 : vector<8x128xf32>
    %371 = math.exp %370 : vector<8x128xf32>
    %cst_74 = arith.constant 1.000000e+00 : f32
    %372 = vector.broadcast %cst_74 : f32 to vector<8x128xf32>
    %373 = arith.addf %372, %371 : vector<8x128xf32>
    %374 = arith.divf %372, %373 : vector<8x128xf32>
    %375 = vector.extract_strided_slice %362 {offsets = [0, 256], sizes = [8, 128], strides = [1, 1]} : vector<8x512xf32> to vector<8x128xf32>
    %376 = math.tanh %375 : vector<8x128xf32>
    %377 = vector.extract_strided_slice %362 {offsets = [0, 384], sizes = [8, 128], strides = [1, 1]} : vector<8x512xf32> to vector<8x128xf32>
    %378 = arith.negf %377 : vector<8x128xf32>
    %379 = math.exp %378 : vector<8x128xf32>
    %cst_75 = arith.constant 1.000000e+00 : f32
    %380 = vector.broadcast %cst_75 : f32 to vector<8x128xf32>
    %381 = arith.addf %380, %379 : vector<8x128xf32>
    %382 = arith.divf %380, %381 : vector<8x128xf32>
    %383 = arith.mulf %374, %353 : vector<8x128xf32>
    %384 = arith.mulf %368, %376 : vector<8x128xf32>
    %385 = arith.addf %383, %384 : vector<8x128xf32>
    %386 = math.tanh %385 : vector<8x128xf32>
    %387 = arith.mulf %382, %386 : vector<8x128xf32>
    %c12_i32 = arith.constant 12 : i32
    %c0_76 = arith.constant 0 : index
    %c0_77 = arith.constant 0 : index
    %388 = vector.load %arg3[%c0_76, %c0_77] : memref<8x128xf32, #tpu.memory_space<vmem>>, vector<8x128xf32>
    tpu.vector_store %arg3[%c0_76, %c0_77], %387 {strides = array<i32>} : memref<8x128xf32, #tpu.memory_space<vmem>>, vector<8x128xf32>,
    %c0_78 = arith.constant 0 : index
    %c0_79 = arith.constant 0 : index
    %389 = vector.load %arg4[%c0_78, %c0_79] : memref<8x128xf32, #tpu.memory_space<vmem>>, vector<8x128xf32>
    tpu.vector_store %arg4[%c0_78, %c0_79], %385 {strides = array<i32>} : memref<8x128xf32, #tpu.memory_space<vmem>>, vector<8x128xf32>,
    return
  }
}

module attributes {stable_mosaic.version = 11 : i64} {
  func.func @_decoder_kernel(%arg0: i32, %arg1: memref<9xi32, #tpu.memory_space<smem>>, %arg2: memref<10x8x128xf32, #tpu.memory_space<vmem>>, %arg3: memref<128x128xf32, #tpu.memory_space<vmem>>, %arg4: memref<256x512xf32, #tpu.memory_space<vmem>>, %arg5: memref<1x512xf32, #tpu.memory_space<vmem>>, %arg6: memref<128x128xf32, #tpu.memory_space<vmem>>, %arg7: memref<1x128xf32, #tpu.memory_space<vmem>>, %arg8: memref<8x128xf32, #tpu.memory_space<vmem>>, %arg9: memref<8x128xf32, #tpu.memory_space<vmem>>, %arg10: memref<1x8x128xf32, #tpu.memory_space<vmem>>, %arg11: memref<8x128xf32, #tpu.memory_space<vmem>>, %arg12: memref<8x128xf32, #tpu.memory_space<vmem>>, %arg13: memref<8x128xf32, #tpu.memory_space<vmem>>) attributes {dimension_semantics = [#tpu.dimension_semantics<arbitrary>], iteration_bounds = array<i64: 9>, scalar_prefetch = 1 : i64, scratch_operands = 3 : i64, tpu.core_type = #tpu.core_type<tc>, window_params = [{pipeline_mode = #tpu.pipeline_mode<synchronous>, transform_indices = @transform_0, window_bounds = array<i64: 10, 8, 128>}, {pipeline_mode = #tpu.pipeline_mode<synchronous>, transform_indices = @transform_1, window_bounds = array<i64: 128, 128>}, {pipeline_mode = #tpu.pipeline_mode<synchronous>, transform_indices = @transform_2, window_bounds = array<i64: 256, 512>}, {pipeline_mode = #tpu.pipeline_mode<synchronous>, transform_indices = @transform_3, window_bounds = array<i64: 1, 512>}, {pipeline_mode = #tpu.pipeline_mode<synchronous>, transform_indices = @transform_4, window_bounds = array<i64: 128, 128>}, {pipeline_mode = #tpu.pipeline_mode<synchronous>, transform_indices = @transform_5, window_bounds = array<i64: 1, 128>}, {pipeline_mode = #tpu.pipeline_mode<synchronous>, transform_indices = @transform_6, window_bounds = array<i64: 8, 128>}, {pipeline_mode = #tpu.pipeline_mode<synchronous>, transform_indices = @transform_7, window_bounds = array<i64: 8, 128>}, {transform_indices = @transform_8, window_bounds = array<i64: 1, 8, 128>}]} {
    %c0_i32 = arith.constant 0 : i32
    %0 = arith.cmpi eq, %arg0, %c0_i32 : i32
    %1 = arith.extui %0 : i1 to i32
    %c0_i32_0 = arith.constant 0 : i32
    %2 = arith.cmpi ne, %1, %c0_i32_0 : i32
    scf.if %2 {
      %c0_36 = arith.constant 0 : index
      %c0_37 = arith.constant 0 : index
      %75 = vector.load %arg8[%c0_36, %c0_37] : memref<8x128xf32, #tpu.memory_space<vmem>>, vector<8x128xf32>
      %c0_38 = arith.constant 0 : index
      %c0_39 = arith.constant 0 : index
      %76 = vector.load %arg11[%c0_38, %c0_39] : memref<8x128xf32, #tpu.memory_space<vmem>>, vector<8x128xf32>
      tpu.vector_store %arg11[%c0_38, %c0_39], %75 {strides = array<i32>} : memref<8x128xf32, #tpu.memory_space<vmem>>, vector<8x128xf32>,
      %c0_40 = arith.constant 0 : index
      %c0_41 = arith.constant 0 : index
      %77 = vector.load %arg9[%c0_40, %c0_41] : memref<8x128xf32, #tpu.memory_space<vmem>>, vector<8x128xf32>
      %c0_42 = arith.constant 0 : index
      %c0_43 = arith.constant 0 : index
      %78 = vector.load %arg12[%c0_42, %c0_43] : memref<8x128xf32, #tpu.memory_space<vmem>>, vector<8x128xf32>
      tpu.vector_store %arg12[%c0_42, %c0_43], %77 {strides = array<i32>} : memref<8x128xf32, #tpu.memory_space<vmem>>, vector<8x128xf32>,
      %c0_44 = arith.constant 0 : index
      %c0_45 = arith.constant 0 : index
      %c0_46 = arith.constant 0 : index
      %79 = vector.load %arg2[%c0_44, %c0_45, %c0_46] : memref<10x8x128xf32, #tpu.memory_space<vmem>>, vector<1x8x128xf32>
      %80 = vector.shape_cast %79 : vector<1x8x128xf32> to vector<8x128xf32>
      %c0_47 = arith.constant 0 : index
      %c0_48 = arith.constant 0 : index
      %81 = vector.load %arg13[%c0_47, %c0_48] : memref<8x128xf32, #tpu.memory_space<vmem>>, vector<8x128xf32>
      tpu.vector_store %arg13[%c0_47, %c0_48], %80 {strides = array<i32>} : memref<8x128xf32, #tpu.memory_space<vmem>>, vector<8x128xf32>,
    } else {
    }
    %c0 = arith.constant 0 : index
    %c0_1 = arith.constant 0 : index
    %3 = vector.load %arg13[%c0, %c0_1] : memref<8x128xf32, #tpu.memory_space<vmem>>, vector<8x128xf32>
    %c0_2 = arith.constant 0 : index
    %c0_3 = arith.constant 0 : index
    %4 = vector.load %arg3[%c0_2, %c0_3] : memref<128x128xf32, #tpu.memory_space<vmem>>, vector<128x128xf32>
    %cst = arith.constant dense<0.000000e+00> : vector<8x128xf32>
    %5 = tpu.matmul %3, %4, %cst {dimension_numbers = #tpu.dot_dimension_numbers<[1], [0], [0], [1], [0, 0, 1, 1], [], []>} : vector<8x128xf32>, vector<128x128xf32>, vector<8x128xf32> -> vector<8x128xf32>
    %c0_4 = arith.constant 0 : index
    %c0_5 = arith.constant 0 : index
    %6 = vector.load %arg11[%c0_4, %c0_5] : memref<8x128xf32, #tpu.memory_space<vmem>>, vector<8x128xf32>
    %c0_6 = arith.constant 0 : index
    %c0_7 = arith.constant 0 : index
    %7 = vector.load %arg12[%c0_6, %c0_7] : memref<8x128xf32, #tpu.memory_space<vmem>>, vector<8x128xf32>
    %8 = tpu.concatenate %5, %6 in 1 : vector<8x128xf32>, vector<8x128xf32> -> vector<8x256xf32>
    %c0_8 = arith.constant 0 : index
    %c0_9 = arith.constant 0 : index
    %9 = vector.load %arg4[%c0_8, %c0_9] : memref<256x512xf32, #tpu.memory_space<vmem>>, vector<256x512xf32>
    %cst_10 = arith.constant dense<0.000000e+00> : vector<8x512xf32>
    %10 = tpu.matmul %8, %9, %cst_10 {dimension_numbers = #tpu.dot_dimension_numbers<[1], [0], [0], [1], [0, 0, 1, 1], [], []>} : vector<8x256xf32>, vector<256x512xf32>, vector<8x512xf32> -> vector<8x512xf32>
    %c0_11 = arith.constant 0 : index
    %c0_12 = arith.constant 0 : index
    %11 = vector.load %arg5[%c0_11, %c0_12] : memref<1x512xf32, #tpu.memory_space<vmem>>, vector<1x512xf32>
    %12 = vector.broadcast %11 : vector<1x512xf32> to vector<8x512xf32>
    %13 = arith.addf %10, %12 : vector<8x512xf32>
    %14 = vector.extract_strided_slice %13 {offsets = [0, 0], sizes = [8, 128], strides = [1, 1]} : vector<8x512xf32> to vector<8x128xf32>
    %15 = arith.negf %14 : vector<8x128xf32>
    %16 = math.exp %15 : vector<8x128xf32>
    %cst_13 = arith.constant 1.000000e+00 : f32
    %17 = vector.broadcast %cst_13 : f32 to vector<8x128xf32>
    %18 = arith.addf %17, %16 : vector<8x128xf32>
    %19 = arith.divf %17, %18 : vector<8x128xf32>
    %20 = vector.extract_strided_slice %13 {offsets = [0, 128], sizes = [8, 128], strides = [1, 1]} : vector<8x512xf32> to vector<8x128xf32>
    %21 = arith.negf %20 : vector<8x128xf32>
    %22 = math.exp %21 : vector<8x128xf32>
    %cst_14 = arith.constant 1.000000e+00 : f32
    %23 = vector.broadcast %cst_14 : f32 to vector<8x128xf32>
    %24 = arith.addf %23, %22 : vector<8x128xf32>
    %25 = arith.divf %23, %24 : vector<8x128xf32>
    %26 = vector.extract_strided_slice %13 {offsets = [0, 256], sizes = [8, 128], strides = [1, 1]} : vector<8x512xf32> to vector<8x128xf32>
    %27 = math.tanh %26 : vector<8x128xf32>
    %28 = vector.extract_strided_slice %13 {offsets = [0, 384], sizes = [8, 128], strides = [1, 1]} : vector<8x512xf32> to vector<8x128xf32>
    %29 = arith.negf %28 : vector<8x128xf32>
    %30 = math.exp %29 : vector<8x128xf32>
    %cst_15 = arith.constant 1.000000e+00 : f32
    %31 = vector.broadcast %cst_15 : f32 to vector<8x128xf32>
    %32 = arith.addf %31, %30 : vector<8x128xf32>
    %33 = arith.divf %31, %32 : vector<8x128xf32>
    %34 = arith.mulf %25, %7 : vector<8x128xf32>
    %35 = arith.mulf %19, %27 : vector<8x128xf32>
    %36 = arith.addf %34, %35 : vector<8x128xf32>
    %37 = math.tanh %36 : vector<8x128xf32>
    %38 = arith.mulf %33, %37 : vector<8x128xf32>
    %c0_16 = arith.constant 0 : index
    %c0_17 = arith.constant 0 : index
    %39 = vector.load %arg11[%c0_16, %c0_17] : memref<8x128xf32, #tpu.memory_space<vmem>>, vector<8x128xf32>
    tpu.vector_store %arg11[%c0_16, %c0_17], %38 {strides = array<i32>} : memref<8x128xf32, #tpu.memory_space<vmem>>, vector<8x128xf32>,
    %c0_18 = arith.constant 0 : index
    %c0_19 = arith.constant 0 : index
    %40 = vector.load %arg12[%c0_18, %c0_19] : memref<8x128xf32, #tpu.memory_space<vmem>>, vector<8x128xf32>
    tpu.vector_store %arg12[%c0_18, %c0_19], %36 {strides = array<i32>} : memref<8x128xf32, #tpu.memory_space<vmem>>, vector<8x128xf32>,
    %c0_20 = arith.constant 0 : index
    %c0_21 = arith.constant 0 : index
    %41 = vector.load %arg6[%c0_20, %c0_21] : memref<128x128xf32, #tpu.memory_space<vmem>>, vector<128x128xf32>
    %cst_22 = arith.constant dense<0.000000e+00> : vector<8x128xf32>
    %42 = tpu.matmul %38, %41, %cst_22 {dimension_numbers = #tpu.dot_dimension_numbers<[1], [0], [0], [1], [0, 0, 1, 1], [], []>} : vector<8x128xf32>, vector<128x128xf32>, vector<8x128xf32> -> vector<8x128xf32>
    %c0_23 = arith.constant 0 : index
    %c0_24 = arith.constant 0 : index
    %43 = vector.load %arg7[%c0_23, %c0_24] : memref<1x128xf32, #tpu.memory_space<vmem>>, vector<1x128xf32>
    %44 = vector.broadcast %43 : vector<1x128xf32> to vector<8x128xf32>
    %45 = arith.addf %42, %44 : vector<8x128xf32>
    %c0_25 = arith.constant 0 : index
    %c0_26 = arith.constant 0 : index
    %c0_27 = arith.constant 0 : index
    %46 = vector.load %arg10[%c0_25, %c0_26, %c0_27] : memref<1x8x128xf32, #tpu.memory_space<vmem>>, vector<1x8x128xf32>
    %47 = vector.shape_cast %46 : vector<1x8x128xf32> to vector<8x128xf32>
    %48 = vector.shape_cast %45 : vector<8x128xf32> to vector<1x8x128xf32>
    tpu.vector_store %arg10[%c0_25, %c0_26, %c0_27], %48 {strides = array<i32>} : memref<1x8x128xf32, #tpu.memory_space<vmem>>, vector<1x8x128xf32>,
    %49 = tpu.iota {dimensions = array<i32: 1>} : vector<8x128xi32>
    %c35_i32 = arith.constant 35 : i32
    %50 = vector.broadcast %c35_i32 : i32 to vector<8x128xi32>
    %51 = arith.cmpi slt, %49, %50 : vector<8x128xi32>
    %cst_28 = arith.constant -1.000000e+30 : f32
    %52 = vector.broadcast %cst_28 : f32 to vector<8x128xf32>
    %53 = arith.select %51, %45, %52 : vector<8x128xi1>, vector<8x128xf32>
    %cst_29 = arith.constant dense<0xFF800000> : vector<8xf32>
    %54 = vector.multi_reduction <maximumf>, %53, %cst_29 [1] : vector<8x128xf32> to vector<8xf32>
    %55 = vector.shape_cast %54 : vector<8xf32> to vector<8x1xf32>
    %56 = vector.broadcast %55 : vector<8x1xf32> to vector<8x128xf32>
    %57 = arith.cmpf oeq, %53, %56 : vector<8x128xf32>
    %c128_i32 = arith.constant 128 : i32
    %58 = vector.broadcast %c128_i32 : i32 to vector<8x128xi32>
    %59 = arith.select %57, %49, %58 : vector<8x128xi1>, vector<8x128xi32>
    %cst_30 = arith.constant dense<2147483647> : vector<8xi32>
    %60 = vector.multi_reduction <minsi>, %59, %cst_30 [1] : vector<8x128xi32> to vector<8xi32>
    %61 = vector.shape_cast %60 : vector<8xi32> to vector<8x1xi32>
    %62 = vector.broadcast %61 : vector<8x1xi32> to vector<8x128xi32>
    %63 = arith.cmpi eq, %49, %62 : vector<8x128xi32>
    %64 = arith.extui %63 : vector<8x128xi1> to vector<8x128xi32>
    %65 = arith.sitofp %64 : vector<8x128xi32> to vector<8x128xf32>
    %c1_i32 = arith.constant 1 : i32
    %66 = arith.addi %arg0, %c1_i32 : i32
    %67 = arith.index_cast %66 : i32 to index
    %c0_31 = arith.constant 0 : index
    %c0_32 = arith.constant 0 : index
    %68 = vector.load %arg2[%67, %c0_31, %c0_32] : memref<10x8x128xf32, #tpu.memory_space<vmem>>, vector<1x8x128xf32>
    %69 = vector.shape_cast %68 : vector<1x8x128xf32> to vector<8x128xf32>
    %70 = arith.index_cast %arg0 : i32 to index
    %71 = memref.load %arg1[%70] : memref<9xi32, #tpu.memory_space<smem>>
    %c0_i32_33 = arith.constant 0 : i32
    %72 = arith.cmpi ne, %71, %c0_i32_33 : i32
    %73 = arith.select %72, %69, %65 : vector<8x128xf32>
    %c0_34 = arith.constant 0 : index
    %c0_35 = arith.constant 0 : index
    %74 = vector.load %arg13[%c0_34, %c0_35] : memref<8x128xf32, #tpu.memory_space<vmem>>, vector<8x128xf32>
    tpu.vector_store %arg13[%c0_34, %c0_35], %73 {strides = array<i32>} : memref<8x128xf32, #tpu.memory_space<vmem>>, vector<8x128xf32>,
    return
  }
  func.func @transform_0(%arg0: i32, %arg1: memref<9xi32, #tpu.memory_space<smem>>) -> (i32, i32, i32) {
    %c0_i32 = arith.constant 0 : i32
    %c0_i32_0 = arith.constant 0 : i32
    %c0_i32_1 = arith.constant 0 : i32
    %c0_i32_2 = arith.constant 0 : i32
    return %c0_i32, %c0_i32_0, %c0_i32_1 : i32, i32, i32
  }
  func.func @transform_1(%arg0: i32, %arg1: memref<9xi32, #tpu.memory_space<smem>>) -> (i32, i32) {
    %c0_i32 = arith.constant 0 : i32
    %c0_i32_0 = arith.constant 0 : i32
    %c0_i32_1 = arith.constant 0 : i32
    return %c0_i32, %c0_i32_0 : i32, i32
  }
  func.func @transform_2(%arg0: i32, %arg1: memref<9xi32, #tpu.memory_space<smem>>) -> (i32, i32) {
    %c0_i32 = arith.constant 0 : i32
    %c0_i32_0 = arith.constant 0 : i32
    %c0_i32_1 = arith.constant 0 : i32
    return %c0_i32, %c0_i32_0 : i32, i32
  }
  func.func @transform_3(%arg0: i32, %arg1: memref<9xi32, #tpu.memory_space<smem>>) -> (i32, i32) {
    %c0_i32 = arith.constant 0 : i32
    %c0_i32_0 = arith.constant 0 : i32
    %c0_i32_1 = arith.constant 0 : i32
    return %c0_i32, %c0_i32_0 : i32, i32
  }
  func.func @transform_4(%arg0: i32, %arg1: memref<9xi32, #tpu.memory_space<smem>>) -> (i32, i32) {
    %c0_i32 = arith.constant 0 : i32
    %c0_i32_0 = arith.constant 0 : i32
    %c0_i32_1 = arith.constant 0 : i32
    return %c0_i32, %c0_i32_0 : i32, i32
  }
  func.func @transform_5(%arg0: i32, %arg1: memref<9xi32, #tpu.memory_space<smem>>) -> (i32, i32) {
    %c0_i32 = arith.constant 0 : i32
    %c0_i32_0 = arith.constant 0 : i32
    %c0_i32_1 = arith.constant 0 : i32
    return %c0_i32, %c0_i32_0 : i32, i32
  }
  func.func @transform_6(%arg0: i32, %arg1: memref<9xi32, #tpu.memory_space<smem>>) -> (i32, i32) {
    %c0_i32 = arith.constant 0 : i32
    %c0_i32_0 = arith.constant 0 : i32
    %c0_i32_1 = arith.constant 0 : i32
    return %c0_i32, %c0_i32_0 : i32, i32
  }
  func.func @transform_7(%arg0: i32, %arg1: memref<9xi32, #tpu.memory_space<smem>>) -> (i32, i32) {
    %c0_i32 = arith.constant 0 : i32
    %c0_i32_0 = arith.constant 0 : i32
    %c0_i32_1 = arith.constant 0 : i32
    return %c0_i32, %c0_i32_0 : i32, i32
  }
  func.func @transform_8(%arg0: i32, %arg1: memref<9xi32, #tpu.memory_space<smem>>) -> (i32, i32, i32) {
    %c0_i32 = arith.constant 0 : i32
    %c0_i32_0 = arith.constant 0 : i32
    %c0_i32_1 = arith.constant 0 : i32
    return %arg0, %c0_i32, %c0_i32_0 : i32, i32, i32
  }
}

</mosaic_0001>

<llo_original>
// kernel: seq2seq_forward.3
$region0: #{seq2seq_forward.3}
  #allocation0 [shape = 'u32[]', space=smem, size = 0x4, offset = 0x4, fixed_abs, tag = 'smem constant byte address 0x4 - core index']
  #allocation1 [shape = 'u32[144,128]{1,0:T(1,128)}', space=vmem, size = 0x12000, scoped, tag = 'internal scratch']
  #allocation2 [shape = 'f32[8,128]{1,0:T(8,128)}', space=vmem, size = 0x1000, scoped, tag = 'scratch operand']
  #allocation3 [shape = 'f32[8,128]{1,0:T(8,128)}', space=vmem, size = 0x1000, scoped, tag = 'scratch operand']
  #allocation4 [shape = 'f32[8,128]{1,0:T(8,128)}', space=vmem, size = 0x1000, scoped, tag = 'scratch operand']
  #allocation5 [shape = 's32[1]{0}', space=sflag, size = 0x4, scoped, tag = 'scoped memory for seq2seq_forward.3']
  #allocation6 [shape = 'u8[512]{0}', space=smem, size = 0x200, scoped, tag = 'prefetched SMEM operand 0']
  %s0 = inlined_call_operand.vmem [shape: s32[9], index: 0, kind: input, shape index: {}]
  %s1 = inlined_call_operand.vmem [shape: f32[10,8,128], index: 1, kind: input, shape index: {}]
  %s2 = inlined_call_operand.vmem [shape: f32[128,128], index: 2, kind: input, shape index: {}]
  %s3 = inlined_call_operand.vmem [shape: f32[256,512], index: 3, kind: input, shape index: {}]
  %s4 = inlined_call_operand.vmem [shape: f32[1,512], index: 4, kind: input, shape index: {}]
  %s5 = inlined_call_operand.vmem [shape: f32[128,128], index: 5, kind: input, shape index: {}]
  %s6 = inlined_call_operand.vmem [shape: f32[1,128], index: 6, kind: input, shape index: {}]
  %s7 = inlined_call_operand.vmem [shape: f32[8,128], index: 7, kind: input, shape index: {}]
  %s8 = inlined_call_operand.vmem [shape: f32[8,128], index: 8, kind: input, shape index: {}]
  %s9 = inlined_call_operand.vmem [shape: f32[9,8,128], index: 9, kind: output, shape index: {}]
  %s10 = sld [smem:[#allocation0]]
  $region69: #{seq2seq_forward.3} parent=0
    _
  %s12 = ssub.s32 1, %s10
  %s13 = scalar_select 0, %s12, %s10
  %s14 = sshll.u32 %s0, 4
  %s15 = int_to_ptr.vmem [resolvable:$true] %s14
  %17 = dma.vmem_to_smem %s15, 16, [#allocation6], [#allocation5]
  %18 = dma.done [#allocation5], 16
  %19 = sfence
  loop: start=0, step=1, limit=11
  $region2: #{seq2seq_forward.3} parent=0 // loop_pre_header
    _
  $region3: #{seq2seq_forward.3} parent=0 // loop_header
    %s21 = sphi 0, %s25
    %p22 = scmp.ge.s32.totalorder %s21, 11
    %s29 = sphi 0, %s29
    %s31 = sphi 0, %s29
    %s32 = sphi 0, %s31
    %s46 = sphi 0, %s32
    %s50 = sphi 0, %s50
    %s52 = sphi 0, %s50
    %s53 = sphi 0, %s52
    %s67 = sphi 0, %s53
    %s71 = sphi 0, %s71
    %s73 = sphi 0, %s71
    %s74 = sphi 0, %s73
    %s88 = sphi 0, %s74
    %s92 = sphi 0, %s92
    %s94 = sphi 0, %s92
    %s95 = sphi 0, %s94
    %s109 = sphi 0, %s95
    %s113 = sphi 0, %s113
    %s115 = sphi 0, %s113
    %s116 = sphi 0, %s115
    %s130 = sphi 0, %s116
    %s134 = sphi 0, %s134
    %s136 = sphi 0, %s134
    %s137 = sphi 0, %s136
    %s151 = sphi 0, %s137
    %s155 = sphi 0, %s155
    %s157 = sphi 0, %s155
    %s158 = sphi 0, %s157
    %s172 = sphi 0, %s158
    %s176 = sphi 0, %s176
    %s178 = sphi 0, %s176
    %s179 = sphi 0, %s178
    %s193 = sphi 0, %s179
    %s199 = sphi 0, %s201
    %s202 = sphi 0, %s199
    %s203 = sphi 0, %s202
    %s219 = sphi 0, %s203
  $region4: #{seq2seq_forward.3} parent=0 // loop_header_branch
    %24 = sbr.rel (%p22) target = $region8
  $region5: #{seq2seq_forward.3} parent=0 // loop_body
    %s26 = ssub.s32 %s21, 1
    %s27 = ssub.s32 %s21, 2
    %s28 = sadd.s32 %s21, 1
    %s30 = sadd.s32 %s29, 1
    %p33 = scmp.eq.s32.totalorder %s21, 8
    %p34 = scmp.ne.s32.totalorder %s29, %s31
    %p35 = scmp.eq.s32.totalorder %s21, 0
    %p36 = por %p34, %p35
    %p37 = scmp.ne.s32.totalorder %s29, %s31
    %p38 = scmp.eq.s32.totalorder %s26, 8
    %p39 = por %p37, %p38
    %p40 = scmp.ne.s32.totalorder %s31, %s32
    %p41 = scmp.eq.s32.totalorder %s26, 0
    %p42 = por %p40, %p41
    %p43 = scmp.ne.s32.totalorder %s31, %s32
    %p44 = scmp.eq.s32.totalorder %s27, 8
    %p45 = por %p43, %p44
    %p47 = scmp.ne.s32.totalorder %s32, %s46
    %p48 = scmp.eq.s32.totalorder %s27, 0
    %p49 = por %p47, %p48
    %s51 = sadd.s32 %s50, 1
    %p54 = scmp.eq.s32.totalorder %s21, 8
    %p55 = scmp.ne.s32.totalorder %s50, %s52
    %p56 = scmp.eq.s32.totalorder %s21, 0
    %p57 = por %p55, %p56
    %p58 = scmp.ne.s32.totalorder %s50, %s52
    %p59 = scmp.eq.s32.totalorder %s26, 8
    %p60 = por %p58, %p59
    %p61 = scmp.ne.s32.totalorder %s52, %s53
    %p62 = scmp.eq.s32.totalorder %s26, 0
    %p63 = por %p61, %p62
    %p64 = scmp.ne.s32.totalorder %s52, %s53
    %p65 = scmp.eq.s32.totalorder %s27, 8
    %p66 = por %p64, %p65
    %p68 = scmp.ne.s32.totalorder %s53, %s67
    %p69 = scmp.eq.s32.totalorder %s27, 0
    %p70 = por %p68, %p69
    %s72 = sadd.s32 %s71, 1
    %p75 = scmp.eq.s32.totalorder %s21, 8
    %p76 = scmp.ne.s32.totalorder %s71, %s73
    %p77 = scmp.eq.s32.totalorder %s21, 0
    %p78 = por %p76, %p77
    %p79 = scmp.ne.s32.totalorder %s71, %s73
    %p80 = scmp.eq.s32.totalorder %s26, 8
    %p81 = por %p79, %p80
    %p82 = scmp.ne.s32.totalorder %s73, %s74
    %p83 = scmp.eq.s32.totalorder %s26, 0
    %p84 = por %p82, %p83
    %p85 = scmp.ne.s32.totalorder %s73, %s74
    %p86 = scmp.eq.s32.totalorder %s27, 8
    %p87 = por %p85, %p86
    %p89 = scmp.ne.s32.totalorder %s74, %s88
    %p90 = scmp.eq.s32.totalorder %s27, 0
    %p91 = por %p89, %p90
    %s93 = sadd.s32 %s92, 1
    %p96 = scmp.eq.s32.totalorder %s21, 8
    %p97 = scmp.ne.s32.totalorder %s92, %s94
    %p98 = scmp.eq.s32.totalorder %s21, 0
    %p99 = por %p97, %p98
    %p100 = scmp.ne.s32.totalorder %s92, %s94
    %p101 = scmp.eq.s32.totalorder %s26, 8
    %p102 = por %p100, %p101
    %p103 = scmp.ne.s32.totalorder %s94, %s95
    %p104 = scmp.eq.s32.totalorder %s26, 0
    %p105 = por %p103, %p104
    %p106 = scmp.ne.s32.totalorder %s94, %s95
    %p107 = scmp.eq.s32.totalorder %s27, 8
    %p108 = por %p106, %p107
    %p110 = scmp.ne.s32.totalorder %s95, %s109
    %p111 = scmp.eq.s32.totalorder %s27, 0
    %p112 = por %p110, %p111
    %s114 = sadd.s32 %s113, 1
    %p117 = scmp.eq.s32.totalorder %s21, 8
    %p118 = scmp.ne.s32.totalorder %s113, %s115
    %p119 = scmp.eq.s32.totalorder %s21, 0
    %p120 = por %p118, %p119
    %p121 = scmp.ne.s32.totalorder %s113, %s115
    %p122 = scmp.eq.s32.totalorder %s26, 8
    %p123 = por %p121, %p122
    %p124 = scmp.ne.s32.totalorder %s115, %s116
    %p125 = scmp.eq.s32.totalorder %s26, 0
    %p126 = por %p124, %p125
    %p127 = scmp.ne.s32.totalorder %s115, %s116
    %p128 = scmp.eq.s32.totalorder %s27, 8
    %p129 = por %p127, %p128
    %p131 = scmp.ne.s32.totalorder %s116, %s130
    %p132 = scmp.eq.s32.totalorder %s27, 0
    %p133 = por %p131, %p132
    %s135 = sadd.s32 %s134, 1
    %p138 = scmp.eq.s32.totalorder %s21, 8
    %p139 = scmp.ne.s32.totalorder %s134, %s136
    %p140 = scmp.eq.s32.totalorder %s21, 0
    %p141 = por %p139, %p140
    %p142 = scmp.ne.s32.totalorder %s134, %s136
    %p143 = scmp.eq.s32.totalorder %s26, 8
    %p144 = por %p142, %p143
    %p145 = scmp.ne.s32.totalorder %s136, %s137
    %p146 = scmp.eq.s32.totalorder %s26, 0
    %p147 = por %p145, %p146
    %p148 = scmp.ne.s32.totalorder %s136, %s137
    %p149 = scmp.eq.s32.totalorder %s27, 8
    %p150 = por %p148, %p149
    %p152 = scmp.ne.s32.totalorder %s137, %s151
    %p153 = scmp.eq.s32.totalorder %s27, 0
    %p154 = por %p152, %p153
    %s156 = sadd.s32 %s155, 1
    %p159 = scmp.eq.s32.totalorder %s21, 8
    %p160 = scmp.ne.s32.totalorder %s155, %s157
    %p161 = scmp.eq.s32.totalorder %s21, 0
    %p162 = por %p160, %p161
    %p163 = scmp.ne.s32.totalorder %s155, %s157
    %p164 = scmp.eq.s32.totalorder %s26, 8
    %p165 = por %p163, %p164
    %p166 = scmp.ne.s32.totalorder %s157, %s158
    %p167 = scmp.eq.s32.totalorder %s26, 0
    %p168 = por %p166, %p167
    %p169 = scmp.ne.s32.totalorder %s157, %s158
    %p170 = scmp.eq.s32.totalorder %s27, 8
    %p171 = por %p169, %p170
    %p173 = scmp.ne.s32.totalorder %s158, %s172
    %p174 = scmp.eq.s32.totalorder %s27, 0
    %p175 = por %p173, %p174
    %s177 = sadd.s32 %s176, 1
    %p180 = scmp.eq.s32.totalorder %s21, 8
    %p181 = scmp.ne.s32.totalorder %s176, %s178
    %p182 = scmp.eq.s32.totalorder %s21, 0
    %p183 = por %p181, %p182
    %p184 = scmp.ne.s32.totalorder %s176, %s178
    %p185 = scmp.eq.s32.totalorder %s26, 8
    %p186 = por %p184, %p185
    %p187 = scmp.ne.s32.totalorder %s178, %s179
    %p188 = scmp.eq.s32.totalorder %s26, 0
    %p189 = por %p187, %p188
    %p190 = scmp.ne.s32.totalorder %s178, %s179
    %p191 = scmp.eq.s32.totalorder %s27, 8
    %p192 = por %p190, %p191
    %p194 = scmp.ne.s32.totalorder %s179, %s193
    %p195 = scmp.eq.s32.totalorder %s27, 0
    %p196 = por %p194, %p195
    %s197 = ssub.s32 %s21, %s28
    %p198 = scmp.eq.s32.totalorder %s197, 0
    %s200 = sadd.s32 %s199, 1
    %s201 = scalar_select %p198, %s199, %s200
    %p204 = pneg %p198
    %p205 = scmp.eq.s32.totalorder %s21, 8
    %p206 = por %p204, %p205
    %p207 = scmp.ne.s32.totalorder %s199, %s202
    %p208 = scmp.eq.s32.totalorder %s21, 0
    %p209 = por %p207, %p208
    %p210 = scmp.ne.s32.totalorder %s199, %s202
    %p211 = scmp.eq.s32.totalorder %s26, 8
    %p212 = por %p210, %p211
    %p213 = scmp.ne.s32.totalorder %s202, %s203
    %p214 = scmp.eq.s32.totalorder %s26, 0
    %p215 = por %p213, %p214
    %p216 = scmp.ne.s32.totalorder %s202, %s203
    %p217 = scmp.eq.s32.totalorder %s27, 8
    %p218 = por %p216, %p217
    %p220 = scmp.ne.s32.totalorder %s203, %s219
    %p221 = scmp.eq.s32.totalorder %s27, 0
    %p222 = por %p220, %p221
    %p223 = scmp.le.s32.totalorder 1, %s21
    %p224 = scmp.lt.s32.totalorder %s21, 10
    %p225 = pnand %p223, %p224
    %p226 = pneg %p225
    // Predicated region
    $region9: #{seq2seq_forward.3} parent=5 // pred_check
      _
    $region10: #{seq2seq_forward.3} parent=5 // pred_check_branch
      %228 = sbr.rel (%p225) target = $region12
    $region11: #{seq2seq_forward.3} parent=5 // pred_region
      %s229 = ssub.s32 %s21, 1
      // Predicated region
      $region13: #{seq2seq_forward.3} parent=11 // pred_check
        %p230 = pneg %p42
      $region14: #{seq2seq_forward.3} parent=11 // pred_check_branch
        %232 = sbr.rel (%p230) target = $region16
      $region15: #{seq2seq_forward.3} parent=11 // pred_region
        _
      $region16: #{seq2seq_forward.3} parent=11 // pred_fallthru
        _
      // Predicated region
      $region17: #{seq2seq_forward.3} parent=11 // pred_check
        %p233 = pneg %p63
      $region18: #{seq2seq_forward.3} parent=11 // pred_check_branch
        %235 = sbr.rel (%p233) target = $region20
      $region19: #{seq2seq_forward.3} parent=11 // pred_region
        _
      $region20: #{seq2seq_forward.3} parent=11 // pred_fallthru
        _
      // Predicated region
      $region21: #{seq2seq_forward.3} parent=11 // pred_check
        %p236 = pneg %p84
      $region22: #{seq2seq_forward.3} parent=11 // pred_check_branch
        %238 = sbr.rel (%p236) target = $region24
      $region23: #{seq2seq_forward.3} parent=11 // pred_region
        _
      $region24: #{seq2seq_forward.3} parent=11 // pred_fallthru
        _
      // Predicated region
      $region25: #{seq2seq_forward.3} parent=11 // pred_check
        %p239 = pneg %p105
      $region26: #{seq2seq_forward.3} parent=11 // pred_check_branch
        %241 = sbr.rel (%p239) target = $region28
      $region27: #{seq2seq_forward.3} parent=11 // pred_region
        _
      $region28: #{seq2seq_forward.3} parent=11 // pred_fallthru
        _
      // Predicated region
      $region29: #{seq2seq_forward.3} parent=11 // pred_check
        %p242 = pneg %p126
      $region30: #{seq2seq_forward.3} parent=11 // pred_check_branch
        %244 = sbr.rel (%p242) target = $region32
      $region31: #{seq2seq_forward.3} parent=11 // pred_region
        _
      $region32: #{seq2seq_forward.3} parent=11 // pred_fallthru
        _
      // Predicated region
      $region33: #{seq2seq_forward.3} parent=11 // pred_check
        %p245 = pneg %p147
      $region34: #{seq2seq_forward.3} parent=11 // pred_check_branch
        %247 = sbr.rel (%p245) target = $region36
      $region35: #{seq2seq_forward.3} parent=11 // pred_region
        _
      $region36: #{seq2seq_forward.3} parent=11 // pred_fallthru
        _
      // Predicated region
      $region37: #{seq2seq_forward.3} parent=11 // pred_check
        %p248 = pneg %p168
      $region38: #{seq2seq_forward.3} parent=11 // pred_check_branch
        %250 = sbr.rel (%p248) target = $region40
      $region39: #{seq2seq_forward.3} parent=11 // pred_region
        _
      $region40: #{seq2seq_forward.3} parent=11 // pred_fallthru
        _
      // Predicated region
      $region41: #{seq2seq_forward.3} parent=11 // pred_check
        %p251 = pneg %p189
      $region42: #{seq2seq_forward.3} parent=11 // pred_check_branch
        %253 = sbr.rel (%p251) target = $region44
      $region43: #{seq2seq_forward.3} parent=11 // pred_region
        _
      $region44: #{seq2seq_forward.3} parent=11 // pred_fallthru
        _
    $region12: #{seq2seq_forward.3} parent=5 // pred_fallthru
      _
    %p254 = scmp.lt.s32.totalorder %s21, 9
    // Predicated region
    $region45: #{seq2seq_forward.3} parent=5 // pred_check
      %p255 = pneg %p254
    $region46: #{seq2seq_forward.3} parent=5 // pred_check_branch
      %257 = sbr.rel (%p255) target = $region48
    $region47: #{seq2seq_forward.3} parent=5 // pred_region
      _
    $region48: #{seq2seq_forward.3} parent=5 // pred_fallthru
      _
    %p258 = scmp.le.s32.totalorder 1, %s21
    %p259 = scmp.lt.s32.totalorder %s21, 10
    %p260 = pnand %p258, %p259
    %p261 = pneg %p260
    // Predicated region
    $region49: #{seq2seq_forward.3} parent=5 // pred_check
      _
    $region50: #{seq2seq_forward.3} parent=5 // pred_check_branch
      %263 = sbr.rel (%p260) target = $region52
    $region51: #{seq2seq_forward.3} parent=5 // pred_region
      %s264 = ssub.s32 %s21, 1
      %p265 = pneg %p42
      %p266 = pneg %p39
      %p267 = pneg %p63
      %p268 = pneg %p60
      %p269 = pneg %p84
      %p270 = pneg %p81
      %p271 = pneg %p105
      %p272 = pneg %p102
      %p273 = pneg %p126
      %p274 = pneg %p123
      %p275 = pneg %p147
      %p276 = pneg %p144
      %p277 = pneg %p168
      %p278 = pneg %p165
      %p279 = pneg %p189
      %p280 = pneg %p186
      %p281 = pneg %p215
      %p282 = pneg %p212
      %p283 = scmp.lt.s32.totalorder %s26, 8
      %s284 = scalar_select %p283, %s26, 8
      %s285 = smul.addr %s284, 8
      %s286 = scalar_lea.vmem %s9, %s285
      %p287 = scmp.lt.s32.totalorder %s26, 8
      %s288 = scalar_select %p287, %s26, 8
      %s289 = smul.addr %s288, 8
      %s290 = scalar_lea.vmem %s9, %s289
      %p291 = scmp.eq.s32.totalorder %s26, 0
      // Predicated region
      $region53: #{seq2seq_forward.3} parent=51 // pred_check
        %p292 = pneg %p291
      $region54: #{seq2seq_forward.3} parent=51 // pred_check_branch
        %294 = sbr.rel (%p292) target = $region56
      $region55: #{seq2seq_forward.3} parent=51 // pred_region
        %v295 = vld [vmem:[%s7] sm:$0xff]
        %296 = vst [vmem:[#allocation2] sm:$0xff] %v295
        %v297 = vld [vmem:[%s8] sm:$0xff]
        %298 = vst [vmem:[#allocation3] sm:$0xff] %v297
        %v299 = vld [vmem:[%s1] sm:$0xff]
        %300 = vst [vmem:[#allocation4] sm:$0xff] %v299
      $region56: #{seq2seq_forward.3} parent=51 // pred_fallthru
        _
      %v301 = vld [vmem:[#allocation4] sm:$0xff]
      %v302 = vld [vmem:[%s2] sm:$0xff]
      %v303 = vld [vmem:[%s2 + $0x8] sm:$0xff]
      %v304 = vld [vmem:[%s2 + $0x10] sm:$0xff]
      %v305 = vld [vmem:[%s2 + $0x18] sm:$0xff]
      %v306 = vld [vmem:[%s2 + $0x20] sm:$0xff]
      %v307 = vld [vmem:[%s2 + $0x28] sm:$0xff]
      %v308 = vld [vmem:[%s2 + $0x30] sm:$0xff]
      %v309 = vld [vmem:[%s2 + $0x38] sm:$0xff]
      %v310 = vld [vmem:[%s2 + $0x40] sm:$0xff]
      %v311 = vld [vmem:[%s2 + $0x48] sm:$0xff]
      %v312 = vld [vmem:[%s2 + $0x50] sm:$0xff]
      %v313 = vld [vmem:[%s2 + $0x58] sm:$0xff]
      %v314 = vld [vmem:[%s2 + $0x60] sm:$0xff]
      %v315 = vld [vmem:[%s2 + $0x68] sm:$0xff]
      %v316 = vld [vmem:[%s2 + $0x70] sm:$0xff]
      %v317 = vld [vmem:[%s2 + $0x78] sm:$0xff]
      %318 = vmatprep.subr.mxu0 0.0
      %319 = vmatpush1.msra.mxu0 %v302
      %320 = vmatprep.subr.mxu0 0.0
      %321 = vmatpush1.msra.mxu0 %v303
      %322 = vmatprep.subr.mxu0 0.0
      %323 = vmatpush1.msra.mxu0 %v304
      %324 = vmatprep.subr.mxu0 0.0
      %325 = vmatpush1.msra.mxu0 %v305
      %326 = vmatprep.subr.mxu0 0.0
      %327 = vmatpush1.msra.mxu0 %v306
      %328 = vmatprep.subr.mxu0 0.0
      %329 = vmatpush1.msra.mxu0 %v307
      %330 = vmatprep.subr.mxu0 0.0
      %331 = vmatpush1.msra.mxu0 %v308
      %332 = vmatprep.subr.mxu0 0.0
      %333 = vmatpush1.msra.mxu0 %v309
      %334 = vmatprep.subr.mxu0 0.0
      %335 = vmatpush1.msra.mxu0 %v310
      %336 = vmatprep.subr.mxu0 0.0
      %337 = vmatpush1.msra.mxu0 %v311
      %338 = vmatprep.subr.mxu0 0.0
      %339 = vmatpush1.msra.mxu0 %v312
      %340 = vmatprep.subr.mxu0 0.0
      %341 = vmatpush1.msra.mxu0 %v313
      %342 = vmatprep.subr.mxu0 0.0
      %343 = vmatpush1.msra.mxu0 %v314
      %344 = vmatprep.subr.mxu0 0.0
      %345 = vmatpush1.msra.mxu0 %v315
      %346 = vmatprep.subr.mxu0 0.0
      %347 = vmatpush1.msra.mxu0 %v316
      %348 = vmatprep.subr.mxu0 0.0
      %349 = vmatpush1.msra.mxu0 %v317
      %350 = vmatprep.subr.mxu0 0.0
      %351 = vmatpush1.msra.mxu0 0.0
      %352 = vmatprep.subr.mxu0 0.0
      %353 = vmatpush1.msra.mxu0 0.0
      %354 = vmatprep.subr.mxu0 0.0
      %355 = vmatpush1.msra.mxu0 0.0
      %356 = vmatprep.subr.mxu0 0.0
      %357 = vmatpush1.msra.mxu0 0.0
      %358 = vmatprep.subr.mxu0 0.0
      %359 = vmatpush1.msra.mxu0 0.0
      %360 = vmatprep.subr.mxu0 0.0
      %361 = vmatpush1.msra.mxu0 0.0
      %362 = vmatprep.subr.mxu0 0.0
      %363 = vmatpush1.msra.mxu0 0.0
      %364 = vmatprep.subr.mxu0 0.0
      %365 = vmatpush1.msra.mxu0 0.0
      %366 = vmatprep.subr.mxu0 0.0
      %367 = vmatpush1.msra.mxu0 0.0
      %368 = vmatprep.subr.mxu0 0.0
      %369 = vmatpush1.msra.mxu0 0.0
      %370 = vmatprep.subr.mxu0 0.0
      %371 = vmatpush1.msra.mxu0 0.0
      %372 = vmatprep.subr.mxu0 0.0
      %373 = vmatpush1.msra.mxu0 0.0
      %374 = vmatprep.subr.mxu0 0.0
      %375 = vmatpush1.msra.mxu0 0.0
      %376 = vmatprep.subr.mxu0 0.0
      %377 = vmatpush1.msra.mxu0 0.0
      %378 = vmatprep.subr.mxu0 0.0
      %379 = vmatpush1.msra.mxu0 0.0
      %380 = vmatprep.subr.mxu0 0.0
      %381 = vmatpush1.msra.mxu0 0.0
      %382 = vmatprep.mubr.f32.mxu0 0.0
      %383 = vmatmul.mubr.f32.gmra.mrb[0].mxu0 %v301
      %v384 = vpop.f32.mrb[0].mxu0
      %v385 = vadd.f32 0.0, %v384
      %v386 = vpop.f32.mrb[0].mxu0
      %387 = vdwg.mxu0
      %v388 = vld [vmem:[#allocation2] sm:$0xff]
      %v389 = vld [vmem:[#allocation3] sm:$0xff]
      %v390 = vld [vmem:[%s3] sm:$0xff]
      %v391 = vld [vmem:[%s3 + $0x8] sm:$0xff]
      %v392 = vld [vmem:[%s3 + $0x10] sm:$0xff]
      %v393 = vld [vmem:[%s3 + $0x18] sm:$0xff]
      %v394 = vld [vmem:[%s3 + $0x20] sm:$0xff]
      %v395 = vld [vmem:[%s3 + $0x28] sm:$0xff]
      %v396 = vld [vmem:[%s3 + $0x30] sm:$0xff]
      %v397 = vld [vmem:[%s3 + $0x38] sm:$0xff]
      %v398 = vld [vmem:[%s3 + $0x40] sm:$0xff]
      %v399 = vld [vmem:[%s3 + $0x48] sm:$0xff]
      %v400 = vld [vmem:[%s3 + $0x50] sm:$0xff]
      %v401 = vld [vmem:[%s3 + $0x58] sm:$0xff]
      %v402 = vld [vmem:[%s3 + $0x60] sm:$0xff]
      %v403 = vld [vmem:[%s3 + $0x68] sm:$0xff]
      %v404 = vld [vmem:[%s3 + $0x70] sm:$0xff]
      %v405 = vld [vmem:[%s3 + $0x78] sm:$0xff]
      %v406 = vld [vmem:[%s3 + $0x80] sm:$0xff]
      %v407 = vld [vmem:[%s3 + $0x88] sm:$0xff]
      %v408 = vld [vmem:[%s3 + $0x90] sm:$0xff]
      %v409 = vld [vmem:[%s3 + $0x98] sm:$0xff]
      %v410 = vld [vmem:[%s3 + $0xa0] sm:$0xff]
      %v411 = vld [vmem:[%s3 + $0xa8] sm:$0xff]
      %v412 = vld [vmem:[%s3 + $0xb0] sm:$0xff]
      %v413 = vld [vmem:[%s3 + $0xb8] sm:$0xff]
      %v414 = vld [vmem:[%s3 + $0xc0] sm:$0xff]
      %v415 = vld [vmem:[%s3 + $0xc8] sm:$0xff]
      %v416 = vld [vmem:[%s3 + $0xd0] sm:$0xff]
      %v417 = vld [vmem:[%s3 + $0xd8] sm:$0xff]
      %v418 = vld [vmem:[%s3 + $0xe0] sm:$0xff]
      %v419 = vld [vmem:[%s3 + $0xe8] sm:$0xff]
      %v420 = vld [vmem:[%s3 + $0xf0] sm:$0xff]
      %v421 = vld [vmem:[%s3 + $0xf8] sm:$0xff]
      %v422 = vld [vmem:[%s3 + $0x100] sm:$0xff]
      %v423 = vld [vmem:[%s3 + $0x108] sm:$0xff]
      %v424 = vld [vmem:[%s3 + $0x110] sm:$0xff]
      %v425 = vld [vmem:[%s3 + $0x118] sm:$0xff]
      %v426 = vld [vmem:[%s3 + $0x120] sm:$0xff]
      %v427 = vld [vmem:[%s3 + $0x128] sm:$0xff]
      %v428 = vld [vmem:[%s3 + $0x130] sm:$0xff]
      %v429 = vld [vmem:[%s3 + $0x138] sm:$0xff]
      %v430 = vld [vmem:[%s3 + $0x140] sm:$0xff]
      %v431 = vld [vmem:[%s3 + $0x148] sm:$0xff]
      %v432 = vld [vmem:[%s3 + $0x150] sm:$0xff]
      %v433 = vld [vmem:[%s3 + $0x158] sm:$0xff]
      %v434 = vld [vmem:[%s3 + $0x160] sm:$0xff]
      %v435 = vld [vmem:[%s3 + $0x168] sm:$0xff]
      %v436 = vld [vmem:[%s3 + $0x170] sm:$0xff]
      %v437 = vld [vmem:[%s3 + $0x178] sm:$0xff]
      %v438 = vld [vmem:[%s3 + $0x180] sm:$0xff]
      %v439 = vld [vmem:[%s3 + $0x188] sm:$0xff]
      %v440 = vld [vmem:[%s3 + $0x190] sm:$0xff]
      %v441 = vld [vmem:[%s3 + $0x198] sm:$0xff]
      %v442 = vld [vmem:[%s3 + $0x1a0] sm:$0xff]
      %v443 = vld [vmem:[%s3 + $0x1a8] sm:$0xff]
      %v444 = vld [vmem:[%s3 + $0x1b0] sm:$0xff]
      %v445 = vld [vmem:[%s3 + $0x1b8] sm:$0xff]
      %v446 = vld [vmem:[%s3 + $0x1c0] sm:$0xff]
      %v447 = vld [vmem:[%s3 + $0x1c8] sm:$0xff]
      %v448 = vld [vmem:[%s3 + $0x1d0] sm:$0xff]
      %v449 = vld [vmem:[%s3 + $0x1d8] sm:$0xff]
      %v450 = vld [vmem:[%s3 + $0x1e0] sm:$0xff]
      %v451 = vld [vmem:[%s3 + $0x1e8] sm:$0xff]
      %v452 = vld [vmem:[%s3 + $0x1f0] sm:$0xff]
      %v453 = vld [vmem:[%s3 + $0x1f8] sm:$0xff]
      %v454 = vld [vmem:[%s3 + $0x200] sm:$0xff]
      %v455 = vld [vmem:[%s3 + $0x208] sm:$0xff]
      %v456 = vld [vmem:[%s3 + $0x210] sm:$0xff]
      %v457 = vld [vmem:[%s3 + $0x218] sm:$0xff]
      %v458 = vld [vmem:[%s3 + $0x220] sm:$0xff]
      %v459 = vld [vmem:[%s3 + $0x228] sm:$0xff]
      %v460 = vld [vmem:[%s3 + $0x230] sm:$0xff]
      %v461 = vld [vmem:[%s3 + $0x238] sm:$0xff]
      %v462 = vld [vmem:[%s3 + $0x240] sm:$0xff]
      %v463 = vld [vmem:[%s3 + $0x248] sm:$0xff]
      %v464 = vld [vmem:[%s3 + $0x250] sm:$0xff]
      %v465 = vld [vmem:[%s3 + $0x258] sm:$0xff]
      %v466 = vld [vmem:[%s3 + $0x260] sm:$0xff]
      %v467 = vld [vmem:[%s3 + $0x268] sm:$0xff]
      %v468 = vld [vmem:[%s3 + $0x270] sm:$0xff]
      %v469 = vld [vmem:[%s3 + $0x278] sm:$0xff]
      %v470 = vld [vmem:[%s3 + $0x280] sm:$0xff]
      %v471 = vld [vmem:[%s3 + $0x288] sm:$0xff]
      %v472 = vld [vmem:[%s3 + $0x290] sm:$0xff]
      %v473 = vld [vmem:[%s3 + $0x298] sm:$0xff]
      %v474 = vld [vmem:[%s3 + $0x2a0] sm:$0xff]
      %v475 = vld [vmem:[%s3 + $0x2a8] sm:$0xff]
      %v476 = vld [vmem:[%s3 + $0x2b0] sm:$0xff]
      %v477 = vld [vmem:[%s3 + $0x2b8] sm:$0xff]
      %v478 = vld [vmem:[%s3 + $0x2c0] sm:$0xff]
      %v479 = vld [vmem:[%s3 + $0x2c8] sm:$0xff]
      %v480 = vld [vmem:[%s3 + $0x2d0] sm:$0xff]
      %v481 = vld [vmem:[%s3 + $0x2d8] sm:$0xff]
      %v482 = vld [vmem:[%s3 + $0x2e0] sm:$0xff]
      %v483 = vld [vmem:[%s3 + $0x2e8] sm:$0xff]
      %v484 = vld [vmem:[%s3 + $0x2f0] sm:$0xff]
      %v485 = vld [vmem:[%s3 + $0x2f8] sm:$0xff]
      %v486 = vld [vmem:[%s3 + $0x300] sm:$0xff]
      %v487 = vld [vmem:[%s3 + $0x308] sm:$0xff]
      %v488 = vld [vmem:[%s3 + $0x310] sm:$0xff]
      %v489 = vld [vmem:[%s3 + $0x318] sm:$0xff]
      %v490 = vld [vmem:[%s3 + $0x320] sm:$0xff]
      %v491 = vld [vmem:[%s3 + $0x328] sm:$0xff]
      %v492 = vld [vmem:[%s3 + $0x330] sm:$0xff]
      %v493 = vld [vmem:[%s3 + $0x338] sm:$0xff]
      %v494 = vld [vmem:[%s3 + $0x340] sm:$0xff]
      %v495 = vld [vmem:[%s3 + $0x348] sm:$0xff]
      %v496 = vld [vmem:[%s3 + $0x350] sm:$0xff]
      %v497 = vld [vmem:[%s3 + $0x358] sm:$0xff]
      %v498 = vld [vmem:[%s3 + $0x360] sm:$0xff]
      %v499 = vld [vmem:[%s3 + $0x368] sm:$0xff]
      %v500 = vld [vmem:[%s3 + $0x370] sm:$0xff]
      %v501 = vld [vmem:[%s3 + $0x378] sm:$0xff]
      %v502 = vld [vmem:[%s3 + $0x380] sm:$0xff]
      %v503 = vld [vmem:[%s3 + $0x388] sm:$0xff]
      %v504 = vld [vmem:[%s3 + $0x390] sm:$0xff]
      %v505 = vld [vmem:[%s3 + $0x398] sm:$0xff]
      %v506 = vld [vmem:[%s3 + $0x3a0] sm:$0xff]
      %v507 = vld [vmem:[%s3 + $0x3a8] sm:$0xff]
      %v508 = vld [vmem:[%s3 + $0x3b0] sm:$0xff]
      %v509 = vld [vmem:[%s3 + $0x3b8] sm:$0xff]
      %v510 = vld [vmem:[%s3 + $0x3c0] sm:$0xff]
      %v511 = vld [vmem:[%s3 + $0x3c8] sm:$0xff]
      %v512 = vld [vmem:[%s3 + $0x3d0] sm:$0xff]
      %v513 = vld [vmem:[%s3 + $0x3d8] sm:$0xff]
      %v514 = vld [vmem:[%s3 + $0x3e0] sm:$0xff]
      %v515 = vld [vmem:[%s3 + $0x3e8] sm:$0xff]
      %v516 = vld [vmem:[%s3 + $0x3f0] sm:$0xff]
      %v517 = vld [vmem:[%s3 + $0x3f8] sm:$0xff]
      %v518 = vld [vmem:[%s4] sm:$0xf]
      %v520 = vlaneseq
      %v521 = vshrl.u32 %v520, 7
      %v522 = vsub.s32 0, %v521
      %v523 = vrot.slane %v518, %v522
      %v524 = vlaneseq
      %v525 = vshrl.u32 %v524, 7
      %v526 = vsub.s32 1, %v525
      %v527 = vrot.slane %v518, %v526
      %v528 = vlaneseq
      %v529 = vshrl.u32 %v528, 7
      %v530 = vsub.s32 2, %v529
      %v531 = vrot.slane %v518, %v530
      %v532 = vlaneseq
      %v533 = vshrl.u32 %v532, 7
      %v534 = vsub.s32 3, %v533
      %v535 = vrot.slane %v518, %v534
      %540 = vmatprep.subr.mxu0 %v391
      %541 = vmatpush1.msra.mxu0 %v390
      %542 = vmatprep.subr.mxu0 %v395
      %543 = vmatpush1.msra.mxu0 %v394
      %544 = vmatprep.subr.mxu0 %v399
      %545 = vmatpush1.msra.mxu0 %v398
      %546 = vmatprep.subr.mxu0 %v403
      %547 = vmatpush1.msra.mxu0 %v402
      %548 = vmatprep.subr.mxu0 %v407
      %549 = vmatpush1.msra.mxu0 %v406
      %550 = vmatprep.subr.mxu0 %v411
      %551 = vmatpush1.msra.mxu0 %v410
      %552 = vmatprep.subr.mxu0 %v415
      %553 = vmatpush1.msra.mxu0 %v414
      %554 = vmatprep.subr.mxu0 %v419
      %555 = vmatpush1.msra.mxu0 %v418
      %556 = vmatprep.subr.mxu0 %v423
      %557 = vmatpush1.msra.mxu0 %v422
      %558 = vmatprep.subr.mxu0 %v427
      %559 = vmatpush1.msra.mxu0 %v426
      %560 = vmatprep.subr.mxu0 %v431
      %561 = vmatpush1.msra.mxu0 %v430
      %562 = vmatprep.subr.mxu0 %v435
      %563 = vmatpush1.msra.mxu0 %v434
      %564 = vmatprep.subr.mxu0 %v439
      %565 = vmatpush1.msra.mxu0 %v438
      %566 = vmatprep.subr.mxu0 %v443
      %567 = vmatpush1.msra.mxu0 %v442
      %568 = vmatprep.subr.mxu0 %v447
      %569 = vmatpush1.msra.mxu0 %v446
      %570 = vmatprep.subr.mxu0 %v451
      %571 = vmatpush1.msra.mxu0 %v450
      %572 = vmatprep.subr.mxu0 %v455
      %573 = vmatpush1.msra.mxu0 %v454
      %574 = vmatprep.subr.mxu0 %v459
      %575 = vmatpush1.msra.mxu0 %v458
      %576 = vmatprep.subr.mxu0 %v463
      %577 = vmatpush1.msra.mxu0 %v462
      %578 = vmatprep.subr.mxu0 %v467
      %579 = vmatpush1.msra.mxu0 %v466
      %580 = vmatprep.subr.mxu0 %v471
      %581 = vmatpush1.msra.mxu0 %v470
      %582 = vmatprep.subr.mxu0 %v475
      %583 = vmatpush1.msra.mxu0 %v474
      %584 = vmatprep.subr.mxu0 %v479
      %585 = vmatpush1.msra.mxu0 %v478
      %586 = vmatprep.subr.mxu0 %v483
      %587 = vmatpush1.msra.mxu0 %v482
      %588 = vmatprep.subr.mxu0 %v487
      %589 = vmatpush1.msra.mxu0 %v486
      %590 = vmatprep.subr.mxu0 %v491
      %591 = vmatpush1.msra.mxu0 %v490
      %592 = vmatprep.subr.mxu0 %v495
      %593 = vmatpush1.msra.mxu0 %v494
      %594 = vmatprep.subr.mxu0 %v499
      %595 = vmatpush1.msra.mxu0 %v498
      %596 = vmatprep.subr.mxu0 %v503
      %597 = vmatpush1.msra.mxu0 %v502
      %598 = vmatprep.subr.mxu0 %v507
      %599 = vmatpush1.msra.mxu0 %v506
      %600 = vmatprep.subr.mxu0 %v511
      %601 = vmatpush1.msra.mxu0 %v510
      %602 = vmatprep.subr.mxu0 %v515
      %603 = vmatpush1.msra.mxu0 %v514
      %604 = vmatprep.mubr.f32.mxu0 %v388
      %605 = vmatmul.mubr.f32.gmra.mrb[0].mxu0 %v385
      %v606 = vpop.f32.mrb[0].mxu0
      %v607 = vadd.f32 %v523, %v606
      %v608 = vpop.f32.mrb[0].mxu0
      %v609 = vadd.f32 %v527, %v608
      %610 = vdwg.mxu0
      %611 = vmatprep.subr.mxu0 %v393
      %612 = vmatpush1.msra.mxu0 %v392
      %613 = vmatprep.subr.mxu0 %v397
      %614 = vmatpush1.msra.mxu0 %v396
      %615 = vmatprep.subr.mxu0 %v401
      %616 = vmatpush1.msra.mxu0 %v400
      %617 = vmatprep.subr.mxu0 %v405
      %618 = vmatpush1.msra.mxu0 %v404
      %619 = vmatprep.subr.mxu0 %v409
      %620 = vmatpush1.msra.mxu0 %v408
      %621 = vmatprep.subr.mxu0 %v413
      %622 = vmatpush1.msra.mxu0 %v412
      %623 = vmatprep.subr.mxu0 %v417
      %624 = vmatpush1.msra.mxu0 %v416
      %625 = vmatprep.subr.mxu0 %v421
      %626 = vmatpush1.msra.mxu0 %v420
      %627 = vmatprep.subr.mxu0 %v425
      %628 = vmatpush1.msra.mxu0 %v424
      %629 = vmatprep.subr.mxu0 %v429
      %630 = vmatpush1.msra.mxu0 %v428
      %631 = vmatprep.subr.mxu0 %v433
      %632 = vmatpush1.msra.mxu0 %v432
      %633 = vmatprep.subr.mxu0 %v437
      %634 = vmatpush1.msra.mxu0 %v436
      %635 = vmatprep.subr.mxu0 %v441
      %636 = vmatpush1.msra.mxu0 %v440
      %637 = vmatprep.subr.mxu0 %v445
      %638 = vmatpush1.msra.mxu0 %v444
      %639 = vmatprep.subr.mxu0 %v449
      %640 = vmatpush1.msra.mxu0 %v448
      %641 = vmatprep.subr.mxu0 %v453
      %642 = vmatpush1.msra.mxu0 %v452
      %643 = vmatprep.subr.mxu0 %v457
      %644 = vmatpush1.msra.mxu0 %v456
      %645 = vmatprep.subr.mxu0 %v461
      %646 = vmatpush1.msra.mxu0 %v460
      %647 = vmatprep.subr.mxu0 %v465
      %648 = vmatpush1.msra.mxu0 %v464
      %649 = vmatprep.subr.mxu0 %v469
      %650 = vmatpush1.msra.mxu0 %v468
      %651 = vmatprep.subr.mxu0 %v473
      %652 = vmatpush1.msra.mxu0 %v472
      %653 = vmatprep.subr.mxu0 %v477
      %654 = vmatpush1.msra.mxu0 %v476
      %655 = vmatprep.subr.mxu0 %v481
      %656 = vmatpush1.msra.mxu0 %v480
      %657 = vmatprep.subr.mxu0 %v485
      %658 = vmatpush1.msra.mxu0 %v484
      %659 = vmatprep.subr.mxu0 %v489
      %660 = vmatpush1.msra.mxu0 %v488
      %661 = vmatprep.subr.mxu0 %v493
      %662 = vmatpush1.msra.mxu0 %v492
      %663 = vmatprep.subr.mxu0 %v497
      %664 = vmatpush1.msra.mxu0 %v496
      %665 = vmatprep.subr.mxu0 %v501
      %666 = vmatpush1.msra.mxu0 %v500
      %667 = vmatprep.subr.mxu0 %v505
      %668 = vmatpush1.msra.mxu0 %v504
      %669 = vmatprep.subr.mxu0 %v509
      %670 = vmatpush1.msra.mxu0 %v508
      %671 = vmatprep.subr.mxu0 %v513
      %672 = vmatpush1.msra.mxu0 %v512
      %673 = vmatprep.subr.mxu0 %v517
      %674 = vmatpush1.msra.mxu0 %v516
      %675 = vmatprep.mubr.f32.mxu0 %v388
      %676 = vmatmul.mubr.f32.gmra.mrb[0].mxu0 %v385
      %v677 = vpop.f32.mrb[0].mxu0
      %v678 = vadd.f32 %v531, %v677
      %v679 = vpop.f32.mrb[0].mxu0
      %v680 = vadd.f32 %v535, %v679
      %681 = vdwg.mxu0
      %v682 = vxor.u32 %v607, 2147483648
      %v683 = vmul.f32 %v682, 1.442695
      %v684 = vpow.pop %v683
      %v685 = vadd.f32 %v684, 1.0
      %v686 = vrcp.pop %v685
      %v687 = vmul.f32 1.0, %v686
      %v688 = vxor.u32 %v609, 2147483648
      %v689 = vmul.f32 %v688, 1.442695
      %v690 = vpow.pop %v689
      %v691 = vadd.f32 %v690, 1.0
      %v692 = vrcp.pop %v691
      %v693 = vmul.f32 1.0, %v692
      %v694 = vtanh.pop %v678
      %v695 = vxor.u32 %v680, 2147483648
      %v696 = vmul.f32 %v695, 1.442695
      %v697 = vpow.pop %v696
      %v698 = vadd.f32 %v697, 1.0
      %v699 = vrcp.pop %v698
      %v700 = vmul.f32 1.0, %v699
      %v701 = vmul.f32 %v693, %v389
      %v702 = vmul.f32 %v687, %v694
      %v703 = vadd.f32 %v701, %v702
      %v704 = vtanh.pop %v703
      %v705 = vmul.f32 %v700, %v704
      %706 = vst [vmem:[#allocation2] sm:$0xff] %v705
      %707 = vst [vmem:[#allocation3] sm:$0xff] %v703
      %v708 = vld [vmem:[%s5] sm:$0xff]
      %v709 = vld [vmem:[%s5 + $0x8] sm:$0xff]
      %v710 = vld [vmem:[%s5 + $0x10] sm:$0xff]
      %v711 = vld [vmem:[%s5 + $0x18] sm:$0xff]
      %v712 = vld [vmem:[%s5 + $0x20] sm:$0xff]
      %v713 = vld [vmem:[%s5 + $0x28] sm:$0xff]
      %v714 = vld [vmem:[%s5 + $0x30] sm:$0xff]
      %v715 = vld [vmem:[%s5 + $0x38] sm:$0xff]
      %v716 = vld [vmem:[%s5 + $0x40] sm:$0xff]
      %v717 = vld [vmem:[%s5 + $0x48] sm:$0xff]
      %v718 = vld [vmem:[%s5 + $0x50] sm:$0xff]
      %v719 = vld [vmem:[%s5 + $0x58] sm:$0xff]
      %v720 = vld [vmem:[%s5 + $0x60] sm:$0xff]
      %v721 = vld [vmem:[%s5 + $0x68] sm:$0xff]
      %v722 = vld [vmem:[%s5 + $0x70] sm:$0xff]
      %v723 = vld [vmem:[%s5 + $0x78] sm:$0xff]
      %v724 = vld [vmem:[%s6] sm:$0x1]
      %v726 = vlaneseq
      %v727 = vshrl.u32 %v726, 7
      %v728 = vsub.s32 0, %v727
      %v729 = vrot.slane %v724, %v728
      %731 = vmatprep.subr.mxu0 0.0
      %732 = vmatpush1.msra.mxu0 %v708
      %733 = vmatprep.subr.mxu0 0.0
      %734 = vmatpush1.msra.mxu0 %v709
      %735 = vmatprep.subr.mxu0 0.0
      %736 = vmatpush1.msra.mxu0 %v710
      %737 = vmatprep.subr.mxu0 0.0
      %738 = vmatpush1.msra.mxu0 %v711
      %739 = vmatprep.subr.mxu0 0.0
      %740 = vmatpush1.msra.mxu0 %v712
      %741 = vmatprep.subr.mxu0 0.0
      %742 = vmatpush1.msra.mxu0 %v713
      %743 = vmatprep.subr.mxu0 0.0
      %744 = vmatpush1.msra.mxu0 %v714
      %745 = vmatprep.subr.mxu0 0.0
      %746 = vmatpush1.msra.mxu0 %v715
      %747 = vmatprep.subr.mxu0 0.0
      %748 = vmatpush1.msra.mxu0 %v716
      %749 = vmatprep.subr.mxu0 0.0
      %750 = vmatpush1.msra.mxu0 %v717
      %751 = vmatprep.subr.mxu0 0.0
      %752 = vmatpush1.msra.mxu0 %v718
      %753 = vmatprep.subr.mxu0 0.0
      %754 = vmatpush1.msra.mxu0 %v719
      %755 = vmatprep.subr.mxu0 0.0
      %756 = vmatpush1.msra.mxu0 %v720
      %757 = vmatprep.subr.mxu0 0.0
      %758 = vmatpush1.msra.mxu0 %v721
      %759 = vmatprep.subr.mxu0 0.0
      %760 = vmatpush1.msra.mxu0 %v722
      %761 = vmatprep.subr.mxu0 0.0
      %762 = vmatpush1.msra.mxu0 %v723
      %763 = vmatprep.subr.mxu0 0.0
      %764 = vmatpush1.msra.mxu0 0.0
      %765 = vmatprep.subr.mxu0 0.0
      %766 = vmatpush1.msra.mxu0 0.0
      %767 = vmatprep.subr.mxu0 0.0
      %768 = vmatpush1.msra.mxu0 0.0
      %769 = vmatprep.subr.mxu0 0.0
      %770 = vmatpush1.msra.mxu0 0.0
      %771 = vmatprep.subr.mxu0 0.0
      %772 = vmatpush1.msra.mxu0 0.0
      %773 = vmatprep.subr.mxu0 0.0
      %774 = vmatpush1.msra.mxu0 0.0
      %775 = vmatprep.subr.mxu0 0.0
      %776 = vmatpush1.msra.mxu0 0.0
      %777 = vmatprep.subr.mxu0 0.0
      %778 = vmatpush1.msra.mxu0 0.0
      %779 = vmatprep.subr.mxu0 0.0
      %780 = vmatpush1.msra.mxu0 0.0
      %781 = vmatprep.subr.mxu0 0.0
      %782 = vmatpush1.msra.mxu0 0.0
      %783 = vmatprep.subr.mxu0 0.0
      %784 = vmatpush1.msra.mxu0 0.0
      %785 = vmatprep.subr.mxu0 0.0
      %786 = vmatpush1.msra.mxu0 0.0
      %787 = vmatprep.subr.mxu0 0.0
      %788 = vmatpush1.msra.mxu0 0.0
      %789 = vmatprep.subr.mxu0 0.0
      %790 = vmatpush1.msra.mxu0 0.0
      %791 = vmatprep.subr.mxu0 0.0
      %792 = vmatpush1.msra.mxu0 0.0
      %793 = vmatprep.subr.mxu0 0.0
      %794 = vmatpush1.msra.mxu0 0.0
      %795 = vmatprep.mubr.f32.mxu0 0.0
      %796 = vmatmul.mubr.f32.gmra.mrb[0].mxu0 %v705
      %v797 = vpop.f32.mrb[0].mxu0
      %v798 = vadd.f32 %v729, %v797
      %v799 = vpop.f32.mrb[0].mxu0
      %800 = vdwg.mxu0
      %801 = vst [vmem:[%s290] sm:$0xff] %v798
      %v802 = vlaneseq
      %v803 = vand.u32 %v802, 127
      %vm804 = vcmp.lt.s32.totalorder %v803, 35
      %v805 = vsel %vm804, %v798, -1e+30
      %806 = vmax.xlane.f32.xlu0 %v805
      %v807 = vpop.xlane.xlu0 %806
      %vm808 = vcmp.eq.f32.partialorder %v805, %v807
      %v809 = vsel %vm808, %v803, 128
      %v810 = vand.u32 %v809, 65535
      %v811 = vshra.s32 %v809, 16
      %v812 = vcvt.s32.f32 %v810
      %v813 = vcvt.s32.f32 %v811
      %814 = vmin.xlane.f32.xlu0 %v813
      %v815 = vpop.xlane.xlu0 %814
      %vm816 = vcmp.eq.f32.partialorder %v813, %v815
      %v817 = vsel %vm816, %v812, inf
      %818 = vmin.xlane.f32.xlu0 %v817
      %v819 = vpop.xlane.xlu0 %818
      %v820 = vcvt.f32.s32 %v819
      %v821 = vcvt.f32.s32 %v815
      %v822 = vshll.u32 %v821, 16
      %v823 = vadd.s32 %v822, %v820
      %vm824 = vcmp.eq.s32.totalorder %v803, %v823
      %v825 = vsel %vm824, 1, 0
      %v826 = vcvt.s32.f32 %v825
      %s827 = sadd.s32 %s26, 1
      %s828 = smul.u32 %s827, 8
      %s829 = scalar_lea.vmem %s1, %s828
      %v830 = vld [vmem:[%s829] sm:$0xff]
      %s831 = sld [smem:[#allocation6 + %s26]]
      %p832 = scmp.ne.s32.totalorder %s831, 0
      %s833 = scalar_select %p832, 1, 0
      %v834 = vstv %s833
      %vm835 = vcmp.eq.s32.totalorder %v834, 1
      %v836 = vsel %vm835, %v830, %v826
      %837 = vst [vmem:[#allocation4] sm:$0xff] %v836
      %p838 = scmp.lt.s32.totalorder %s26, 8
      %s839 = scalar_select %p838, %s26, 8
      %s840 = smul.addr %s839, 8
      %s841 = scalar_lea.vmem %s9, %s840
      // Predicated region
      $region57: #{seq2seq_forward.3} parent=51 // pred_check
        %p842 = pneg %p212
      $region58: #{seq2seq_forward.3} parent=51 // pred_check_branch
        %844 = sbr.rel (%p842) target = $region60
      $region59: #{seq2seq_forward.3} parent=51 // pred_region
        _
      $region60: #{seq2seq_forward.3} parent=51 // pred_fallthru
        _
    $region52: #{seq2seq_forward.3} parent=5 // pred_fallthru
      _
    %p845 = scmp.le.s32.totalorder 2, %s21
    // Predicated region
    $region61: #{seq2seq_forward.3} parent=5 // pred_check
      %p846 = pneg %p845
    $region62: #{seq2seq_forward.3} parent=5 // pred_check_branch
      %848 = sbr.rel (%p846) target = $region64
    $region63: #{seq2seq_forward.3} parent=5 // pred_region
      %s849 = ssub.s32 %s21, 2
      // Predicated region
      $region65: #{seq2seq_forward.3} parent=63 // pred_check
        %p850 = pneg %p218
      $region66: #{seq2seq_forward.3} parent=63 // pred_check_branch
        %852 = sbr.rel (%p850) target = $region68
      $region67: #{seq2seq_forward.3} parent=63 // pred_region
        %p853 = scmp.lt.s32.totalorder %s27, 8
        %s854 = scalar_select %p853, %s27, 8
        %s855 = smul.addr %s854, 8
        %s856 = scalar_lea.vmem %s9, %s855
      $region68: #{seq2seq_forward.3} parent=63 // pred_fallthru
        _
    $region64: #{seq2seq_forward.3} parent=5 // pred_fallthru
      _
  $region6: #{seq2seq_forward.3} parent=0 // loop_footer
    %s25 = sadd.s32 1, %s21
  $region7: #{seq2seq_forward.3} parent=0 // loop_footer_branch
    %20 = sbr.rel target = $region3
  $region8: #{seq2seq_forward.3} parent=0 // loop_exit
    _

// kernel: seq2seq_forward.2
$region0: #{seq2seq_forward.2}
  #allocation0 [shape = 'u32[]', space=smem, size = 0x4, offset = 0x4, fixed_abs, tag = 'smem constant byte address 0x4 - core index']
  #allocation1 [shape = 'u32[144,128]{1,0:T(1,128)}', space=vmem, size = 0x12000, scoped, tag = 'internal scratch']
  %s0 = inlined_call_operand.vmem [shape: f32[12,8,128], index: 0, kind: input, shape index: {}]
  %s1 = inlined_call_operand.vmem [shape: f32[256,512], index: 1, kind: input, shape index: {}]
  %s2 = inlined_call_operand.vmem [shape: f32[1,512], index: 2, kind: input, shape index: {}]
  %s3 = inlined_call_operand.vmem [shape: f32[8,128], index: 3, kind: output, shape index: {0}]
  %s4 = inlined_call_operand.vmem [shape: f32[8,128], index: 4, kind: output, shape index: {1}]
  %5 = xla_tuple %s3, %s4
  %s6 = sld [smem:[#allocation0]]
  $region30: #{seq2seq_forward.2} parent=0
    _
  %s8 = ssub.s32 1, %s6
  %s9 = scalar_select 0, %s8, %s6
  // Predicated region
  $region2: #{seq2seq_forward.2} parent=0 // pred_check
    _
  $region3: #{seq2seq_forward.2} parent=0 // pred_check_branch
    %11 = sbr.rel (0) target = $region5
  $region4: #{seq2seq_forward.2} parent=0 // pred_region
    _
  $region5: #{seq2seq_forward.2} parent=0 // pred_fallthru
    _
  // Predicated region
  $region6: #{seq2seq_forward.2} parent=0 // pred_check
    _
  $region7: #{seq2seq_forward.2} parent=0 // pred_check_branch
    %13 = sbr.rel (0) target = $region9
  $region8: #{seq2seq_forward.2} parent=0 // pred_region
    _
  $region9: #{seq2seq_forward.2} parent=0 // pred_fallthru
    _
  // Predicated region
  $region10: #{seq2seq_forward.2} parent=0 // pred_check
    _
  $region11: #{seq2seq_forward.2} parent=0 // pred_check_branch
    %15 = sbr.rel (0) target = $region13
  $region12: #{seq2seq_forward.2} parent=0 // pred_region
    _
  $region13: #{seq2seq_forward.2} parent=0 // pred_fallthru
    _
  %v16 = vld [vmem:[%s1] sm:$0xff]
  %v17 = vld [vmem:[%s1 + $0x8] sm:$0xff]
  %v18 = vld [vmem:[%s1 + $0x10] sm:$0xff]
  %v19 = vld [vmem:[%s1 + $0x18] sm:$0xff]
  %v20 = vld [vmem:[%s1 + $0x20] sm:$0xff]
  %v21 = vld [vmem:[%s1 + $0x28] sm:$0xff]
  %v22 = vld [vmem:[%s1 + $0x30] sm:$0xff]
  %v23 = vld [vmem:[%s1 + $0x38] sm:$0xff]
  %v24 = vld [vmem:[%s1 + $0x40] sm:$0xff]
  %v25 = vld [vmem:[%s1 + $0x48] sm:$0xff]
  %v26 = vld [vmem:[%s1 + $0x50] sm:$0xff]
  %v27 = vld [vmem:[%s1 + $0x58] sm:$0xff]
  %v28 = vld [vmem:[%s1 + $0x60] sm:$0xff]
  %v29 = vld [vmem:[%s1 + $0x68] sm:$0xff]
  %v30 = vld [vmem:[%s1 + $0x70] sm:$0xff]
  %v31 = vld [vmem:[%s1 + $0x78] sm:$0xff]
  %v32 = vld [vmem:[%s1 + $0x80] sm:$0xff]
  %v33 = vld [vmem:[%s1 + $0x88] sm:$0xff]
  %v34 = vld [vmem:[%s1 + $0x90] sm:$0xff]
  %v35 = vld [vmem:[%s1 + $0x98] sm:$0xff]
  %v36 = vld [vmem:[%s1 + $0xa0] sm:$0xff]
  %v37 = vld [vmem:[%s1 + $0xa8] sm:$0xff]
  %v38 = vld [vmem:[%s1 + $0xb0] sm:$0xff]
  %v39 = vld [vmem:[%s1 + $0xb8] sm:$0xff]
  %v40 = vld [vmem:[%s1 + $0xc0] sm:$0xff]
  %v41 = vld [vmem:[%s1 + $0xc8] sm:$0xff]
  %v42 = vld [vmem:[%s1 + $0xd0] sm:$0xff]
  %v43 = vld [vmem:[%s1 + $0xd8] sm:$0xff]
  %v44 = vld [vmem:[%s1 + $0xe0] sm:$0xff]
  %v45 = vld [vmem:[%s1 + $0xe8] sm:$0xff]
  %v46 = vld [vmem:[%s1 + $0xf0] sm:$0xff]
  %v47 = vld [vmem:[%s1 + $0xf8] sm:$0xff]
  %v48 = vld [vmem:[%s1 + $0x100] sm:$0xff]
  %v49 = vld [vmem:[%s1 + $0x108] sm:$0xff]
  %v50 = vld [vmem:[%s1 + $0x110] sm:$0xff]
  %v51 = vld [vmem:[%s1 + $0x118] sm:$0xff]
  %v52 = vld [vmem:[%s1 + $0x120] sm:$0xff]
  %v53 = vld [vmem:[%s1 + $0x128] sm:$0xff]
  %v54 = vld [vmem:[%s1 + $0x130] sm:$0xff]
  %v55 = vld [vmem:[%s1 + $0x138] sm:$0xff]
  %v56 = vld [vmem:[%s1 + $0x140] sm:$0xff]
  %v57 = vld [vmem:[%s1 + $0x148] sm:$0xff]
  %v58 = vld [vmem:[%s1 + $0x150] sm:$0xff]
  %v59 = vld [vmem:[%s1 + $0x158] sm:$0xff]
  %v60 = vld [vmem:[%s1 + $0x160] sm:$0xff]
  %v61 = vld [vmem:[%s1 + $0x168] sm:$0xff]
  %v62 = vld [vmem:[%s1 + $0x170] sm:$0xff]
  %v63 = vld [vmem:[%s1 + $0x178] sm:$0xff]
  %v64 = vld [vmem:[%s1 + $0x180] sm:$0xff]
  %v65 = vld [vmem:[%s1 + $0x188] sm:$0xff]
  %v66 = vld [vmem:[%s1 + $0x190] sm:$0xff]
  %v67 = vld [vmem:[%s1 + $0x198] sm:$0xff]
  %v68 = vld [vmem:[%s1 + $0x1a0] sm:$0xff]
  %v69 = vld [vmem:[%s1 + $0x1a8] sm:$0xff]
  %v70 = vld [vmem:[%s1 + $0x1b0] sm:$0xff]
  %v71 = vld [vmem:[%s1 + $0x1b8] sm:$0xff]
  %v72 = vld [vmem:[%s1 + $0x1c0] sm:$0xff]
  %v73 = vld [vmem:[%s1 + $0x1c8] sm:$0xff]
  %v74 = vld [vmem:[%s1 + $0x1d0] sm:$0xff]
  %v75 = vld [vmem:[%s1 + $0x1d8] sm:$0xff]
  %v76 = vld [vmem:[%s1 + $0x1e0] sm:$0xff]
  %v77 = vld [vmem:[%s1 + $0x1e8] sm:$0xff]
  %v78 = vld [vmem:[%s1 + $0x1f0] sm:$0xff]
  %v79 = vld [vmem:[%s1 + $0x1f8] sm:$0xff]
  %v80 = vld [vmem:[%s1 + $0x200] sm:$0xff]
  %v81 = vld [vmem:[%s1 + $0x208] sm:$0xff]
  %v82 = vld [vmem:[%s1 + $0x210] sm:$0xff]
  %v83 = vld [vmem:[%s1 + $0x218] sm:$0xff]
  %v84 = vld [vmem:[%s1 + $0x220] sm:$0xff]
  %v85 = vld [vmem:[%s1 + $0x228] sm:$0xff]
  %v86 = vld [vmem:[%s1 + $0x230] sm:$0xff]
  %v87 = vld [vmem:[%s1 + $0x238] sm:$0xff]
  %v88 = vld [vmem:[%s1 + $0x240] sm:$0xff]
  %v89 = vld [vmem:[%s1 + $0x248] sm:$0xff]
  %v90 = vld [vmem:[%s1 + $0x250] sm:$0xff]
  %v91 = vld [vmem:[%s1 + $0x258] sm:$0xff]
  %v92 = vld [vmem:[%s1 + $0x260] sm:$0xff]
  %v93 = vld [vmem:[%s1 + $0x268] sm:$0xff]
  %v94 = vld [vmem:[%s1 + $0x270] sm:$0xff]
  %v95 = vld [vmem:[%s1 + $0x278] sm:$0xff]
  %v96 = vld [vmem:[%s1 + $0x280] sm:$0xff]
  %v97 = vld [vmem:[%s1 + $0x288] sm:$0xff]
  %v98 = vld [vmem:[%s1 + $0x290] sm:$0xff]
  %v99 = vld [vmem:[%s1 + $0x298] sm:$0xff]
  %v100 = vld [vmem:[%s1 + $0x2a0] sm:$0xff]
  %v101 = vld [vmem:[%s1 + $0x2a8] sm:$0xff]
  %v102 = vld [vmem:[%s1 + $0x2b0] sm:$0xff]
  %v103 = vld [vmem:[%s1 + $0x2b8] sm:$0xff]
  %v104 = vld [vmem:[%s1 + $0x2c0] sm:$0xff]
  %v105 = vld [vmem:[%s1 + $0x2c8] sm:$0xff]
  %v106 = vld [vmem:[%s1 + $0x2d0] sm:$0xff]
  %v107 = vld [vmem:[%s1 + $0x2d8] sm:$0xff]
  %v108 = vld [vmem:[%s1 + $0x2e0] sm:$0xff]
  %v109 = vld [vmem:[%s1 + $0x2e8] sm:$0xff]
  %v110 = vld [vmem:[%s1 + $0x2f0] sm:$0xff]
  %v111 = vld [vmem:[%s1 + $0x2f8] sm:$0xff]
  %v112 = vld [vmem:[%s1 + $0x300] sm:$0xff]
  %v113 = vld [vmem:[%s1 + $0x308] sm:$0xff]
  %v114 = vld [vmem:[%s1 + $0x310] sm:$0xff]
  %v115 = vld [vmem:[%s1 + $0x318] sm:$0xff]
  %v116 = vld [vmem:[%s1 + $0x320] sm:$0xff]
  %v117 = vld [vmem:[%s1 + $0x328] sm:$0xff]
  %v118 = vld [vmem:[%s1 + $0x330] sm:$0xff]
  %v119 = vld [vmem:[%s1 + $0x338] sm:$0xff]
  %v120 = vld [vmem:[%s1 + $0x340] sm:$0xff]
  %v121 = vld [vmem:[%s1 + $0x348] sm:$0xff]
  %v122 = vld [vmem:[%s1 + $0x350] sm:$0xff]
  %v123 = vld [vmem:[%s1 + $0x358] sm:$0xff]
  %v124 = vld [vmem:[%s1 + $0x360] sm:$0xff]
  %v125 = vld [vmem:[%s1 + $0x368] sm:$0xff]
  %v126 = vld [vmem:[%s1 + $0x370] sm:$0xff]
  %v127 = vld [vmem:[%s1 + $0x378] sm:$0xff]
  %v128 = vld [vmem:[%s1 + $0x380] sm:$0xff]
  %v129 = vld [vmem:[%s1 + $0x388] sm:$0xff]
  %v130 = vld [vmem:[%s1 + $0x390] sm:$0xff]
  %v131 = vld [vmem:[%s1 + $0x398] sm:$0xff]
  %v132 = vld [vmem:[%s1 + $0x3a0] sm:$0xff]
  %v133 = vld [vmem:[%s1 + $0x3a8] sm:$0xff]
  %v134 = vld [vmem:[%s1 + $0x3b0] sm:$0xff]
  %v135 = vld [vmem:[%s1 + $0x3b8] sm:$0xff]
  %v136 = vld [vmem:[%s1 + $0x3c0] sm:$0xff]
  %v137 = vld [vmem:[%s1 + $0x3c8] sm:$0xff]
  %v138 = vld [vmem:[%s1 + $0x3d0] sm:$0xff]
  %v139 = vld [vmem:[%s1 + $0x3d8] sm:$0xff]
  %v140 = vld [vmem:[%s1 + $0x3e0] sm:$0xff]
  %v141 = vld [vmem:[%s1 + $0x3e8] sm:$0xff]
  %v142 = vld [vmem:[%s1 + $0x3f0] sm:$0xff]
  %v143 = vld [vmem:[%s1 + $0x3f8] sm:$0xff]
  %v144 = vld [vmem:[%s2] sm:$0xf]
  %v145 = vld [vmem:[%s0] sm:$0xff]
  %v147 = vlaneseq
  %v148 = vshrl.u32 %v147, 7
  %v149 = vsub.s32 0, %v148
  %v150 = vrot.slane %v144, %v149
  %v151 = vlaneseq
  %v152 = vshrl.u32 %v151, 7
  %v153 = vsub.s32 1, %v152
  %v154 = vrot.slane %v144, %v153
  %v155 = vlaneseq
  %v156 = vshrl.u32 %v155, 7
  %v157 = vsub.s32 2, %v156
  %v158 = vrot.slane %v144, %v157
  %v159 = vlaneseq
  %v160 = vshrl.u32 %v159, 7
  %v161 = vsub.s32 3, %v160
  %v162 = vrot.slane %v144, %v161
  %167 = vmatprep.subr.mxu0 %v17
  %168 = vmatpush1.msra.mxu0 %v16
  %169 = vmatprep.subr.mxu0 %v21
  %170 = vmatpush1.msra.mxu0 %v20
  %171 = vmatprep.subr.mxu0 %v25
  %172 = vmatpush1.msra.mxu0 %v24
  %173 = vmatprep.subr.mxu0 %v29
  %174 = vmatpush1.msra.mxu0 %v28
  %175 = vmatprep.subr.mxu0 %v33
  %176 = vmatpush1.msra.mxu0 %v32
  %177 = vmatprep.subr.mxu0 %v37
  %178 = vmatpush1.msra.mxu0 %v36
  %179 = vmatprep.subr.mxu0 %v41
  %180 = vmatpush1.msra.mxu0 %v40
  %181 = vmatprep.subr.mxu0 %v45
  %182 = vmatpush1.msra.mxu0 %v44
  %183 = vmatprep.subr.mxu0 %v49
  %184 = vmatpush1.msra.mxu0 %v48
  %185 = vmatprep.subr.mxu0 %v53
  %186 = vmatpush1.msra.mxu0 %v52
  %187 = vmatprep.subr.mxu0 %v57
  %188 = vmatpush1.msra.mxu0 %v56
  %189 = vmatprep.subr.mxu0 %v61
  %190 = vmatpush1.msra.mxu0 %v60
  %191 = vmatprep.subr.mxu0 %v65
  %192 = vmatpush1.msra.mxu0 %v64
  %193 = vmatprep.subr.mxu0 %v69
  %194 = vmatpush1.msra.mxu0 %v68
  %195 = vmatprep.subr.mxu0 %v73
  %196 = vmatpush1.msra.mxu0 %v72
  %197 = vmatprep.subr.mxu0 %v77
  %198 = vmatpush1.msra.mxu0 %v76
  %199 = vmatprep.subr.mxu0 %v81
  %200 = vmatpush1.msra.mxu0 %v80
  %201 = vmatprep.subr.mxu0 %v85
  %202 = vmatpush1.msra.mxu0 %v84
  %203 = vmatprep.subr.mxu0 %v89
  %204 = vmatpush1.msra.mxu0 %v88
  %205 = vmatprep.subr.mxu0 %v93
  %206 = vmatpush1.msra.mxu0 %v92
  %207 = vmatprep.subr.mxu0 %v97
  %208 = vmatpush1.msra.mxu0 %v96
  %209 = vmatprep.subr.mxu0 %v101
  %210 = vmatpush1.msra.mxu0 %v100
  %211 = vmatprep.subr.mxu0 %v105
  %212 = vmatpush1.msra.mxu0 %v104
  %213 = vmatprep.subr.mxu0 %v109
  %214 = vmatpush1.msra.mxu0 %v108
  %215 = vmatprep.subr.mxu0 %v113
  %216 = vmatpush1.msra.mxu0 %v112
  %217 = vmatprep.subr.mxu0 %v117
  %218 = vmatpush1.msra.mxu0 %v116
  %219 = vmatprep.subr.mxu0 %v121
  %220 = vmatpush1.msra.mxu0 %v120
  %221 = vmatprep.subr.mxu0 %v125
  %222 = vmatpush1.msra.mxu0 %v124
  %223 = vmatprep.subr.mxu0 %v129
  %224 = vmatpush1.msra.mxu0 %v128
  %225 = vmatprep.subr.mxu0 %v133
  %226 = vmatpush1.msra.mxu0 %v132
  %227 = vmatprep.subr.mxu0 %v137
  %228 = vmatpush1.msra.mxu0 %v136
  %229 = vmatprep.subr.mxu0 %v141
  %230 = vmatpush1.msra.mxu0 %v140
  %231 = vmatprep.mubr.f32.mxu0 0.0
  %232 = vmatmul.mubr.f32.gmra.mrb[0].mxu0 %v145
  %v233 = vpop.f32.mrb[0].mxu0
  %v234 = vadd.f32 %v150, %v233
  %v235 = vpop.f32.mrb[0].mxu0
  %v236 = vadd.f32 %v154, %v235
  %237 = vdwg.mxu0
  %238 = vmatprep.subr.mxu0 %v19
  %239 = vmatpush1.msra.mxu0 %v18
  %240 = vmatprep.subr.mxu0 %v23
  %241 = vmatpush1.msra.mxu0 %v22
  %242 = vmatprep.subr.mxu0 %v27
  %243 = vmatpush1.msra.mxu0 %v26
  %244 = vmatprep.subr.mxu0 %v31
  %245 = vmatpush1.msra.mxu0 %v30
  %246 = vmatprep.subr.mxu0 %v35
  %247 = vmatpush1.msra.mxu0 %v34
  %248 = vmatprep.subr.mxu0 %v39
  %249 = vmatpush1.msra.mxu0 %v38
  %250 = vmatprep.subr.mxu0 %v43
  %251 = vmatpush1.msra.mxu0 %v42
  %252 = vmatprep.subr.mxu0 %v47
  %253 = vmatpush1.msra.mxu0 %v46
  %254 = vmatprep.subr.mxu0 %v51
  %255 = vmatpush1.msra.mxu0 %v50
  %256 = vmatprep.subr.mxu0 %v55
  %257 = vmatpush1.msra.mxu0 %v54
  %258 = vmatprep.subr.mxu0 %v59
  %259 = vmatpush1.msra.mxu0 %v58
  %260 = vmatprep.subr.mxu0 %v63
  %261 = vmatpush1.msra.mxu0 %v62
  %262 = vmatprep.subr.mxu0 %v67
  %263 = vmatpush1.msra.mxu0 %v66
  %264 = vmatprep.subr.mxu0 %v71
  %265 = vmatpush1.msra.mxu0 %v70
  %266 = vmatprep.subr.mxu0 %v75
  %267 = vmatpush1.msra.mxu0 %v74
  %268 = vmatprep.subr.mxu0 %v79
  %269 = vmatpush1.msra.mxu0 %v78
  %270 = vmatprep.subr.mxu0 %v83
  %271 = vmatpush1.msra.mxu0 %v82
  %272 = vmatprep.subr.mxu0 %v87
  %273 = vmatpush1.msra.mxu0 %v86
  %274 = vmatprep.subr.mxu0 %v91
  %275 = vmatpush1.msra.mxu0 %v90
  %276 = vmatprep.subr.mxu0 %v95
  %277 = vmatpush1.msra.mxu0 %v94
  %278 = vmatprep.subr.mxu0 %v99
  %279 = vmatpush1.msra.mxu0 %v98
  %280 = vmatprep.subr.mxu0 %v103
  %281 = vmatpush1.msra.mxu0 %v102
  %282 = vmatprep.subr.mxu0 %v107
  %283 = vmatpush1.msra.mxu0 %v106
  %284 = vmatprep.subr.mxu0 %v111
  %285 = vmatpush1.msra.mxu0 %v110
  %286 = vmatprep.subr.mxu0 %v115
  %287 = vmatpush1.msra.mxu0 %v114
  %288 = vmatprep.subr.mxu0 %v119
  %289 = vmatpush1.msra.mxu0 %v118
  %290 = vmatprep.subr.mxu0 %v123
  %291 = vmatpush1.msra.mxu0 %v122
  %292 = vmatprep.subr.mxu0 %v127
  %293 = vmatpush1.msra.mxu0 %v126
  %294 = vmatprep.subr.mxu0 %v131
  %295 = vmatpush1.msra.mxu0 %v130
  %296 = vmatprep.subr.mxu0 %v135
  %297 = vmatpush1.msra.mxu0 %v134
  %298 = vmatprep.subr.mxu0 %v139
  %299 = vmatpush1.msra.mxu0 %v138
  %300 = vmatprep.subr.mxu0 %v143
  %301 = vmatpush1.msra.mxu0 %v142
  %302 = vmatprep.mubr.f32.mxu0 0.0
  %303 = vmatmul.mubr.f32.gmra.mrb[0].mxu0 %v145
  %v304 = vpop.f32.mrb[0].mxu0
  %v305 = vadd.f32 %v158, %v304
  %v306 = vpop.f32.mrb[0].mxu0
  %v307 = vadd.f32 %v162, %v306
  %308 = vdwg.mxu0
  %v309 = vxor.u32 %v234, 2147483648
  %v310 = vmul.f32 %v309, 1.442695
  %v311 = vpow.pop %v310
  %v312 = vadd.f32 %v311, 1.0
  %v313 = vrcp.pop %v312
  %v314 = vmul.f32 1.0, %v313
  %v315 = vxor.u32 %v236, 2147483648
  %v316 = vmul.f32 %v315, 1.442695
  %v317 = vpow.pop %v316
  %v318 = vadd.f32 %v317, 1.0
  %v319 = vrcp.pop %v318
  %v320 = vmul.f32 1.0, %v319
  %v321 = vtanh.pop %v305
  %v322 = vxor.u32 %v307, 2147483648
  %v323 = vmul.f32 %v322, 1.442695
  %v324 = vpow.pop %v323
  %v325 = vadd.f32 %v324, 1.0
  %v326 = vrcp.pop %v325
  %v327 = vmul.f32 1.0, %v326
  %v328 = vmul.f32 %v320, 0.0
  %v329 = vmul.f32 %v314, %v321
  %v330 = vadd.f32 %v328, %v329
  %v331 = vtanh.pop %v330
  %v332 = vmul.f32 %v327, %v331
  %s333 = scalar_lea.vmem %s0, 8
  %v334 = vld [vmem:[%s333] sm:$0xff]
  %335 = vmatprep.subr.mxu0 %v17
  %336 = vmatpush1.msra.mxu0 %v16
  %337 = vmatprep.subr.mxu0 %v21
  %338 = vmatpush1.msra.mxu0 %v20
  %339 = vmatprep.subr.mxu0 %v25
  %340 = vmatpush1.msra.mxu0 %v24
  %341 = vmatprep.subr.mxu0 %v29
  %342 = vmatpush1.msra.mxu0 %v28
  %343 = vmatprep.subr.mxu0 %v33
  %344 = vmatpush1.msra.mxu0 %v32
  %345 = vmatprep.subr.mxu0 %v37
  %346 = vmatpush1.msra.mxu0 %v36
  %347 = vmatprep.subr.mxu0 %v41
  %348 = vmatpush1.msra.mxu0 %v40
  %349 = vmatprep.subr.mxu0 %v45
  %350 = vmatpush1.msra.mxu0 %v44
  %351 = vmatprep.subr.mxu0 %v49
  %352 = vmatpush1.msra.mxu0 %v48
  %353 = vmatprep.subr.mxu0 %v53
  %354 = vmatpush1.msra.mxu0 %v52
  %355 = vmatprep.subr.mxu0 %v57
  %356 = vmatpush1.msra.mxu0 %v56
  %357 = vmatprep.subr.mxu0 %v61
  %358 = vmatpush1.msra.mxu0 %v60
  %359 = vmatprep.subr.mxu0 %v65
  %360 = vmatpush1.msra.mxu0 %v64
  %361 = vmatprep.subr.mxu0 %v69
  %362 = vmatpush1.msra.mxu0 %v68
  %363 = vmatprep.subr.mxu0 %v73
  %364 = vmatpush1.msra.mxu0 %v72
  %365 = vmatprep.subr.mxu0 %v77
  %366 = vmatpush1.msra.mxu0 %v76
  %367 = vmatprep.subr.mxu0 %v81
  %368 = vmatpush1.msra.mxu0 %v80
  %369 = vmatprep.subr.mxu0 %v85
  %370 = vmatpush1.msra.mxu0 %v84
  %371 = vmatprep.subr.mxu0 %v89
  %372 = vmatpush1.msra.mxu0 %v88
  %373 = vmatprep.subr.mxu0 %v93
  %374 = vmatpush1.msra.mxu0 %v92
  %375 = vmatprep.subr.mxu0 %v97
  %376 = vmatpush1.msra.mxu0 %v96
  %377 = vmatprep.subr.mxu0 %v101
  %378 = vmatpush1.msra.mxu0 %v100
  %379 = vmatprep.subr.mxu0 %v105
  %380 = vmatpush1.msra.mxu0 %v104
  %381 = vmatprep.subr.mxu0 %v109
  %382 = vmatpush1.msra.mxu0 %v108
  %383 = vmatprep.subr.mxu0 %v113
  %384 = vmatpush1.msra.mxu0 %v112
  %385 = vmatprep.subr.mxu0 %v117
  %386 = vmatpush1.msra.mxu0 %v116
  %387 = vmatprep.subr.mxu0 %v121
  %388 = vmatpush1.msra.mxu0 %v120
  %389 = vmatprep.subr.mxu0 %v125
  %390 = vmatpush1.msra.mxu0 %v124
  %391 = vmatprep.subr.mxu0 %v129
  %392 = vmatpush1.msra.mxu0 %v128
  %393 = vmatprep.subr.mxu0 %v133
  %394 = vmatpush1.msra.mxu0 %v132
  %395 = vmatprep.subr.mxu0 %v137
  %396 = vmatpush1.msra.mxu0 %v136
  %397 = vmatprep.subr.mxu0 %v141
  %398 = vmatpush1.msra.mxu0 %v140
  %399 = vmatprep.mubr.f32.mxu0 %v332
  %400 = vmatmul.mubr.f32.gmra.mrb[0].mxu0 %v334
  %v401 = vpop.f32.mrb[0].mxu0
  %v402 = vadd.f32 %v150, %v401
  %v403 = vpop.f32.mrb[0].mxu0
  %v404 = vadd.f32 %v154, %v403
  %405 = vdwg.mxu0
  %406 = vmatprep.subr.mxu0 %v19
  %407 = vmatpush1.msra.mxu0 %v18
  %408 = vmatprep.subr.mxu0 %v23
  %409 = vmatpush1.msra.mxu0 %v22
  %410 = vmatprep.subr.mxu0 %v27
  %411 = vmatpush1.msra.mxu0 %v26
  %412 = vmatprep.subr.mxu0 %v31
  %413 = vmatpush1.msra.mxu0 %v30
  %414 = vmatprep.subr.mxu0 %v35
  %415 = vmatpush1.msra.mxu0 %v34
  %416 = vmatprep.subr.mxu0 %v39
  %417 = vmatpush1.msra.mxu0 %v38
  %418 = vmatprep.subr.mxu0 %v43
  %419 = vmatpush1.msra.mxu0 %v42
  %420 = vmatprep.subr.mxu0 %v47
  %421 = vmatpush1.msra.mxu0 %v46
  %422 = vmatprep.subr.mxu0 %v51
  %423 = vmatpush1.msra.mxu0 %v50
  %424 = vmatprep.subr.mxu0 %v55
  %425 = vmatpush1.msra.mxu0 %v54
  %426 = vmatprep.subr.mxu0 %v59
  %427 = vmatpush1.msra.mxu0 %v58
  %428 = vmatprep.subr.mxu0 %v63
  %429 = vmatpush1.msra.mxu0 %v62
  %430 = vmatprep.subr.mxu0 %v67
  %431 = vmatpush1.msra.mxu0 %v66
  %432 = vmatprep.subr.mxu0 %v71
  %433 = vmatpush1.msra.mxu0 %v70
  %434 = vmatprep.subr.mxu0 %v75
  %435 = vmatpush1.msra.mxu0 %v74
  %436 = vmatprep.subr.mxu0 %v79
  %437 = vmatpush1.msra.mxu0 %v78
  %438 = vmatprep.subr.mxu0 %v83
  %439 = vmatpush1.msra.mxu0 %v82
  %440 = vmatprep.subr.mxu0 %v87
  %441 = vmatpush1.msra.mxu0 %v86
  %442 = vmatprep.subr.mxu0 %v91
  %443 = vmatpush1.msra.mxu0 %v90
  %444 = vmatprep.subr.mxu0 %v95
  %445 = vmatpush1.msra.mxu0 %v94
  %446 = vmatprep.subr.mxu0 %v99
  %447 = vmatpush1.msra.mxu0 %v98
  %448 = vmatprep.subr.mxu0 %v103
  %449 = vmatpush1.msra.mxu0 %v102
  %450 = vmatprep.subr.mxu0 %v107
  %451 = vmatpush1.msra.mxu0 %v106
  %452 = vmatprep.subr.mxu0 %v111
  %453 = vmatpush1.msra.mxu0 %v110
  %454 = vmatprep.subr.mxu0 %v115
  %455 = vmatpush1.msra.mxu0 %v114
  %456 = vmatprep.subr.mxu0 %v119
  %457 = vmatpush1.msra.mxu0 %v118
  %458 = vmatprep.subr.mxu0 %v123
  %459 = vmatpush1.msra.mxu0 %v122
  %460 = vmatprep.subr.mxu0 %v127
  %461 = vmatpush1.msra.mxu0 %v126
  %462 = vmatprep.subr.mxu0 %v131
  %463 = vmatpush1.msra.mxu0 %v130
  %464 = vmatprep.subr.mxu0 %v135
  %465 = vmatpush1.msra.mxu0 %v134
  %466 = vmatprep.subr.mxu0 %v139
  %467 = vmatpush1.msra.mxu0 %v138
  %468 = vmatprep.subr.mxu0 %v143
  %469 = vmatpush1.msra.mxu0 %v142
  %470 = vmatprep.mubr.f32.mxu0 %v332
  %471 = vmatmul.mubr.f32.gmra.mrb[0].mxu0 %v334
  %v472 = vpop.f32.mrb[0].mxu0
  %v473 = vadd.f32 %v158, %v472
  %v474 = vpop.f32.mrb[0].mxu0
  %v475 = vadd.f32 %v162, %v474
  %476 = vdwg.mxu0
  %v477 = vxor.u32 %v402, 2147483648
  %v478 = vmul.f32 %v477, 1.442695
  %v479 = vpow.pop %v478
  %v480 = vadd.f32 %v479, 1.0
  %v481 = vrcp.pop %v480
  %v482 = vmul.f32 1.0, %v481
  %v483 = vxor.u32 %v404, 2147483648
  %v484 = vmul.f32 %v483, 1.442695
  %v485 = vpow.pop %v484
  %v486 = vadd.f32 %v485, 1.0
  %v487 = vrcp.pop %v486
  %v488 = vmul.f32 1.0, %v487
  %v489 = vtanh.pop %v473
  %v490 = vxor.u32 %v475, 2147483648
  %v491 = vmul.f32 %v490, 1.442695
  %v492 = vpow.pop %v491
  %v493 = vadd.f32 %v492, 1.0
  %v494 = vrcp.pop %v493
  %v495 = vmul.f32 1.0, %v494
  %v496 = vmul.f32 %v488, %v330
  %v497 = vmul.f32 %v482, %v489
  %v498 = vadd.f32 %v496, %v497
  %v499 = vtanh.pop %v498
  %v500 = vmul.f32 %v495, %v499
  %s501 = scalar_lea.vmem %s0, 16
  %v502 = vld [vmem:[%s501] sm:$0xff]
  %503 = vmatprep.subr.mxu0 %v17
  %504 = vmatpush1.msra.mxu0 %v16
  %505 = vmatprep.subr.mxu0 %v21
  %506 = vmatpush1.msra.mxu0 %v20
  %507 = vmatprep.subr.mxu0 %v25
  %508 = vmatpush1.msra.mxu0 %v24
  %509 = vmatprep.subr.mxu0 %v29
  %510 = vmatpush1.msra.mxu0 %v28
  %511 = vmatprep.subr.mxu0 %v33
  %512 = vmatpush1.msra.mxu0 %v32
  %513 = vmatprep.subr.mxu0 %v37
  %514 = vmatpush1.msra.mxu0 %v36
  %515 = vmatprep.subr.mxu0 %v41
  %516 = vmatpush1.msra.mxu0 %v40
  %517 = vmatprep.subr.mxu0 %v45
  %518 = vmatpush1.msra.mxu0 %v44
  %519 = vmatprep.subr.mxu0 %v49
  %520 = vmatpush1.msra.mxu0 %v48
  %521 = vmatprep.subr.mxu0 %v53
  %522 = vmatpush1.msra.mxu0 %v52
  %523 = vmatprep.subr.mxu0 %v57
  %524 = vmatpush1.msra.mxu0 %v56
  %525 = vmatprep.subr.mxu0 %v61
  %526 = vmatpush1.msra.mxu0 %v60
  %527 = vmatprep.subr.mxu0 %v65
  %528 = vmatpush1.msra.mxu0 %v64
  %529 = vmatprep.subr.mxu0 %v69
  %530 = vmatpush1.msra.mxu0 %v68
  %531 = vmatprep.subr.mxu0 %v73
  %532 = vmatpush1.msra.mxu0 %v72
  %533 = vmatprep.subr.mxu0 %v77
  %534 = vmatpush1.msra.mxu0 %v76
  %535 = vmatprep.subr.mxu0 %v81
  %536 = vmatpush1.msra.mxu0 %v80
  %537 = vmatprep.subr.mxu0 %v85
  %538 = vmatpush1.msra.mxu0 %v84
  %539 = vmatprep.subr.mxu0 %v89
  %540 = vmatpush1.msra.mxu0 %v88
  %541 = vmatprep.subr.mxu0 %v93
  %542 = vmatpush1.msra.mxu0 %v92
  %543 = vmatprep.subr.mxu0 %v97
  %544 = vmatpush1.msra.mxu0 %v96
  %545 = vmatprep.subr.mxu0 %v101
  %546 = vmatpush1.msra.mxu0 %v100
  %547 = vmatprep.subr.mxu0 %v105
  %548 = vmatpush1.msra.mxu0 %v104
  %549 = vmatprep.subr.mxu0 %v109
  %550 = vmatpush1.msra.mxu0 %v108
  %551 = vmatprep.subr.mxu0 %v113
  %552 = vmatpush1.msra.mxu0 %v112
  %553 = vmatprep.subr.mxu0 %v117
  %554 = vmatpush1.msra.mxu0 %v116
  %555 = vmatprep.subr.mxu0 %v121
  %556 = vmatpush1.msra.mxu0 %v120
  %557 = vmatprep.subr.mxu0 %v125
  %558 = vmatpush1.msra.mxu0 %v124
  %559 = vmatprep.subr.mxu0 %v129
  %560 = vmatpush1.msra.mxu0 %v128
  %561 = vmatprep.subr.mxu0 %v133
  %562 = vmatpush1.msra.mxu0 %v132
  %563 = vmatprep.subr.mxu0 %v137
  %564 = vmatpush1.msra.mxu0 %v136
  %565 = vmatprep.subr.mxu0 %v141
  %566 = vmatpush1.msra.mxu0 %v140
  %567 = vmatprep.mubr.f32.mxu0 %v500
  %568 = vmatmul.mubr.f32.gmra.mrb[0].mxu0 %v502
  %v569 = vpop.f32.mrb[0].mxu0
  %v570 = vadd.f32 %v150, %v569
  %v571 = vpop.f32.mrb[0].mxu0
  %v572 = vadd.f32 %v154, %v571
  %573 = vdwg.mxu0
  %574 = vmatprep.subr.mxu0 %v19
  %575 = vmatpush1.msra.mxu0 %v18
  %576 = vmatprep.subr.mxu0 %v23
  %577 = vmatpush1.msra.mxu0 %v22
  %578 = vmatprep.subr.mxu0 %v27
  %579 = vmatpush1.msra.mxu0 %v26
  %580 = vmatprep.subr.mxu0 %v31
  %581 = vmatpush1.msra.mxu0 %v30
  %582 = vmatprep.subr.mxu0 %v35
  %583 = vmatpush1.msra.mxu0 %v34
  %584 = vmatprep.subr.mxu0 %v39
  %585 = vmatpush1.msra.mxu0 %v38
  %586 = vmatprep.subr.mxu0 %v43
  %587 = vmatpush1.msra.mxu0 %v42
  %588 = vmatprep.subr.mxu0 %v47
  %589 = vmatpush1.msra.mxu0 %v46
  %590 = vmatprep.subr.mxu0 %v51
  %591 = vmatpush1.msra.mxu0 %v50
  %592 = vmatprep.subr.mxu0 %v55
  %593 = vmatpush1.msra.mxu0 %v54
  %594 = vmatprep.subr.mxu0 %v59
  %595 = vmatpush1.msra.mxu0 %v58
  %596 = vmatprep.subr.mxu0 %v63
  %597 = vmatpush1.msra.mxu0 %v62
  %598 = vmatprep.subr.mxu0 %v67
  %599 = vmatpush1.msra.mxu0 %v66
  %600 = vmatprep.subr.mxu0 %v71
  %601 = vmatpush1.msra.mxu0 %v70
  %602 = vmatprep.subr.mxu0 %v75
  %603 = vmatpush1.msra.mxu0 %v74
  %604 = vmatprep.subr.mxu0 %v79
  %605 = vmatpush1.msra.mxu0 %v78
  %606 = vmatprep.subr.mxu0 %v83
  %607 = vmatpush1.msra.mxu0 %v82
  %608 = vmatprep.subr.mxu0 %v87
  %609 = vmatpush1.msra.mxu0 %v86
  %610 = vmatprep.subr.mxu0 %v91
  %611 = vmatpush1.msra.mxu0 %v90
  %612 = vmatprep.subr.mxu0 %v95
  %613 = vmatpush1.msra.mxu0 %v94
  %614 = vmatprep.subr.mxu0 %v99
  %615 = vmatpush1.msra.mxu0 %v98
  %616 = vmatprep.subr.mxu0 %v103
  %617 = vmatpush1.msra.mxu0 %v102
  %618 = vmatprep.subr.mxu0 %v107
  %619 = vmatpush1.msra.mxu0 %v106
  %620 = vmatprep.subr.mxu0 %v111
  %621 = vmatpush1.msra.mxu0 %v110
  %622 = vmatprep.subr.mxu0 %v115
  %623 = vmatpush1.msra.mxu0 %v114
  %624 = vmatprep.subr.mxu0 %v119
  %625 = vmatpush1.msra.mxu0 %v118
  %626 = vmatprep.subr.mxu0 %v123
  %627 = vmatpush1.msra.mxu0 %v122
  %628 = vmatprep.subr.mxu0 %v127
  %629 = vmatpush1.msra.mxu0 %v126
  %630 = vmatprep.subr.mxu0 %v131
  %631 = vmatpush1.msra.mxu0 %v130
  %632 = vmatprep.subr.mxu0 %v135
  %633 = vmatpush1.msra.mxu0 %v134
  %634 = vmatprep.subr.mxu0 %v139
  %635 = vmatpush1.msra.mxu0 %v138
  %636 = vmatprep.subr.mxu0 %v143
  %637 = vmatpush1.msra.mxu0 %v142
  %638 = vmatprep.mubr.f32.mxu0 %v500
  %639 = vmatmul.mubr.f32.gmra.mrb[0].mxu0 %v502
  %v640 = vpop.f32.mrb[0].mxu0
  %v641 = vadd.f32 %v158, %v640
  %v642 = vpop.f32.mrb[0].mxu0
  %v643 = vadd.f32 %v162, %v642
  %644 = vdwg.mxu0
  %v645 = vxor.u32 %v570, 2147483648
  %v646 = vmul.f32 %v645, 1.442695
  %v647 = vpow.pop %v646
  %v648 = vadd.f32 %v647, 1.0
  %v649 = vrcp.pop %v648
  %v650 = vmul.f32 1.0, %v649
  %v651 = vxor.u32 %v572, 2147483648
  %v652 = vmul.f32 %v651, 1.442695
  %v653 = vpow.pop %v652
  %v654 = vadd.f32 %v653, 1.0
  %v655 = vrcp.pop %v654
  %v656 = vmul.f32 1.0, %v655
  %v657 = vtanh.pop %v641
  %v658 = vxor.u32 %v643, 2147483648
  %v659 = vmul.f32 %v658, 1.442695
  %v660 = vpow.pop %v659
  %v661 = vadd.f32 %v660, 1.0
  %v662 = vrcp.pop %v661
  %v663 = vmul.f32 1.0, %v662
  %v664 = vmul.f32 %v656, %v498
  %v665 = vmul.f32 %v650, %v657
  %v666 = vadd.f32 %v664, %v665
  %v667 = vtanh.pop %v666
  %v668 = vmul.f32 %v663, %v667
  %s669 = scalar_lea.vmem %s0, 24
  %v670 = vld [vmem:[%s669] sm:$0xff]
  %671 = vmatprep.subr.mxu0 %v17
  %672 = vmatpush1.msra.mxu0 %v16
  %673 = vmatprep.subr.mxu0 %v21
  %674 = vmatpush1.msra.mxu0 %v20
  %675 = vmatprep.subr.mxu0 %v25
  %676 = vmatpush1.msra.mxu0 %v24
  %677 = vmatprep.subr.mxu0 %v29
  %678 = vmatpush1.msra.mxu0 %v28
  %679 = vmatprep.subr.mxu0 %v33
  %680 = vmatpush1.msra.mxu0 %v32
  %681 = vmatprep.subr.mxu0 %v37
  %682 = vmatpush1.msra.mxu0 %v36
  %683 = vmatprep.subr.mxu0 %v41
  %684 = vmatpush1.msra.mxu0 %v40
  %685 = vmatprep.subr.mxu0 %v45
  %686 = vmatpush1.msra.mxu0 %v44
  %687 = vmatprep.subr.mxu0 %v49
  %688 = vmatpush1.msra.mxu0 %v48
  %689 = vmatprep.subr.mxu0 %v53
  %690 = vmatpush1.msra.mxu0 %v52
  %691 = vmatprep.subr.mxu0 %v57
  %692 = vmatpush1.msra.mxu0 %v56
  %693 = vmatprep.subr.mxu0 %v61
  %694 = vmatpush1.msra.mxu0 %v60
  %695 = vmatprep.subr.mxu0 %v65
  %696 = vmatpush1.msra.mxu0 %v64
  %697 = vmatprep.subr.mxu0 %v69
  %698 = vmatpush1.msra.mxu0 %v68
  %699 = vmatprep.subr.mxu0 %v73
  %700 = vmatpush1.msra.mxu0 %v72
  %701 = vmatprep.subr.mxu0 %v77
  %702 = vmatpush1.msra.mxu0 %v76
  %703 = vmatprep.subr.mxu0 %v81
  %704 = vmatpush1.msra.mxu0 %v80
  %705 = vmatprep.subr.mxu0 %v85
  %706 = vmatpush1.msra.mxu0 %v84
  %707 = vmatprep.subr.mxu0 %v89
  %708 = vmatpush1.msra.mxu0 %v88
  %709 = vmatprep.subr.mxu0 %v93
  %710 = vmatpush1.msra.mxu0 %v92
  %711 = vmatprep.subr.mxu0 %v97
  %712 = vmatpush1.msra.mxu0 %v96
  %713 = vmatprep.subr.mxu0 %v101
  %714 = vmatpush1.msra.mxu0 %v100
  %715 = vmatprep.subr.mxu0 %v105
  %716 = vmatpush1.msra.mxu0 %v104
  %717 = vmatprep.subr.mxu0 %v109
  %718 = vmatpush1.msra.mxu0 %v108
  %719 = vmatprep.subr.mxu0 %v113
  %720 = vmatpush1.msra.mxu0 %v112
  %721 = vmatprep.subr.mxu0 %v117
  %722 = vmatpush1.msra.mxu0 %v116
  %723 = vmatprep.subr.mxu0 %v121
  %724 = vmatpush1.msra.mxu0 %v120
  %725 = vmatprep.subr.mxu0 %v125
  %726 = vmatpush1.msra.mxu0 %v124
  %727 = vmatprep.subr.mxu0 %v129
  %728 = vmatpush1.msra.mxu0 %v128
  %729 = vmatprep.subr.mxu0 %v133
  %730 = vmatpush1.msra.mxu0 %v132
  %731 = vmatprep.subr.mxu0 %v137
  %732 = vmatpush1.msra.mxu0 %v136
  %733 = vmatprep.subr.mxu0 %v141
  %734 = vmatpush1.msra.mxu0 %v140
  %735 = vmatprep.mubr.f32.mxu0 %v668
  %736 = vmatmul.mubr.f32.gmra.mrb[0].mxu0 %v670
  %v737 = vpop.f32.mrb[0].mxu0
  %v738 = vadd.f32 %v150, %v737
  %v739 = vpop.f32.mrb[0].mxu0
  %v740 = vadd.f32 %v154, %v739
  %741 = vdwg.mxu0
  %742 = vmatprep.subr.mxu0 %v19
  %743 = vmatpush1.msra.mxu0 %v18
  %744 = vmatprep.subr.mxu0 %v23
  %745 = vmatpush1.msra.mxu0 %v22
  %746 = vmatprep.subr.mxu0 %v27
  %747 = vmatpush1.msra.mxu0 %v26
  %748 = vmatprep.subr.mxu0 %v31
  %749 = vmatpush1.msra.mxu0 %v30
  %750 = vmatprep.subr.mxu0 %v35
  %751 = vmatpush1.msra.mxu0 %v34
  %752 = vmatprep.subr.mxu0 %v39
  %753 = vmatpush1.msra.mxu0 %v38
  %754 = vmatprep.subr.mxu0 %v43
  %755 = vmatpush1.msra.mxu0 %v42
  %756 = vmatprep.subr.mxu0 %v47
  %757 = vmatpush1.msra.mxu0 %v46
  %758 = vmatprep.subr.mxu0 %v51
  %759 = vmatpush1.msra.mxu0 %v50
  %760 = vmatprep.subr.mxu0 %v55
  %761 = vmatpush1.msra.mxu0 %v54
  %762 = vmatprep.subr.mxu0 %v59
  %763 = vmatpush1.msra.mxu0 %v58
  %764 = vmatprep.subr.mxu0 %v63
  %765 = vmatpush1.msra.mxu0 %v62
  %766 = vmatprep.subr.mxu0 %v67
  %767 = vmatpush1.msra.mxu0 %v66
  %768 = vmatprep.subr.mxu0 %v71
  %769 = vmatpush1.msra.mxu0 %v70
  %770 = vmatprep.subr.mxu0 %v75
  %771 = vmatpush1.msra.mxu0 %v74
  %772 = vmatprep.subr.mxu0 %v79
  %773 = vmatpush1.msra.mxu0 %v78
  %774 = vmatprep.subr.mxu0 %v83
  %775 = vmatpush1.msra.mxu0 %v82
  %776 = vmatprep.subr.mxu0 %v87
  %777 = vmatpush1.msra.mxu0 %v86
  %778 = vmatprep.subr.mxu0 %v91
  %779 = vmatpush1.msra.mxu0 %v90
  %780 = vmatprep.subr.mxu0 %v95
  %781 = vmatpush1.msra.mxu0 %v94
  %782 = vmatprep.subr.mxu0 %v99
  %783 = vmatpush1.msra.mxu0 %v98
  %784 = vmatprep.subr.mxu0 %v103
  %785 = vmatpush1.msra.mxu0 %v102
  %786 = vmatprep.subr.mxu0 %v107
  %787 = vmatpush1.msra.mxu0 %v106
  %788 = vmatprep.subr.mxu0 %v111
  %789 = vmatpush1.msra.mxu0 %v110
  %790 = vmatprep.subr.mxu0 %v115
  %791 = vmatpush1.msra.mxu0 %v114
  %792 = vmatprep.subr.mxu0 %v119
  %793 = vmatpush1.msra.mxu0 %v118
  %794 = vmatprep.subr.mxu0 %v123
  %795 = vmatpush1.msra.mxu0 %v122
  %796 = vmatprep.subr.mxu0 %v127
  %797 = vmatpush1.msra.mxu0 %v126
  %798 = vmatprep.subr.mxu0 %v131
  %799 = vmatpush1.msra.mxu0 %v130
  %800 = vmatprep.subr.mxu0 %v135
  %801 = vmatpush1.msra.mxu0 %v134
  %802 = vmatprep.subr.mxu0 %v139
  %803 = vmatpush1.msra.mxu0 %v138
  %804 = vmatprep.subr.mxu0 %v143
  %805 = vmatpush1.msra.mxu0 %v142
  %806 = vmatprep.mubr.f32.mxu0 %v668
  %807 = vmatmul.mubr.f32.gmra.mrb[0].mxu0 %v670
  %v808 = vpop.f32.mrb[0].mxu0
  %v809 = vadd.f32 %v158, %v808
  %v810 = vpop.f32.mrb[0].mxu0
  %v811 = vadd.f32 %v162, %v810
  %812 = vdwg.mxu0
  %v813 = vxor.u32 %v738, 2147483648
  %v814 = vmul.f32 %v813, 1.442695
  %v815 = vpow.pop %v814
  %v816 = vadd.f32 %v815, 1.0
  %v817 = vrcp.pop %v816
  %v818 = vmul.f32 1.0, %v817
  %v819 = vxor.u32 %v740, 2147483648
  %v820 = vmul.f32 %v819, 1.442695
  %v821 = vpow.pop %v820
  %v822 = vadd.f32 %v821, 1.0
  %v823 = vrcp.pop %v822
  %v824 = vmul.f32 1.0, %v823
  %v825 = vtanh.pop %v809
  %v826 = vxor.u32 %v811, 2147483648
  %v827 = vmul.f32 %v826, 1.442695
  %v828 = vpow.pop %v827
  %v829 = vadd.f32 %v828, 1.0
  %v830 = vrcp.pop %v829
  %v831 = vmul.f32 1.0, %v830
  %v832 = vmul.f32 %v824, %v666
  %v833 = vmul.f32 %v818, %v825
  %v834 = vadd.f32 %v832, %v833
  %v835 = vtanh.pop %v834
  %v836 = vmul.f32 %v831, %v835
  %s837 = scalar_lea.vmem %s0, 32
  %v838 = vld [vmem:[%s837] sm:$0xff]
  %839 = vmatprep.subr.mxu0 %v17
  %840 = vmatpush1.msra.mxu0 %v16
  %841 = vmatprep.subr.mxu0 %v21
  %842 = vmatpush1.msra.mxu0 %v20
  %843 = vmatprep.subr.mxu0 %v25
  %844 = vmatpush1.msra.mxu0 %v24
  %845 = vmatprep.subr.mxu0 %v29
  %846 = vmatpush1.msra.mxu0 %v28
  %847 = vmatprep.subr.mxu0 %v33
  %848 = vmatpush1.msra.mxu0 %v32
  %849 = vmatprep.subr.mxu0 %v37
  %850 = vmatpush1.msra.mxu0 %v36
  %851 = vmatprep.subr.mxu0 %v41
  %852 = vmatpush1.msra.mxu0 %v40
  %853 = vmatprep.subr.mxu0 %v45
  %854 = vmatpush1.msra.mxu0 %v44
  %855 = vmatprep.subr.mxu0 %v49
  %856 = vmatpush1.msra.mxu0 %v48
  %857 = vmatprep.subr.mxu0 %v53
  %858 = vmatpush1.msra.mxu0 %v52
  %859 = vmatprep.subr.mxu0 %v57
  %860 = vmatpush1.msra.mxu0 %v56
  %861 = vmatprep.subr.mxu0 %v61
  %862 = vmatpush1.msra.mxu0 %v60
  %863 = vmatprep.subr.mxu0 %v65
  %864 = vmatpush1.msra.mxu0 %v64
  %865 = vmatprep.subr.mxu0 %v69
  %866 = vmatpush1.msra.mxu0 %v68
  %867 = vmatprep.subr.mxu0 %v73
  %868 = vmatpush1.msra.mxu0 %v72
  %869 = vmatprep.subr.mxu0 %v77
  %870 = vmatpush1.msra.mxu0 %v76
  %871 = vmatprep.subr.mxu0 %v81
  %872 = vmatpush1.msra.mxu0 %v80
  %873 = vmatprep.subr.mxu0 %v85
  %874 = vmatpush1.msra.mxu0 %v84
  %875 = vmatprep.subr.mxu0 %v89
  %876 = vmatpush1.msra.mxu0 %v88
  %877 = vmatprep.subr.mxu0 %v93
  %878 = vmatpush1.msra.mxu0 %v92
  %879 = vmatprep.subr.mxu0 %v97
  %880 = vmatpush1.msra.mxu0 %v96
  %881 = vmatprep.subr.mxu0 %v101
  %882 = vmatpush1.msra.mxu0 %v100
  %883 = vmatprep.subr.mxu0 %v105
  %884 = vmatpush1.msra.mxu0 %v104
  %885 = vmatprep.subr.mxu0 %v109
  %886 = vmatpush1.msra.mxu0 %v108
  %887 = vmatprep.subr.mxu0 %v113
  %888 = vmatpush1.msra.mxu0 %v112
  %889 = vmatprep.subr.mxu0 %v117
  %890 = vmatpush1.msra.mxu0 %v116
  %891 = vmatprep.subr.mxu0 %v121
  %892 = vmatpush1.msra.mxu0 %v120
  %893 = vmatprep.subr.mxu0 %v125
  %894 = vmatpush1.msra.mxu0 %v124
  %895 = vmatprep.subr.mxu0 %v129
  %896 = vmatpush1.msra.mxu0 %v128
  %897 = vmatprep.subr.mxu0 %v133
  %898 = vmatpush1.msra.mxu0 %v132
  %899 = vmatprep.subr.mxu0 %v137
  %900 = vmatpush1.msra.mxu0 %v136
  %901 = vmatprep.subr.mxu0 %v141
  %902 = vmatpush1.msra.mxu0 %v140
  %903 = vmatprep.mubr.f32.mxu0 %v836
  %904 = vmatmul.mubr.f32.gmra.mrb[0].mxu0 %v838
  %v905 = vpop.f32.mrb[0].mxu0
  %v906 = vadd.f32 %v150, %v905
  %v907 = vpop.f32.mrb[0].mxu0
  %v908 = vadd.f32 %v154, %v907
  %909 = vdwg.mxu0
  %910 = vmatprep.subr.mxu0 %v19
  %911 = vmatpush1.msra.mxu0 %v18
  %912 = vmatprep.subr.mxu0 %v23
  %913 = vmatpush1.msra.mxu0 %v22
  %914 = vmatprep.subr.mxu0 %v27
  %915 = vmatpush1.msra.mxu0 %v26
  %916 = vmatprep.subr.mxu0 %v31
  %917 = vmatpush1.msra.mxu0 %v30
  %918 = vmatprep.subr.mxu0 %v35
  %919 = vmatpush1.msra.mxu0 %v34
  %920 = vmatprep.subr.mxu0 %v39
  %921 = vmatpush1.msra.mxu0 %v38
  %922 = vmatprep.subr.mxu0 %v43
  %923 = vmatpush1.msra.mxu0 %v42
  %924 = vmatprep.subr.mxu0 %v47
  %925 = vmatpush1.msra.mxu0 %v46
  %926 = vmatprep.subr.mxu0 %v51
  %927 = vmatpush1.msra.mxu0 %v50
  %928 = vmatprep.subr.mxu0 %v55
  %929 = vmatpush1.msra.mxu0 %v54
  %930 = vmatprep.subr.mxu0 %v59
  %931 = vmatpush1.msra.mxu0 %v58
  %932 = vmatprep.subr.mxu0 %v63
  %933 = vmatpush1.msra.mxu0 %v62
  %934 = vmatprep.subr.mxu0 %v67
  %935 = vmatpush1.msra.mxu0 %v66
  %936 = vmatprep.subr.mxu0 %v71
  %937 = vmatpush1.msra.mxu0 %v70
  %938 = vmatprep.subr.mxu0 %v75
  %939 = vmatpush1.msra.mxu0 %v74
  %940 = vmatprep.subr.mxu0 %v79
  %941 = vmatpush1.msra.mxu0 %v78
  %942 = vmatprep.subr.mxu0 %v83
  %943 = vmatpush1.msra.mxu0 %v82
  %944 = vmatprep.subr.mxu0 %v87
  %945 = vmatpush1.msra.mxu0 %v86
  %946 = vmatprep.subr.mxu0 %v91
  %947 = vmatpush1.msra.mxu0 %v90
  %948 = vmatprep.subr.mxu0 %v95
  %949 = vmatpush1.msra.mxu0 %v94
  %950 = vmatprep.subr.mxu0 %v99
  %951 = vmatpush1.msra.mxu0 %v98
  %952 = vmatprep.subr.mxu0 %v103
  %953 = vmatpush1.msra.mxu0 %v102
  %954 = vmatprep.subr.mxu0 %v107
  %955 = vmatpush1.msra.mxu0 %v106
  %956 = vmatprep.subr.mxu0 %v111
  %957 = vmatpush1.msra.mxu0 %v110
  %958 = vmatprep.subr.mxu0 %v115
  %959 = vmatpush1.msra.mxu0 %v114
  %960 = vmatprep.subr.mxu0 %v119
  %961 = vmatpush1.msra.mxu0 %v118
  %962 = vmatprep.subr.mxu0 %v123
  %963 = vmatpush1.msra.mxu0 %v122
  %964 = vmatprep.subr.mxu0 %v127
  %965 = vmatpush1.msra.mxu0 %v126
  %966 = vmatprep.subr.mxu0 %v131
  %967 = vmatpush1.msra.mxu0 %v130
  %968 = vmatprep.subr.mxu0 %v135
  %969 = vmatpush1.msra.mxu0 %v134
  %970 = vmatprep.subr.mxu0 %v139
  %971 = vmatpush1.msra.mxu0 %v138
  %972 = vmatprep.subr.mxu0 %v143
  %973 = vmatpush1.msra.mxu0 %v142
  %974 = vmatprep.mubr.f32.mxu0 %v836
  %975 = vmatmul.mubr.f32.gmra.mrb[0].mxu0 %v838
  %v976 = vpop.f32.mrb[0].mxu0
  %v977 = vadd.f32 %v158, %v976
  %v978 = vpop.f32.mrb[0].mxu0
  %v979 = vadd.f32 %v162, %v978
  %980 = vdwg.mxu0
  %v981 = vxor.u32 %v906, 2147483648
  %v982 = vmul.f32 %v981, 1.442695
  %v983 = vpow.pop %v982
  %v984 = vadd.f32 %v983, 1.0
  %v985 = vrcp.pop %v984
  %v986 = vmul.f32 1.0, %v985
  %v987 = vxor.u32 %v908, 2147483648
  %v988 = vmul.f32 %v987, 1.442695
  %v989 = vpow.pop %v988
  %v990 = vadd.f32 %v989, 1.0
  %v991 = vrcp.pop %v990
  %v992 = vmul.f32 1.0, %v991
  %v993 = vtanh.pop %v977
  %v994 = vxor.u32 %v979, 2147483648
  %v995 = vmul.f32 %v994, 1.442695
  %v996 = vpow.pop %v995
  %v997 = vadd.f32 %v996, 1.0
  %v998 = vrcp.pop %v997
  %v999 = vmul.f32 1.0, %v998
  %v1000 = vmul.f32 %v992, %v834
  %v1001 = vmul.f32 %v986, %v993
  %v1002 = vadd.f32 %v1000, %v1001
  %v1003 = vtanh.pop %v1002
  %v1004 = vmul.f32 %v999, %v1003
  %s1005 = scalar_lea.vmem %s0, 40
  %v1006 = vld [vmem:[%s1005] sm:$0xff]
  %1007 = vmatprep.subr.mxu0 %v17
  %1008 = vmatpush1.msra.mxu0 %v16
  %1009 = vmatprep.subr.mxu0 %v21
  %1010 = vmatpush1.msra.mxu0 %v20
  %1011 = vmatprep.subr.mxu0 %v25
  %1012 = vmatpush1.msra.mxu0 %v24
  %1013 = vmatprep.subr.mxu0 %v29
  %1014 = vmatpush1.msra.mxu0 %v28
  %1015 = vmatprep.subr.mxu0 %v33
  %1016 = vmatpush1.msra.mxu0 %v32
  %1017 = vmatprep.subr.mxu0 %v37
  %1018 = vmatpush1.msra.mxu0 %v36
  %1019 = vmatprep.subr.mxu0 %v41
  %1020 = vmatpush1.msra.mxu0 %v40
  %1021 = vmatprep.subr.mxu0 %v45
  %1022 = vmatpush1.msra.mxu0 %v44
  %1023 = vmatprep.subr.mxu0 %v49
  %1024 = vmatpush1.msra.mxu0 %v48
  %1025 = vmatprep.subr.mxu0 %v53
  %1026 = vmatpush1.msra.mxu0 %v52
  %1027 = vmatprep.subr.mxu0 %v57
  %1028 = vmatpush1.msra.mxu0 %v56
  %1029 = vmatprep.subr.mxu0 %v61
  %1030 = vmatpush1.msra.mxu0 %v60
  %1031 = vmatprep.subr.mxu0 %v65
  %1032 = vmatpush1.msra.mxu0 %v64
  %1033 = vmatprep.subr.mxu0 %v69
  %1034 = vmatpush1.msra.mxu0 %v68
  %1035 = vmatprep.subr.mxu0 %v73
  %1036 = vmatpush1.msra.mxu0 %v72
  %1037 = vmatprep.subr.mxu0 %v77
  %1038 = vmatpush1.msra.mxu0 %v76
  %1039 = vmatprep.subr.mxu0 %v81
  %1040 = vmatpush1.msra.mxu0 %v80
  %1041 = vmatprep.subr.mxu0 %v85
  %1042 = vmatpush1.msra.mxu0 %v84
  %1043 = vmatprep.subr.mxu0 %v89
  %1044 = vmatpush1.msra.mxu0 %v88
  %1045 = vmatprep.subr.mxu0 %v93
  %1046 = vmatpush1.msra.mxu0 %v92
  %1047 = vmatprep.subr.mxu0 %v97
  %1048 = vmatpush1.msra.mxu0 %v96
  %1049 = vmatprep.subr.mxu0 %v101
  %1050 = vmatpush1.msra.mxu0 %v100
  %1051 = vmatprep.subr.mxu0 %v105
  %1052 = vmatpush1.msra.mxu0 %v104
  %1053 = vmatprep.subr.mxu0 %v109
  %1054 = vmatpush1.msra.mxu0 %v108
  %1055 = vmatprep.subr.mxu0 %v113
  %1056 = vmatpush1.msra.mxu0 %v112
  %1057 = vmatprep.subr.mxu0 %v117
  %1058 = vmatpush1.msra.mxu0 %v116
  %1059 = vmatprep.subr.mxu0 %v121
  %1060 = vmatpush1.msra.mxu0 %v120
  %1061 = vmatprep.subr.mxu0 %v125
  %1062 = vmatpush1.msra.mxu0 %v124
  %1063 = vmatprep.subr.mxu0 %v129
  %1064 = vmatpush1.msra.mxu0 %v128
  %1065 = vmatprep.subr.mxu0 %v133
  %1066 = vmatpush1.msra.mxu0 %v132
  %1067 = vmatprep.subr.mxu0 %v137
  %1068 = vmatpush1.msra.mxu0 %v136
  %1069 = vmatprep.subr.mxu0 %v141
  %1070 = vmatpush1.msra.mxu0 %v140
  %1071 = vmatprep.mubr.f32.mxu0 %v1004
  %1072 = vmatmul.mubr.f32.gmra.mrb[0].mxu0 %v1006
  %v1073 = vpop.f32.mrb[0].mxu0
  %v1074 = vadd.f32 %v150, %v1073
  %v1075 = vpop.f32.mrb[0].mxu0
  %v1076 = vadd.f32 %v154, %v1075
  %1077 = vdwg.mxu0
  %1078 = vmatprep.subr.mxu0 %v19
  %1079 = vmatpush1.msra.mxu0 %v18
  %1080 = vmatprep.subr.mxu0 %v23
  %1081 = vmatpush1.msra.mxu0 %v22
  %1082 = vmatprep.subr.mxu0 %v27
  %1083 = vmatpush1.msra.mxu0 %v26
  %1084 = vmatprep.subr.mxu0 %v31
  %1085 = vmatpush1.msra.mxu0 %v30
  %1086 = vmatprep.subr.mxu0 %v35
  %1087 = vmatpush1.msra.mxu0 %v34
  %1088 = vmatprep.subr.mxu0 %v39
  %1089 = vmatpush1.msra.mxu0 %v38
  %1090 = vmatprep.subr.mxu0 %v43
  %1091 = vmatpush1.msra.mxu0 %v42
  %1092 = vmatprep.subr.mxu0 %v47
  %1093 = vmatpush1.msra.mxu0 %v46
  %1094 = vmatprep.subr.mxu0 %v51
  %1095 = vmatpush1.msra.mxu0 %v50
  %1096 = vmatprep.subr.mxu0 %v55
  %1097 = vmatpush1.msra.mxu0 %v54
  %1098 = vmatprep.subr.mxu0 %v59
  %1099 = vmatpush1.msra.mxu0 %v58
  %1100 = vmatprep.subr.mxu0 %v63
  %1101 = vmatpush1.msra.mxu0 %v62
  %1102 = vmatprep.subr.mxu0 %v67
  %1103 = vmatpush1.msra.mxu0 %v66
  %1104 = vmatprep.subr.mxu0 %v71
  %1105 = vmatpush1.msra.mxu0 %v70
  %1106 = vmatprep.subr.mxu0 %v75
  %1107 = vmatpush1.msra.mxu0 %v74
  %1108 = vmatprep.subr.mxu0 %v79
  %1109 = vmatpush1.msra.mxu0 %v78
  %1110 = vmatprep.subr.mxu0 %v83
  %1111 = vmatpush1.msra.mxu0 %v82
  %1112 = vmatprep.subr.mxu0 %v87
  %1113 = vmatpush1.msra.mxu0 %v86
  %1114 = vmatprep.subr.mxu0 %v91
  %1115 = vmatpush1.msra.mxu0 %v90
  %1116 = vmatprep.subr.mxu0 %v95
  %1117 = vmatpush1.msra.mxu0 %v94
  %1118 = vmatprep.subr.mxu0 %v99
  %1119 = vmatpush1.msra.mxu0 %v98
  %1120 = vmatprep.subr.mxu0 %v103
  %1121 = vmatpush1.msra.mxu0 %v102
  %1122 = vmatprep.subr.mxu0 %v107
  %1123 = vmatpush1.msra.mxu0 %v106
  %1124 = vmatprep.subr.mxu0 %v111
  %1125 = vmatpush1.msra.mxu0 %v110
  %1126 = vmatprep.subr.mxu0 %v115
  %1127 = vmatpush1.msra.mxu0 %v114
  %1128 = vmatprep.subr.mxu0 %v119
  %1129 = vmatpush1.msra.mxu0 %v118
  %1130 = vmatprep.subr.mxu0 %v123
  %1131 = vmatpush1.msra.mxu0 %v122
  %1132 = vmatprep.subr.mxu0 %v127
  %1133 = vmatpush1.msra.mxu0 %v126
  %1134 = vmatprep.subr.mxu0 %v131
  %1135 = vmatpush1.msra.mxu0 %v130
  %1136 = vmatprep.subr.mxu0 %v135
  %1137 = vmatpush1.msra.mxu0 %v134
  %1138 = vmatprep.subr.mxu0 %v139
  %1139 = vmatpush1.msra.mxu0 %v138
  %1140 = vmatprep.subr.mxu0 %v143
  %1141 = vmatpush1.msra.mxu0 %v142
  %1142 = vmatprep.mubr.f32.mxu0 %v1004
  %1143 = vmatmul.mubr.f32.gmra.mrb[0].mxu0 %v1006
  %v1144 = vpop.f32.mrb[0].mxu0
  %v1145 = vadd.f32 %v158, %v1144
  %v1146 = vpop.f32.mrb[0].mxu0
  %v1147 = vadd.f32 %v162, %v1146
  %1148 = vdwg.mxu0
  %v1149 = vxor.u32 %v1074, 2147483648
  %v1150 = vmul.f32 %v1149, 1.442695
  %v1151 = vpow.pop %v1150
  %v1152 = vadd.f32 %v1151, 1.0
  %v1153 = vrcp.pop %v1152
  %v1154 = vmul.f32 1.0, %v1153
  %v1155 = vxor.u32 %v1076, 2147483648
  %v1156 = vmul.f32 %v1155, 1.442695
  %v1157 = vpow.pop %v1156
  %v1158 = vadd.f32 %v1157, 1.0
  %v1159 = vrcp.pop %v1158
  %v1160 = vmul.f32 1.0, %v1159
  %v1161 = vtanh.pop %v1145
  %v1162 = vxor.u32 %v1147, 2147483648
  %v1163 = vmul.f32 %v1162, 1.442695
  %v1164 = vpow.pop %v1163
  %v1165 = vadd.f32 %v1164, 1.0
  %v1166 = vrcp.pop %v1165
  %v1167 = vmul.f32 1.0, %v1166
  %v1168 = vmul.f32 %v1160, %v1002
  %v1169 = vmul.f32 %v1154, %v1161
  %v1170 = vadd.f32 %v1168, %v1169
  %v1171 = vtanh.pop %v1170
  %v1172 = vmul.f32 %v1167, %v1171
  %s1173 = scalar_lea.vmem %s0, 48
  %v1174 = vld [vmem:[%s1173] sm:$0xff]
  %1175 = vmatprep.subr.mxu0 %v17
  %1176 = vmatpush1.msra.mxu0 %v16
  %1177 = vmatprep.subr.mxu0 %v21
  %1178 = vmatpush1.msra.mxu0 %v20
  %1179 = vmatprep.subr.mxu0 %v25
  %1180 = vmatpush1.msra.mxu0 %v24
  %1181 = vmatprep.subr.mxu0 %v29
  %1182 = vmatpush1.msra.mxu0 %v28
  %1183 = vmatprep.subr.mxu0 %v33
  %1184 = vmatpush1.msra.mxu0 %v32
  %1185 = vmatprep.subr.mxu0 %v37
  %1186 = vmatpush1.msra.mxu0 %v36
  %1187 = vmatprep.subr.mxu0 %v41
  %1188 = vmatpush1.msra.mxu0 %v40
  %1189 = vmatprep.subr.mxu0 %v45
  %1190 = vmatpush1.msra.mxu0 %v44
  %1191 = vmatprep.subr.mxu0 %v49
  %1192 = vmatpush1.msra.mxu0 %v48
  %1193 = vmatprep.subr.mxu0 %v53
  %1194 = vmatpush1.msra.mxu0 %v52
  %1195 = vmatprep.subr.mxu0 %v57
  %1196 = vmatpush1.msra.mxu0 %v56
  %1197 = vmatprep.subr.mxu0 %v61
  %1198 = vmatpush1.msra.mxu0 %v60
  %1199 = vmatprep.subr.mxu0 %v65
  %1200 = vmatpush1.msra.mxu0 %v64
  %1201 = vmatprep.subr.mxu0 %v69
  %1202 = vmatpush1.msra.mxu0 %v68
  %1203 = vmatprep.subr.mxu0 %v73
  %1204 = vmatpush1.msra.mxu0 %v72
  %1205 = vmatprep.subr.mxu0 %v77
  %1206 = vmatpush1.msra.mxu0 %v76
  %1207 = vmatprep.subr.mxu0 %v81
  %1208 = vmatpush1.msra.mxu0 %v80
  %1209 = vmatprep.subr.mxu0 %v85
  %1210 = vmatpush1.msra.mxu0 %v84
  %1211 = vmatprep.subr.mxu0 %v89
  %1212 = vmatpush1.msra.mxu0 %v88
  %1213 = vmatprep.subr.mxu0 %v93
  %1214 = vmatpush1.msra.mxu0 %v92
  %1215 = vmatprep.subr.mxu0 %v97
  %1216 = vmatpush1.msra.mxu0 %v96
  %1217 = vmatprep.subr.mxu0 %v101
  %1218 = vmatpush1.msra.mxu0 %v100
  %1219 = vmatprep.subr.mxu0 %v105
  %1220 = vmatpush1.msra.mxu0 %v104
  %1221 = vmatprep.subr.mxu0 %v109
  %1222 = vmatpush1.msra.mxu0 %v108
  %1223 = vmatprep.subr.mxu0 %v113
  %1224 = vmatpush1.msra.mxu0 %v112
  %1225 = vmatprep.subr.mxu0 %v117
  %1226 = vmatpush1.msra.mxu0 %v116
  %1227 = vmatprep.subr.mxu0 %v121
  %1228 = vmatpush1.msra.mxu0 %v120
  %1229 = vmatprep.subr.mxu0 %v125
  %1230 = vmatpush1.msra.mxu0 %v124
  %1231 = vmatprep.subr.mxu0 %v129
  %1232 = vmatpush1.msra.mxu0 %v128
  %1233 = vmatprep.subr.mxu0 %v133
  %1234 = vmatpush1.msra.mxu0 %v132
  %1235 = vmatprep.subr.mxu0 %v137
  %1236 = vmatpush1.msra.mxu0 %v136
  %1237 = vmatprep.subr.mxu0 %v141
  %1238 = vmatpush1.msra.mxu0 %v140
  %1239 = vmatprep.mubr.f32.mxu0 %v1172
  %1240 = vmatmul.mubr.f32.gmra.mrb[0].mxu0 %v1174
  %v1241 = vpop.f32.mrb[0].mxu0
  %v1242 = vadd.f32 %v150, %v1241
  %v1243 = vpop.f32.mrb[0].mxu0
  %v1244 = vadd.f32 %v154, %v1243
  %1245 = vdwg.mxu0
  %1246 = vmatprep.subr.mxu0 %v19
  %1247 = vmatpush1.msra.mxu0 %v18
  %1248 = vmatprep.subr.mxu0 %v23
  %1249 = vmatpush1.msra.mxu0 %v22
  %1250 = vmatprep.subr.mxu0 %v27
  %1251 = vmatpush1.msra.mxu0 %v26
  %1252 = vmatprep.subr.mxu0 %v31
  %1253 = vmatpush1.msra.mxu0 %v30
  %1254 = vmatprep.subr.mxu0 %v35
  %1255 = vmatpush1.msra.mxu0 %v34
  %1256 = vmatprep.subr.mxu0 %v39
  %1257 = vmatpush1.msra.mxu0 %v38
  %1258 = vmatprep.subr.mxu0 %v43
  %1259 = vmatpush1.msra.mxu0 %v42
  %1260 = vmatprep.subr.mxu0 %v47
  %1261 = vmatpush1.msra.mxu0 %v46
  %1262 = vmatprep.subr.mxu0 %v51
  %1263 = vmatpush1.msra.mxu0 %v50
  %1264 = vmatprep.subr.mxu0 %v55
  %1265 = vmatpush1.msra.mxu0 %v54
  %1266 = vmatprep.subr.mxu0 %v59
  %1267 = vmatpush1.msra.mxu0 %v58
  %1268 = vmatprep.subr.mxu0 %v63
  %1269 = vmatpush1.msra.mxu0 %v62
  %1270 = vmatprep.subr.mxu0 %v67
  %1271 = vmatpush1.msra.mxu0 %v66
  %1272 = vmatprep.subr.mxu0 %v71
  %1273 = vmatpush1.msra.mxu0 %v70
  %1274 = vmatprep.subr.mxu0 %v75
  %1275 = vmatpush1.msra.mxu0 %v74
  %1276 = vmatprep.subr.mxu0 %v79
  %1277 = vmatpush1.msra.mxu0 %v78
  %1278 = vmatprep.subr.mxu0 %v83
  %1279 = vmatpush1.msra.mxu0 %v82
  %1280 = vmatprep.subr.mxu0 %v87
  %1281 = vmatpush1.msra.mxu0 %v86
  %1282 = vmatprep.subr.mxu0 %v91
  %1283 = vmatpush1.msra.mxu0 %v90
  %1284 = vmatprep.subr.mxu0 %v95
  %1285 = vmatpush1.msra.mxu0 %v94
  %1286 = vmatprep.subr.mxu0 %v99
  %1287 = vmatpush1.msra.mxu0 %v98
  %1288 = vmatprep.subr.mxu0 %v103
  %1289 = vmatpush1.msra.mxu0 %v102
  %1290 = vmatprep.subr.mxu0 %v107
  %1291 = vmatpush1.msra.mxu0 %v106
  %1292 = vmatprep.subr.mxu0 %v111
  %1293 = vmatpush1.msra.mxu0 %v110
  %1294 = vmatprep.subr.mxu0 %v115
  %1295 = vmatpush1.msra.mxu0 %v114
  %1296 = vmatprep.subr.mxu0 %v119
  %1297 = vmatpush1.msra.mxu0 %v118
  %1298 = vmatprep.subr.mxu0 %v123
  %1299 = vmatpush1.msra.mxu0 %v122
  %1300 = vmatprep.subr.mxu0 %v127
  %1301 = vmatpush1.msra.mxu0 %v126
  %1302 = vmatprep.subr.mxu0 %v131
  %1303 = vmatpush1.msra.mxu0 %v130
  %1304 = vmatprep.subr.mxu0 %v135
  %1305 = vmatpush1.msra.mxu0 %v134
  %1306 = vmatprep.subr.mxu0 %v139
  %1307 = vmatpush1.msra.mxu0 %v138
  %1308 = vmatprep.subr.mxu0 %v143
  %1309 = vmatpush1.msra.mxu0 %v142
  %1310 = vmatprep.mubr.f32.mxu0 %v1172
  %1311 = vmatmul.mubr.f32.gmra.mrb[0].mxu0 %v1174
  %v1312 = vpop.f32.mrb[0].mxu0
  %v1313 = vadd.f32 %v158, %v1312
  %v1314 = vpop.f32.mrb[0].mxu0
  %v1315 = vadd.f32 %v162, %v1314
  %1316 = vdwg.mxu0
  %v1317 = vxor.u32 %v1242, 2147483648
  %v1318 = vmul.f32 %v1317, 1.442695
  %v1319 = vpow.pop %v1318
  %v1320 = vadd.f32 %v1319, 1.0
  %v1321 = vrcp.pop %v1320
  %v1322 = vmul.f32 1.0, %v1321
  %v1323 = vxor.u32 %v1244, 2147483648
  %v1324 = vmul.f32 %v1323, 1.442695
  %v1325 = vpow.pop %v1324
  %v1326 = vadd.f32 %v1325, 1.0
  %v1327 = vrcp.pop %v1326
  %v1328 = vmul.f32 1.0, %v1327
  %v1329 = vtanh.pop %v1313
  %v1330 = vxor.u32 %v1315, 2147483648
  %v1331 = vmul.f32 %v1330, 1.442695
  %v1332 = vpow.pop %v1331
  %v1333 = vadd.f32 %v1332, 1.0
  %v1334 = vrcp.pop %v1333
  %v1335 = vmul.f32 1.0, %v1334
  %v1336 = vmul.f32 %v1328, %v1170
  %v1337 = vmul.f32 %v1322, %v1329
  %v1338 = vadd.f32 %v1336, %v1337
  %v1339 = vtanh.pop %v1338
  %v1340 = vmul.f32 %v1335, %v1339
  %s1341 = scalar_lea.vmem %s0, 56
  %v1342 = vld [vmem:[%s1341] sm:$0xff]
  %1343 = vmatprep.subr.mxu0 %v17
  %1344 = vmatpush1.msra.mxu0 %v16
  %1345 = vmatprep.subr.mxu0 %v21
  %1346 = vmatpush1.msra.mxu0 %v20
  %1347 = vmatprep.subr.mxu0 %v25
  %1348 = vmatpush1.msra.mxu0 %v24
  %1349 = vmatprep.subr.mxu0 %v29
  %1350 = vmatpush1.msra.mxu0 %v28
  %1351 = vmatprep.subr.mxu0 %v33
  %1352 = vmatpush1.msra.mxu0 %v32
  %1353 = vmatprep.subr.mxu0 %v37
  %1354 = vmatpush1.msra.mxu0 %v36
  %1355 = vmatprep.subr.mxu0 %v41
  %1356 = vmatpush1.msra.mxu0 %v40
  %1357 = vmatprep.subr.mxu0 %v45
  %1358 = vmatpush1.msra.mxu0 %v44
  %1359 = vmatprep.subr.mxu0 %v49
  %1360 = vmatpush1.msra.mxu0 %v48
  %1361 = vmatprep.subr.mxu0 %v53
  %1362 = vmatpush1.msra.mxu0 %v52
  %1363 = vmatprep.subr.mxu0 %v57
  %1364 = vmatpush1.msra.mxu0 %v56
  %1365 = vmatprep.subr.mxu0 %v61
  %1366 = vmatpush1.msra.mxu0 %v60
  %1367 = vmatprep.subr.mxu0 %v65
  %1368 = vmatpush1.msra.mxu0 %v64
  %1369 = vmatprep.subr.mxu0 %v69
  %1370 = vmatpush1.msra.mxu0 %v68
  %1371 = vmatprep.subr.mxu0 %v73
  %1372 = vmatpush1.msra.mxu0 %v72
  %1373 = vmatprep.subr.mxu0 %v77
  %1374 = vmatpush1.msra.mxu0 %v76
  %1375 = vmatprep.subr.mxu0 %v81
  %1376 = vmatpush1.msra.mxu0 %v80
  %1377 = vmatprep.subr.mxu0 %v85
  %1378 = vmatpush1.msra.mxu0 %v84
  %1379 = vmatprep.subr.mxu0 %v89
  %1380 = vmatpush1.msra.mxu0 %v88
  %1381 = vmatprep.subr.mxu0 %v93
  %1382 = vmatpush1.msra.mxu0 %v92
  %1383 = vmatprep.subr.mxu0 %v97
  %1384 = vmatpush1.msra.mxu0 %v96
  %1385 = vmatprep.subr.mxu0 %v101
  %1386 = vmatpush1.msra.mxu0 %v100
  %1387 = vmatprep.subr.mxu0 %v105
  %1388 = vmatpush1.msra.mxu0 %v104
  %1389 = vmatprep.subr.mxu0 %v109
  %1390 = vmatpush1.msra.mxu0 %v108
  %1391 = vmatprep.subr.mxu0 %v113
  %1392 = vmatpush1.msra.mxu0 %v112
  %1393 = vmatprep.subr.mxu0 %v117
  %1394 = vmatpush1.msra.mxu0 %v116
  %1395 = vmatprep.subr.mxu0 %v121
  %1396 = vmatpush1.msra.mxu0 %v120
  %1397 = vmatprep.subr.mxu0 %v125
  %1398 = vmatpush1.msra.mxu0 %v124
  %1399 = vmatprep.subr.mxu0 %v129
  %1400 = vmatpush1.msra.mxu0 %v128
  %1401 = vmatprep.subr.mxu0 %v133
  %1402 = vmatpush1.msra.mxu0 %v132
  %1403 = vmatprep.subr.mxu0 %v137
  %1404 = vmatpush1.msra.mxu0 %v136
  %1405 = vmatprep.subr.mxu0 %v141
  %1406 = vmatpush1.msra.mxu0 %v140
  %1407 = vmatprep.mubr.f32.mxu0 %v1340
  %1408 = vmatmul.mubr.f32.gmra.mrb[0].mxu0 %v1342
  %v1409 = vpop.f32.mrb[0].mxu0
  %v1410 = vadd.f32 %v150, %v1409
  %v1411 = vpop.f32.mrb[0].mxu0
  %v1412 = vadd.f32 %v154, %v1411
  %1413 = vdwg.mxu0
  %1414 = vmatprep.subr.mxu0 %v19
  %1415 = vmatpush1.msra.mxu0 %v18
  %1416 = vmatprep.subr.mxu0 %v23
  %1417 = vmatpush1.msra.mxu0 %v22
  %1418 = vmatprep.subr.mxu0 %v27
  %1419 = vmatpush1.msra.mxu0 %v26
  %1420 = vmatprep.subr.mxu0 %v31
  %1421 = vmatpush1.msra.mxu0 %v30
  %1422 = vmatprep.subr.mxu0 %v35
  %1423 = vmatpush1.msra.mxu0 %v34
  %1424 = vmatprep.subr.mxu0 %v39
  %1425 = vmatpush1.msra.mxu0 %v38
  %1426 = vmatprep.subr.mxu0 %v43
  %1427 = vmatpush1.msra.mxu0 %v42
  %1428 = vmatprep.subr.mxu0 %v47
  %1429 = vmatpush1.msra.mxu0 %v46
  %1430 = vmatprep.subr.mxu0 %v51
  %1431 = vmatpush1.msra.mxu0 %v50
  %1432 = vmatprep.subr.mxu0 %v55
  %1433 = vmatpush1.msra.mxu0 %v54
  %1434 = vmatprep.subr.mxu0 %v59
  %1435 = vmatpush1.msra.mxu0 %v58
  %1436 = vmatprep.subr.mxu0 %v63
  %1437 = vmatpush1.msra.mxu0 %v62
  %1438 = vmatprep.subr.mxu0 %v67
  %1439 = vmatpush1.msra.mxu0 %v66
  %1440 = vmatprep.subr.mxu0 %v71
  %1441 = vmatpush1.msra.mxu0 %v70
  %1442 = vmatprep.subr.mxu0 %v75
  %1443 = vmatpush1.msra.mxu0 %v74
  %1444 = vmatprep.subr.mxu0 %v79
  %1445 = vmatpush1.msra.mxu0 %v78
  %1446 = vmatprep.subr.mxu0 %v83
  %1447 = vmatpush1.msra.mxu0 %v82
  %1448 = vmatprep.subr.mxu0 %v87
  %1449 = vmatpush1.msra.mxu0 %v86
  %1450 = vmatprep.subr.mxu0 %v91
  %1451 = vmatpush1.msra.mxu0 %v90
  %1452 = vmatprep.subr.mxu0 %v95
  %1453 = vmatpush1.msra.mxu0 %v94
  %1454 = vmatprep.subr.mxu0 %v99
  %1455 = vmatpush1.msra.mxu0 %v98
  %1456 = vmatprep.subr.mxu0 %v103
  %1457 = vmatpush1.msra.mxu0 %v102
  %1458 = vmatprep.subr.mxu0 %v107
  %1459 = vmatpush1.msra.mxu0 %v106
  %1460 = vmatprep.subr.mxu0 %v111
  %1461 = vmatpush1.msra.mxu0 %v110
  %1462 = vmatprep.subr.mxu0 %v115
  %1463 = vmatpush1.msra.mxu0 %v114
  %1464 = vmatprep.subr.mxu0 %v119
  %1465 = vmatpush1.msra.mxu0 %v118
  %1466 = vmatprep.subr.mxu0 %v123
  %1467 = vmatpush1.msra.mxu0 %v122
  %1468 = vmatprep.subr.mxu0 %v127
  %1469 = vmatpush1.msra.mxu0 %v126
  %1470 = vmatprep.subr.mxu0 %v131
  %1471 = vmatpush1.msra.mxu0 %v130
  %1472 = vmatprep.subr.mxu0 %v135
  %1473 = vmatpush1.msra.mxu0 %v134
  %1474 = vmatprep.subr.mxu0 %v139
  %1475 = vmatpush1.msra.mxu0 %v138
  %1476 = vmatprep.subr.mxu0 %v143
  %1477 = vmatpush1.msra.mxu0 %v142
  %1478 = vmatprep.mubr.f32.mxu0 %v1340
  %1479 = vmatmul.mubr.f32.gmra.mrb[0].mxu0 %v1342
  %v1480 = vpop.f32.mrb[0].mxu0
  %v1481 = vadd.f32 %v158, %v1480
  %v1482 = vpop.f32.mrb[0].mxu0
  %v1483 = vadd.f32 %v162, %v1482
  %1484 = vdwg.mxu0
  %v1485 = vxor.u32 %v1410, 2147483648
  %v1486 = vmul.f32 %v1485, 1.442695
  %v1487 = vpow.pop %v1486
  %v1488 = vadd.f32 %v1487, 1.0
  %v1489 = vrcp.pop %v1488
  %v1490 = vmul.f32 1.0, %v1489
  %v1491 = vxor.u32 %v1412, 2147483648
  %v1492 = vmul.f32 %v1491, 1.442695
  %v1493 = vpow.pop %v1492
  %v1494 = vadd.f32 %v1493, 1.0
  %v1495 = vrcp.pop %v1494
  %v1496 = vmul.f32 1.0, %v1495
  %v1497 = vtanh.pop %v1481
  %v1498 = vxor.u32 %v1483, 2147483648
  %v1499 = vmul.f32 %v1498, 1.442695
  %v1500 = vpow.pop %v1499
  %v1501 = vadd.f32 %v1500, 1.0
  %v1502 = vrcp.pop %v1501
  %v1503 = vmul.f32 1.0, %v1502
  %v1504 = vmul.f32 %v1496, %v1338
  %v1505 = vmul.f32 %v1490, %v1497
  %v1506 = vadd.f32 %v1504, %v1505
  %v1507 = vtanh.pop %v1506
  %v1508 = vmul.f32 %v1503, %v1507
  %s1509 = scalar_lea.vmem %s0, 64
  %v1510 = vld [vmem:[%s1509] sm:$0xff]
  %1511 = vmatprep.subr.mxu0 %v17
  %1512 = vmatpush1.msra.mxu0 %v16
  %1513 = vmatprep.subr.mxu0 %v21
  %1514 = vmatpush1.msra.mxu0 %v20
  %1515 = vmatprep.subr.mxu0 %v25
  %1516 = vmatpush1.msra.mxu0 %v24
  %1517 = vmatprep.subr.mxu0 %v29
  %1518 = vmatpush1.msra.mxu0 %v28
  %1519 = vmatprep.subr.mxu0 %v33
  %1520 = vmatpush1.msra.mxu0 %v32
  %1521 = vmatprep.subr.mxu0 %v37
  %1522 = vmatpush1.msra.mxu0 %v36
  %1523 = vmatprep.subr.mxu0 %v41
  %1524 = vmatpush1.msra.mxu0 %v40
  %1525 = vmatprep.subr.mxu0 %v45
  %1526 = vmatpush1.msra.mxu0 %v44
  %1527 = vmatprep.subr.mxu0 %v49
  %1528 = vmatpush1.msra.mxu0 %v48
  %1529 = vmatprep.subr.mxu0 %v53
  %1530 = vmatpush1.msra.mxu0 %v52
  %1531 = vmatprep.subr.mxu0 %v57
  %1532 = vmatpush1.msra.mxu0 %v56
  %1533 = vmatprep.subr.mxu0 %v61
  %1534 = vmatpush1.msra.mxu0 %v60
  %1535 = vmatprep.subr.mxu0 %v65
  %1536 = vmatpush1.msra.mxu0 %v64
  %1537 = vmatprep.subr.mxu0 %v69
  %1538 = vmatpush1.msra.mxu0 %v68
  %1539 = vmatprep.subr.mxu0 %v73
  %1540 = vmatpush1.msra.mxu0 %v72
  %1541 = vmatprep.subr.mxu0 %v77
  %1542 = vmatpush1.msra.mxu0 %v76
  %1543 = vmatprep.subr.mxu0 %v81
  %1544 = vmatpush1.msra.mxu0 %v80
  %1545 = vmatprep.subr.mxu0 %v85
  %1546 = vmatpush1.msra.mxu0 %v84
  %1547 = vmatprep.subr.mxu0 %v89
  %1548 = vmatpush1.msra.mxu0 %v88
  %1549 = vmatprep.subr.mxu0 %v93
  %1550 = vmatpush1.msra.mxu0 %v92
  %1551 = vmatprep.subr.mxu0 %v97
  %1552 = vmatpush1.msra.mxu0 %v96
  %1553 = vmatprep.subr.mxu0 %v101
  %1554 = vmatpush1.msra.mxu0 %v100
  %1555 = vmatprep.subr.mxu0 %v105
  %1556 = vmatpush1.msra.mxu0 %v104
  %1557 = vmatprep.subr.mxu0 %v109
  %1558 = vmatpush1.msra.mxu0 %v108
  %1559 = vmatprep.subr.mxu0 %v113
  %1560 = vmatpush1.msra.mxu0 %v112
  %1561 = vmatprep.subr.mxu0 %v117
  %1562 = vmatpush1.msra.mxu0 %v116
  %1563 = vmatprep.subr.mxu0 %v121
  %1564 = vmatpush1.msra.mxu0 %v120
  %1565 = vmatprep.subr.mxu0 %v125
  %1566 = vmatpush1.msra.mxu0 %v124
  %1567 = vmatprep.subr.mxu0 %v129
  %1568 = vmatpush1.msra.mxu0 %v128
  %1569 = vmatprep.subr.mxu0 %v133
  %1570 = vmatpush1.msra.mxu0 %v132
  %1571 = vmatprep.subr.mxu0 %v137
  %1572 = vmatpush1.msra.mxu0 %v136
  %1573 = vmatprep.subr.mxu0 %v141
  %1574 = vmatpush1.msra.mxu0 %v140
  %1575 = vmatprep.mubr.f32.mxu0 %v1508
  %1576 = vmatmul.mubr.f32.gmra.mrb[0].mxu0 %v1510
  %v1577 = vpop.f32.mrb[0].mxu0
  %v1578 = vadd.f32 %v150, %v1577
  %v1579 = vpop.f32.mrb[0].mxu0
  %v1580 = vadd.f32 %v154, %v1579
  %1581 = vdwg.mxu0
  %1582 = vmatprep.subr.mxu0 %v19
  %1583 = vmatpush1.msra.mxu0 %v18
  %1584 = vmatprep.subr.mxu0 %v23
  %1585 = vmatpush1.msra.mxu0 %v22
  %1586 = vmatprep.subr.mxu0 %v27
  %1587 = vmatpush1.msra.mxu0 %v26
  %1588 = vmatprep.subr.mxu0 %v31
  %1589 = vmatpush1.msra.mxu0 %v30
  %1590 = vmatprep.subr.mxu0 %v35
  %1591 = vmatpush1.msra.mxu0 %v34
  %1592 = vmatprep.subr.mxu0 %v39
  %1593 = vmatpush1.msra.mxu0 %v38
  %1594 = vmatprep.subr.mxu0 %v43
  %1595 = vmatpush1.msra.mxu0 %v42
  %1596 = vmatprep.subr.mxu0 %v47
  %1597 = vmatpush1.msra.mxu0 %v46
  %1598 = vmatprep.subr.mxu0 %v51
  %1599 = vmatpush1.msra.mxu0 %v50
  %1600 = vmatprep.subr.mxu0 %v55
  %1601 = vmatpush1.msra.mxu0 %v54
  %1602 = vmatprep.subr.mxu0 %v59
  %1603 = vmatpush1.msra.mxu0 %v58
  %1604 = vmatprep.subr.mxu0 %v63
  %1605 = vmatpush1.msra.mxu0 %v62
  %1606 = vmatprep.subr.mxu0 %v67
  %1607 = vmatpush1.msra.mxu0 %v66
  %1608 = vmatprep.subr.mxu0 %v71
  %1609 = vmatpush1.msra.mxu0 %v70
  %1610 = vmatprep.subr.mxu0 %v75
  %1611 = vmatpush1.msra.mxu0 %v74
  %1612 = vmatprep.subr.mxu0 %v79
  %1613 = vmatpush1.msra.mxu0 %v78
  %1614 = vmatprep.subr.mxu0 %v83
  %1615 = vmatpush1.msra.mxu0 %v82
  %1616 = vmatprep.subr.mxu0 %v87
  %1617 = vmatpush1.msra.mxu0 %v86
  %1618 = vmatprep.subr.mxu0 %v91
  %1619 = vmatpush1.msra.mxu0 %v90
  %1620 = vmatprep.subr.mxu0 %v95
  %1621 = vmatpush1.msra.mxu0 %v94
  %1622 = vmatprep.subr.mxu0 %v99
  %1623 = vmatpush1.msra.mxu0 %v98
  %1624 = vmatprep.subr.mxu0 %v103
  %1625 = vmatpush1.msra.mxu0 %v102
  %1626 = vmatprep.subr.mxu0 %v107
  %1627 = vmatpush1.msra.mxu0 %v106
  %1628 = vmatprep.subr.mxu0 %v111
  %1629 = vmatpush1.msra.mxu0 %v110
  %1630 = vmatprep.subr.mxu0 %v115
  %1631 = vmatpush1.msra.mxu0 %v114
  %1632 = vmatprep.subr.mxu0 %v119
  %1633 = vmatpush1.msra.mxu0 %v118
  %1634 = vmatprep.subr.mxu0 %v123
  %1635 = vmatpush1.msra.mxu0 %v122
  %1636 = vmatprep.subr.mxu0 %v127
  %1637 = vmatpush1.msra.mxu0 %v126
  %1638 = vmatprep.subr.mxu0 %v131
  %1639 = vmatpush1.msra.mxu0 %v130
  %1640 = vmatprep.subr.mxu0 %v135
  %1641 = vmatpush1.msra.mxu0 %v134
  %1642 = vmatprep.subr.mxu0 %v139
  %1643 = vmatpush1.msra.mxu0 %v138
  %1644 = vmatprep.subr.mxu0 %v143
  %1645 = vmatpush1.msra.mxu0 %v142
  %1646 = vmatprep.mubr.f32.mxu0 %v1508
  %1647 = vmatmul.mubr.f32.gmra.mrb[0].mxu0 %v1510
  %v1648 = vpop.f32.mrb[0].mxu0
  %v1649 = vadd.f32 %v158, %v1648
  %v1650 = vpop.f32.mrb[0].mxu0
  %v1651 = vadd.f32 %v162, %v1650
  %1652 = vdwg.mxu0
  %v1653 = vxor.u32 %v1578, 2147483648
  %v1654 = vmul.f32 %v1653, 1.442695
  %v1655 = vpow.pop %v1654
  %v1656 = vadd.f32 %v1655, 1.0
  %v1657 = vrcp.pop %v1656
  %v1658 = vmul.f32 1.0, %v1657
  %v1659 = vxor.u32 %v1580, 2147483648
  %v1660 = vmul.f32 %v1659, 1.442695
  %v1661 = vpow.pop %v1660
  %v1662 = vadd.f32 %v1661, 1.0
  %v1663 = vrcp.pop %v1662
  %v1664 = vmul.f32 1.0, %v1663
  %v1665 = vtanh.pop %v1649
  %v1666 = vxor.u32 %v1651, 2147483648
  %v1667 = vmul.f32 %v1666, 1.442695
  %v1668 = vpow.pop %v1667
  %v1669 = vadd.f32 %v1668, 1.0
  %v1670 = vrcp.pop %v1669
  %v1671 = vmul.f32 1.0, %v1670
  %v1672 = vmul.f32 %v1664, %v1506
  %v1673 = vmul.f32 %v1658, %v1665
  %v1674 = vadd.f32 %v1672, %v1673
  %v1675 = vtanh.pop %v1674
  %v1676 = vmul.f32 %v1671, %v1675
  %s1677 = scalar_lea.vmem %s0, 72
  %v1678 = vld [vmem:[%s1677] sm:$0xff]
  %1679 = vmatprep.subr.mxu0 %v17
  %1680 = vmatpush1.msra.mxu0 %v16
  %1681 = vmatprep.subr.mxu0 %v21
  %1682 = vmatpush1.msra.mxu0 %v20
  %1683 = vmatprep.subr.mxu0 %v25
  %1684 = vmatpush1.msra.mxu0 %v24
  %1685 = vmatprep.subr.mxu0 %v29
  %1686 = vmatpush1.msra.mxu0 %v28
  %1687 = vmatprep.subr.mxu0 %v33
  %1688 = vmatpush1.msra.mxu0 %v32
  %1689 = vmatprep.subr.mxu0 %v37
  %1690 = vmatpush1.msra.mxu0 %v36
  %1691 = vmatprep.subr.mxu0 %v41
  %1692 = vmatpush1.msra.mxu0 %v40
  %1693 = vmatprep.subr.mxu0 %v45
  %1694 = vmatpush1.msra.mxu0 %v44
  %1695 = vmatprep.subr.mxu0 %v49
  %1696 = vmatpush1.msra.mxu0 %v48
  %1697 = vmatprep.subr.mxu0 %v53
  %1698 = vmatpush1.msra.mxu0 %v52
  %1699 = vmatprep.subr.mxu0 %v57
  %1700 = vmatpush1.msra.mxu0 %v56
  %1701 = vmatprep.subr.mxu0 %v61
  %1702 = vmatpush1.msra.mxu0 %v60
  %1703 = vmatprep.subr.mxu0 %v65
  %1704 = vmatpush1.msra.mxu0 %v64
  %1705 = vmatprep.subr.mxu0 %v69
  %1706 = vmatpush1.msra.mxu0 %v68
  %1707 = vmatprep.subr.mxu0 %v73
  %1708 = vmatpush1.msra.mxu0 %v72
  %1709 = vmatprep.subr.mxu0 %v77
  %1710 = vmatpush1.msra.mxu0 %v76
  %1711 = vmatprep.subr.mxu0 %v81
  %1712 = vmatpush1.msra.mxu0 %v80
  %1713 = vmatprep.subr.mxu0 %v85
  %1714 = vmatpush1.msra.mxu0 %v84
  %1715 = vmatprep.subr.mxu0 %v89
  %1716 = vmatpush1.msra.mxu0 %v88
  %1717 = vmatprep.subr.mxu0 %v93
  %1718 = vmatpush1.msra.mxu0 %v92
  %1719 = vmatprep.subr.mxu0 %v97
  %1720 = vmatpush1.msra.mxu0 %v96
  %1721 = vmatprep.subr.mxu0 %v101
  %1722 = vmatpush1.msra.mxu0 %v100
  %1723 = vmatprep.subr.mxu0 %v105
  %1724 = vmatpush1.msra.mxu0 %v104
  %1725 = vmatprep.subr.mxu0 %v109
  %1726 = vmatpush1.msra.mxu0 %v108
  %1727 = vmatprep.subr.mxu0 %v113
  %1728 = vmatpush1.msra.mxu0 %v112
  %1729 = vmatprep.subr.mxu0 %v117
  %1730 = vmatpush1.msra.mxu0 %v116
  %1731 = vmatprep.subr.mxu0 %v121
  %1732 = vmatpush1.msra.mxu0 %v120
  %1733 = vmatprep.subr.mxu0 %v125
  %1734 = vmatpush1.msra.mxu0 %v124
  %1735 = vmatprep.subr.mxu0 %v129
  %1736 = vmatpush1.msra.mxu0 %v128
  %1737 = vmatprep.subr.mxu0 %v133
  %1738 = vmatpush1.msra.mxu0 %v132
  %1739 = vmatprep.subr.mxu0 %v137
  %1740 = vmatpush1.msra.mxu0 %v136
  %1741 = vmatprep.subr.mxu0 %v141
  %1742 = vmatpush1.msra.mxu0 %v140
  %1743 = vmatprep.mubr.f32.mxu0 %v1676
  %1744 = vmatmul.mubr.f32.gmra.mrb[0].mxu0 %v1678
  %v1745 = vpop.f32.mrb[0].mxu0
  %v1746 = vadd.f32 %v150, %v1745
  %v1747 = vpop.f32.mrb[0].mxu0
  %v1748 = vadd.f32 %v154, %v1747
  %1749 = vdwg.mxu0
  %1750 = vmatprep.subr.mxu0 %v19
  %1751 = vmatpush1.msra.mxu0 %v18
  %1752 = vmatprep.subr.mxu0 %v23
  %1753 = vmatpush1.msra.mxu0 %v22
  %1754 = vmatprep.subr.mxu0 %v27
  %1755 = vmatpush1.msra.mxu0 %v26
  %1756 = vmatprep.subr.mxu0 %v31
  %1757 = vmatpush1.msra.mxu0 %v30
  %1758 = vmatprep.subr.mxu0 %v35
  %1759 = vmatpush1.msra.mxu0 %v34
  %1760 = vmatprep.subr.mxu0 %v39
  %1761 = vmatpush1.msra.mxu0 %v38
  %1762 = vmatprep.subr.mxu0 %v43
  %1763 = vmatpush1.msra.mxu0 %v42
  %1764 = vmatprep.subr.mxu0 %v47
  %1765 = vmatpush1.msra.mxu0 %v46
  %1766 = vmatprep.subr.mxu0 %v51
  %1767 = vmatpush1.msra.mxu0 %v50
  %1768 = vmatprep.subr.mxu0 %v55
  %1769 = vmatpush1.msra.mxu0 %v54
  %1770 = vmatprep.subr.mxu0 %v59
  %1771 = vmatpush1.msra.mxu0 %v58
  %1772 = vmatprep.subr.mxu0 %v63
  %1773 = vmatpush1.msra.mxu0 %v62
  %1774 = vmatprep.subr.mxu0 %v67
  %1775 = vmatpush1.msra.mxu0 %v66
  %1776 = vmatprep.subr.mxu0 %v71
  %1777 = vmatpush1.msra.mxu0 %v70
  %1778 = vmatprep.subr.mxu0 %v75
  %1779 = vmatpush1.msra.mxu0 %v74
  %1780 = vmatprep.subr.mxu0 %v79
  %1781 = vmatpush1.msra.mxu0 %v78
  %1782 = vmatprep.subr.mxu0 %v83
  %1783 = vmatpush1.msra.mxu0 %v82
  %1784 = vmatprep.subr.mxu0 %v87
  %1785 = vmatpush1.msra.mxu0 %v86
  %1786 = vmatprep.subr.mxu0 %v91
  %1787 = vmatpush1.msra.mxu0 %v90
  %1788 = vmatprep.subr.mxu0 %v95
  %1789 = vmatpush1.msra.mxu0 %v94
  %1790 = vmatprep.subr.mxu0 %v99
  %1791 = vmatpush1.msra.mxu0 %v98
  %1792 = vmatprep.subr.mxu0 %v103
  %1793 = vmatpush1.msra.mxu0 %v102
  %1794 = vmatprep.subr.mxu0 %v107
  %1795 = vmatpush1.msra.mxu0 %v106
  %1796 = vmatprep.subr.mxu0 %v111
  %1797 = vmatpush1.msra.mxu0 %v110
  %1798 = vmatprep.subr.mxu0 %v115
  %1799 = vmatpush1.msra.mxu0 %v114
  %1800 = vmatprep.subr.mxu0 %v119
  %1801 = vmatpush1.msra.mxu0 %v118
  %1802 = vmatprep.subr.mxu0 %v123
  %1803 = vmatpush1.msra.mxu0 %v122
  %1804 = vmatprep.subr.mxu0 %v127
  %1805 = vmatpush1.msra.mxu0 %v126
  %1806 = vmatprep.subr.mxu0 %v131
  %1807 = vmatpush1.msra.mxu0 %v130
  %1808 = vmatprep.subr.mxu0 %v135
  %1809 = vmatpush1.msra.mxu0 %v134
  %1810 = vmatprep.subr.mxu0 %v139
  %1811 = vmatpush1.msra.mxu0 %v138
  %1812 = vmatprep.subr.mxu0 %v143
  %1813 = vmatpush1.msra.mxu0 %v142
  %1814 = vmatprep.mubr.f32.mxu0 %v1676
  %1815 = vmatmul.mubr.f32.gmra.mrb[0].mxu0 %v1678
  %v1816 = vpop.f32.mrb[0].mxu0
  %v1817 = vadd.f32 %v158, %v1816
  %v1818 = vpop.f32.mrb[0].mxu0
  %v1819 = vadd.f32 %v162, %v1818
  %1820 = vdwg.mxu0
  %v1821 = vxor.u32 %v1746, 2147483648
  %v1822 = vmul.f32 %v1821, 1.442695
  %v1823 = vpow.pop %v1822
  %v1824 = vadd.f32 %v1823, 1.0
  %v1825 = vrcp.pop %v1824
  %v1826 = vmul.f32 1.0, %v1825
  %v1827 = vxor.u32 %v1748, 2147483648
  %v1828 = vmul.f32 %v1827, 1.442695
  %v1829 = vpow.pop %v1828
  %v1830 = vadd.f32 %v1829, 1.0
  %v1831 = vrcp.pop %v1830
  %v1832 = vmul.f32 1.0, %v1831
  %v1833 = vtanh.pop %v1817
  %v1834 = vxor.u32 %v1819, 2147483648
  %v1835 = vmul.f32 %v1834, 1.442695
  %v1836 = vpow.pop %v1835
  %v1837 = vadd.f32 %v1836, 1.0
  %v1838 = vrcp.pop %v1837
  %v1839 = vmul.f32 1.0, %v1838
  %v1840 = vmul.f32 %v1832, %v1674
  %v1841 = vmul.f32 %v1826, %v1833
  %v1842 = vadd.f32 %v1840, %v1841
  %v1843 = vtanh.pop %v1842
  %v1844 = vmul.f32 %v1839, %v1843
  %s1845 = scalar_lea.vmem %s0, 80
  %v1846 = vld [vmem:[%s1845] sm:$0xff]
  %1847 = vmatprep.subr.mxu0 %v17
  %1848 = vmatpush1.msra.mxu0 %v16
  %1849 = vmatprep.subr.mxu0 %v21
  %1850 = vmatpush1.msra.mxu0 %v20
  %1851 = vmatprep.subr.mxu0 %v25
  %1852 = vmatpush1.msra.mxu0 %v24
  %1853 = vmatprep.subr.mxu0 %v29
  %1854 = vmatpush1.msra.mxu0 %v28
  %1855 = vmatprep.subr.mxu0 %v33
  %1856 = vmatpush1.msra.mxu0 %v32
  %1857 = vmatprep.subr.mxu0 %v37
  %1858 = vmatpush1.msra.mxu0 %v36
  %1859 = vmatprep.subr.mxu0 %v41
  %1860 = vmatpush1.msra.mxu0 %v40
  %1861 = vmatprep.subr.mxu0 %v45
  %1862 = vmatpush1.msra.mxu0 %v44
  %1863 = vmatprep.subr.mxu0 %v49
  %1864 = vmatpush1.msra.mxu0 %v48
  %1865 = vmatprep.subr.mxu0 %v53
  %1866 = vmatpush1.msra.mxu0 %v52
  %1867 = vmatprep.subr.mxu0 %v57
  %1868 = vmatpush1.msra.mxu0 %v56
  %1869 = vmatprep.subr.mxu0 %v61
  %1870 = vmatpush1.msra.mxu0 %v60
  %1871 = vmatprep.subr.mxu0 %v65
  %1872 = vmatpush1.msra.mxu0 %v64
  %1873 = vmatprep.subr.mxu0 %v69
  %1874 = vmatpush1.msra.mxu0 %v68
  %1875 = vmatprep.subr.mxu0 %v73
  %1876 = vmatpush1.msra.mxu0 %v72
  %1877 = vmatprep.subr.mxu0 %v77
  %1878 = vmatpush1.msra.mxu0 %v76
  %1879 = vmatprep.subr.mxu0 %v81
  %1880 = vmatpush1.msra.mxu0 %v80
  %1881 = vmatprep.subr.mxu0 %v85
  %1882 = vmatpush1.msra.mxu0 %v84
  %1883 = vmatprep.subr.mxu0 %v89
  %1884 = vmatpush1.msra.mxu0 %v88
  %1885 = vmatprep.subr.mxu0 %v93
  %1886 = vmatpush1.msra.mxu0 %v92
  %1887 = vmatprep.subr.mxu0 %v97
  %1888 = vmatpush1.msra.mxu0 %v96
  %1889 = vmatprep.subr.mxu0 %v101
  %1890 = vmatpush1.msra.mxu0 %v100
  %1891 = vmatprep.subr.mxu0 %v105
  %1892 = vmatpush1.msra.mxu0 %v104
  %1893 = vmatprep.subr.mxu0 %v109
  %1894 = vmatpush1.msra.mxu0 %v108
  %1895 = vmatprep.subr.mxu0 %v113
  %1896 = vmatpush1.msra.mxu0 %v112
  %1897 = vmatprep.subr.mxu0 %v117
  %1898 = vmatpush1.msra.mxu0 %v116
  %1899 = vmatprep.subr.mxu0 %v121
  %1900 = vmatpush1.msra.mxu0 %v120
  %1901 = vmatprep.subr.mxu0 %v125
  %1902 = vmatpush1.msra.mxu0 %v124
  %1903 = vmatprep.subr.mxu0 %v129
  %1904 = vmatpush1.msra.mxu0 %v128
  %1905 = vmatprep.subr.mxu0 %v133
  %1906 = vmatpush1.msra.mxu0 %v132
  %1907 = vmatprep.subr.mxu0 %v137
  %1908 = vmatpush1.msra.mxu0 %v136
  %1909 = vmatprep.subr.mxu0 %v141
  %1910 = vmatpush1.msra.mxu0 %v140
  %1911 = vmatprep.mubr.f32.mxu0 %v1844
  %1912 = vmatmul.mubr.f32.gmra.mrb[0].mxu0 %v1846
  %v1913 = vpop.f32.mrb[0].mxu0
  %v1914 = vadd.f32 %v150, %v1913
  %v1915 = vpop.f32.mrb[0].mxu0
  %v1916 = vadd.f32 %v154, %v1915
  %1917 = vdwg.mxu0
  %1918 = vmatprep.subr.mxu0 %v19
  %1919 = vmatpush1.msra.mxu0 %v18
  %1920 = vmatprep.subr.mxu0 %v23
  %1921 = vmatpush1.msra.mxu0 %v22
  %1922 = vmatprep.subr.mxu0 %v27
  %1923 = vmatpush1.msra.mxu0 %v26
  %1924 = vmatprep.subr.mxu0 %v31
  %1925 = vmatpush1.msra.mxu0 %v30
  %1926 = vmatprep.subr.mxu0 %v35
  %1927 = vmatpush1.msra.mxu0 %v34
  %1928 = vmatprep.subr.mxu0 %v39
  %1929 = vmatpush1.msra.mxu0 %v38
  %1930 = vmatprep.subr.mxu0 %v43
  %1931 = vmatpush1.msra.mxu0 %v42
  %1932 = vmatprep.subr.mxu0 %v47
  %1933 = vmatpush1.msra.mxu0 %v46
  %1934 = vmatprep.subr.mxu0 %v51
  %1935 = vmatpush1.msra.mxu0 %v50
  %1936 = vmatprep.subr.mxu0 %v55
  %1937 = vmatpush1.msra.mxu0 %v54
  %1938 = vmatprep.subr.mxu0 %v59
  %1939 = vmatpush1.msra.mxu0 %v58
  %1940 = vmatprep.subr.mxu0 %v63
  %1941 = vmatpush1.msra.mxu0 %v62
  %1942 = vmatprep.subr.mxu0 %v67
  %1943 = vmatpush1.msra.mxu0 %v66
  %1944 = vmatprep.subr.mxu0 %v71
  %1945 = vmatpush1.msra.mxu0 %v70
  %1946 = vmatprep.subr.mxu0 %v75
  %1947 = vmatpush1.msra.mxu0 %v74
  %1948 = vmatprep.subr.mxu0 %v79
  %1949 = vmatpush1.msra.mxu0 %v78
  %1950 = vmatprep.subr.mxu0 %v83
  %1951 = vmatpush1.msra.mxu0 %v82
  %1952 = vmatprep.subr.mxu0 %v87
  %1953 = vmatpush1.msra.mxu0 %v86
  %1954 = vmatprep.subr.mxu0 %v91
  %1955 = vmatpush1.msra.mxu0 %v90
  %1956 = vmatprep.subr.mxu0 %v95
  %1957 = vmatpush1.msra.mxu0 %v94
  %1958 = vmatprep.subr.mxu0 %v99
  %1959 = vmatpush1.msra.mxu0 %v98
  %1960 = vmatprep.subr.mxu0 %v103
  %1961 = vmatpush1.msra.mxu0 %v102
  %1962 = vmatprep.subr.mxu0 %v107
  %1963 = vmatpush1.msra.mxu0 %v106
  %1964 = vmatprep.subr.mxu0 %v111
  %1965 = vmatpush1.msra.mxu0 %v110
  %1966 = vmatprep.subr.mxu0 %v115
  %1967 = vmatpush1.msra.mxu0 %v114
  %1968 = vmatprep.subr.mxu0 %v119
  %1969 = vmatpush1.msra.mxu0 %v118
  %1970 = vmatprep.subr.mxu0 %v123
  %1971 = vmatpush1.msra.mxu0 %v122
  %1972 = vmatprep.subr.mxu0 %v127
  %1973 = vmatpush1.msra.mxu0 %v126
  %1974 = vmatprep.subr.mxu0 %v131
  %1975 = vmatpush1.msra.mxu0 %v130
  %1976 = vmatprep.subr.mxu0 %v135
  %1977 = vmatpush1.msra.mxu0 %v134
  %1978 = vmatprep.subr.mxu0 %v139
  %1979 = vmatpush1.msra.mxu0 %v138
  %1980 = vmatprep.subr.mxu0 %v143
  %1981 = vmatpush1.msra.mxu0 %v142
  %1982 = vmatprep.mubr.f32.mxu0 %v1844
  %1983 = vmatmul.mubr.f32.gmra.mrb[0].mxu0 %v1846
  %v1984 = vpop.f32.mrb[0].mxu0
  %v1985 = vadd.f32 %v158, %v1984
  %v1986 = vpop.f32.mrb[0].mxu0
  %v1987 = vadd.f32 %v162, %v1986
  %1988 = vdwg.mxu0
  %v1989 = vxor.u32 %v1914, 2147483648
  %v1990 = vmul.f32 %v1989, 1.442695
  %v1991 = vpow.pop %v1990
  %v1992 = vadd.f32 %v1991, 1.0
  %v1993 = vrcp.pop %v1992
  %v1994 = vmul.f32 1.0, %v1993
  %v1995 = vxor.u32 %v1916, 2147483648
  %v1996 = vmul.f32 %v1995, 1.442695
  %v1997 = vpow.pop %v1996
  %v1998 = vadd.f32 %v1997, 1.0
  %v1999 = vrcp.pop %v1998
  %v2000 = vmul.f32 1.0, %v1999
  %v2001 = vtanh.pop %v1985
  %v2002 = vxor.u32 %v1987, 2147483648
  %v2003 = vmul.f32 %v2002, 1.442695
  %v2004 = vpow.pop %v2003
  %v2005 = vadd.f32 %v2004, 1.0
  %v2006 = vrcp.pop %v2005
  %v2007 = vmul.f32 1.0, %v2006
  %v2008 = vmul.f32 %v2000, %v1842
  %v2009 = vmul.f32 %v1994, %v2001
  %v2010 = vadd.f32 %v2008, %v2009
  %v2011 = vtanh.pop %v2010
  %v2012 = vmul.f32 %v2007, %v2011
  %s2013 = scalar_lea.vmem %s0, 88
  %v2014 = vld [vmem:[%s2013] sm:$0xff]
  %2015 = vmatprep.subr.mxu0 %v17
  %2016 = vmatpush1.msra.mxu0 %v16
  %2017 = vmatprep.subr.mxu0 %v21
  %2018 = vmatpush1.msra.mxu0 %v20
  %2019 = vmatprep.subr.mxu0 %v25
  %2020 = vmatpush1.msra.mxu0 %v24
  %2021 = vmatprep.subr.mxu0 %v29
  %2022 = vmatpush1.msra.mxu0 %v28
  %2023 = vmatprep.subr.mxu0 %v33
  %2024 = vmatpush1.msra.mxu0 %v32
  %2025 = vmatprep.subr.mxu0 %v37
  %2026 = vmatpush1.msra.mxu0 %v36
  %2027 = vmatprep.subr.mxu0 %v41
  %2028 = vmatpush1.msra.mxu0 %v40
  %2029 = vmatprep.subr.mxu0 %v45
  %2030 = vmatpush1.msra.mxu0 %v44
  %2031 = vmatprep.subr.mxu0 %v49
  %2032 = vmatpush1.msra.mxu0 %v48
  %2033 = vmatprep.subr.mxu0 %v53
  %2034 = vmatpush1.msra.mxu0 %v52
  %2035 = vmatprep.subr.mxu0 %v57
  %2036 = vmatpush1.msra.mxu0 %v56
  %2037 = vmatprep.subr.mxu0 %v61
  %2038 = vmatpush1.msra.mxu0 %v60
  %2039 = vmatprep.subr.mxu0 %v65
  %2040 = vmatpush1.msra.mxu0 %v64
  %2041 = vmatprep.subr.mxu0 %v69
  %2042 = vmatpush1.msra.mxu0 %v68
  %2043 = vmatprep.subr.mxu0 %v73
  %2044 = vmatpush1.msra.mxu0 %v72
  %2045 = vmatprep.subr.mxu0 %v77
  %2046 = vmatpush1.msra.mxu0 %v76
  %2047 = vmatprep.subr.mxu0 %v81
  %2048 = vmatpush1.msra.mxu0 %v80
  %2049 = vmatprep.subr.mxu0 %v85
  %2050 = vmatpush1.msra.mxu0 %v84
  %2051 = vmatprep.subr.mxu0 %v89
  %2052 = vmatpush1.msra.mxu0 %v88
  %2053 = vmatprep.subr.mxu0 %v93
  %2054 = vmatpush1.msra.mxu0 %v92
  %2055 = vmatprep.subr.mxu0 %v97
  %2056 = vmatpush1.msra.mxu0 %v96
  %2057 = vmatprep.subr.mxu0 %v101
  %2058 = vmatpush1.msra.mxu0 %v100
  %2059 = vmatprep.subr.mxu0 %v105
  %2060 = vmatpush1.msra.mxu0 %v104
  %2061 = vmatprep.subr.mxu0 %v109
  %2062 = vmatpush1.msra.mxu0 %v108
  %2063 = vmatprep.subr.mxu0 %v113
  %2064 = vmatpush1.msra.mxu0 %v112
  %2065 = vmatprep.subr.mxu0 %v117
  %2066 = vmatpush1.msra.mxu0 %v116
  %2067 = vmatprep.subr.mxu0 %v121
  %2068 = vmatpush1.msra.mxu0 %v120
  %2069 = vmatprep.subr.mxu0 %v125
  %2070 = vmatpush1.msra.mxu0 %v124
  %2071 = vmatprep.subr.mxu0 %v129
  %2072 = vmatpush1.msra.mxu0 %v128
  %2073 = vmatprep.subr.mxu0 %v133
  %2074 = vmatpush1.msra.mxu0 %v132
  %2075 = vmatprep.subr.mxu0 %v137
  %2076 = vmatpush1.msra.mxu0 %v136
  %2077 = vmatprep.subr.mxu0 %v141
  %2078 = vmatpush1.msra.mxu0 %v140
  %2079 = vmatprep.mubr.f32.mxu0 %v2012
  %2080 = vmatmul.mubr.f32.gmra.mrb[0].mxu0 %v2014
  %v2081 = vpop.f32.mrb[0].mxu0
  %v2082 = vadd.f32 %v150, %v2081
  %v2083 = vpop.f32.mrb[0].mxu0
  %v2084 = vadd.f32 %v154, %v2083
  %2085 = vdwg.mxu0
  %2086 = vmatprep.subr.mxu0 %v19
  %2087 = vmatpush1.msra.mxu0 %v18
  %2088 = vmatprep.subr.mxu0 %v23
  %2089 = vmatpush1.msra.mxu0 %v22
  %2090 = vmatprep.subr.mxu0 %v27
  %2091 = vmatpush1.msra.mxu0 %v26
  %2092 = vmatprep.subr.mxu0 %v31
  %2093 = vmatpush1.msra.mxu0 %v30
  %2094 = vmatprep.subr.mxu0 %v35
  %2095 = vmatpush1.msra.mxu0 %v34
  %2096 = vmatprep.subr.mxu0 %v39
  %2097 = vmatpush1.msra.mxu0 %v38
  %2098 = vmatprep.subr.mxu0 %v43
  %2099 = vmatpush1.msra.mxu0 %v42
  %2100 = vmatprep.subr.mxu0 %v47
  %2101 = vmatpush1.msra.mxu0 %v46
  %2102 = vmatprep.subr.mxu0 %v51
  %2103 = vmatpush1.msra.mxu0 %v50
  %2104 = vmatprep.subr.mxu0 %v55
  %2105 = vmatpush1.msra.mxu0 %v54
  %2106 = vmatprep.subr.mxu0 %v59
  %2107 = vmatpush1.msra.mxu0 %v58
  %2108 = vmatprep.subr.mxu0 %v63
  %2109 = vmatpush1.msra.mxu0 %v62
  %2110 = vmatprep.subr.mxu0 %v67
  %2111 = vmatpush1.msra.mxu0 %v66
  %2112 = vmatprep.subr.mxu0 %v71
  %2113 = vmatpush1.msra.mxu0 %v70
  %2114 = vmatprep.subr.mxu0 %v75
  %2115 = vmatpush1.msra.mxu0 %v74
  %2116 = vmatprep.subr.mxu0 %v79
  %2117 = vmatpush1.msra.mxu0 %v78
  %2118 = vmatprep.subr.mxu0 %v83
  %2119 = vmatpush1.msra.mxu0 %v82
  %2120 = vmatprep.subr.mxu0 %v87
  %2121 = vmatpush1.msra.mxu0 %v86
  %2122 = vmatprep.subr.mxu0 %v91
  %2123 = vmatpush1.msra.mxu0 %v90
  %2124 = vmatprep.subr.mxu0 %v95
  %2125 = vmatpush1.msra.mxu0 %v94
  %2126 = vmatprep.subr.mxu0 %v99
  %2127 = vmatpush1.msra.mxu0 %v98
  %2128 = vmatprep.subr.mxu0 %v103
  %2129 = vmatpush1.msra.mxu0 %v102
  %2130 = vmatprep.subr.mxu0 %v107
  %2131 = vmatpush1.msra.mxu0 %v106
  %2132 = vmatprep.subr.mxu0 %v111
  %2133 = vmatpush1.msra.mxu0 %v110
  %2134 = vmatprep.subr.mxu0 %v115
  %2135 = vmatpush1.msra.mxu0 %v114
  %2136 = vmatprep.subr.mxu0 %v119
  %2137 = vmatpush1.msra.mxu0 %v118
  %2138 = vmatprep.subr.mxu0 %v123
  %2139 = vmatpush1.msra.mxu0 %v122
  %2140 = vmatprep.subr.mxu0 %v127
  %2141 = vmatpush1.msra.mxu0 %v126
  %2142 = vmatprep.subr.mxu0 %v131
  %2143 = vmatpush1.msra.mxu0 %v130
  %2144 = vmatprep.subr.mxu0 %v135
  %2145 = vmatpush1.msra.mxu0 %v134
  %2146 = vmatprep.subr.mxu0 %v139
  %2147 = vmatpush1.msra.mxu0 %v138
  %2148 = vmatprep.subr.mxu0 %v143
  %2149 = vmatpush1.msra.mxu0 %v142
  %2150 = vmatprep.mubr.f32.mxu0 %v2012
  %2151 = vmatmul.mubr.f32.gmra.mrb[0].mxu0 %v2014
  %v2152 = vpop.f32.mrb[0].mxu0
  %v2153 = vadd.f32 %v158, %v2152
  %v2154 = vpop.f32.mrb[0].mxu0
  %v2155 = vadd.f32 %v162, %v2154
  %2156 = vdwg.mxu0
  %v2157 = vxor.u32 %v2082, 2147483648
  %v2158 = vmul.f32 %v2157, 1.442695
  %v2159 = vpow.pop %v2158
  %v2160 = vadd.f32 %v2159, 1.0
  %v2161 = vrcp.pop %v2160
  %v2162 = vmul.f32 1.0, %v2161
  %v2163 = vxor.u32 %v2084, 2147483648
  %v2164 = vmul.f32 %v2163, 1.442695
  %v2165 = vpow.pop %v2164
  %v2166 = vadd.f32 %v2165, 1.0
  %v2167 = vrcp.pop %v2166
  %v2168 = vmul.f32 1.0, %v2167
  %v2169 = vtanh.pop %v2153
  %v2170 = vxor.u32 %v2155, 2147483648
  %v2171 = vmul.f32 %v2170, 1.442695
  %v2172 = vpow.pop %v2171
  %v2173 = vadd.f32 %v2172, 1.0
  %v2174 = vrcp.pop %v2173
  %v2175 = vmul.f32 1.0, %v2174
  %v2176 = vmul.f32 %v2168, %v2010
  %v2177 = vmul.f32 %v2162, %v2169
  %v2178 = vadd.f32 %v2176, %v2177
  %v2179 = vtanh.pop %v2178
  %v2180 = vmul.f32 %v2175, %v2179
  %2181 = vst [vmem:[%s3] sm:$0xff] %v2180
  %2182 = vst [vmem:[%s4] sm:$0xff] %v2178
  // Predicated region
  $region14: #{seq2seq_forward.2} parent=0 // pred_check
    _
  $region15: #{seq2seq_forward.2} parent=0 // pred_check_branch
    %2184 = sbr.rel (0) target = $region17
  $region16: #{seq2seq_forward.2} parent=0 // pred_region
    _
  $region17: #{seq2seq_forward.2} parent=0 // pred_fallthru
    _
  // Predicated region
  $region18: #{seq2seq_forward.2} parent=0 // pred_check
    _
  $region19: #{seq2seq_forward.2} parent=0 // pred_check_branch
    %2186 = sbr.rel (0) target = $region21
  $region20: #{seq2seq_forward.2} parent=0 // pred_region
    _
  $region21: #{seq2seq_forward.2} parent=0 // pred_fallthru
    _
  // Predicated region
  $region22: #{seq2seq_forward.2} parent=0 // pred_check
    _
  $region23: #{seq2seq_forward.2} parent=0 // pred_check_branch
    %2188 = sbr.rel (0) target = $region25
  $region24: #{seq2seq_forward.2} parent=0 // pred_region
    _
  $region25: #{seq2seq_forward.2} parent=0 // pred_fallthru
    _
  // Predicated region
  $region26: #{seq2seq_forward.2} parent=0 // pred_check
    _
  $region27: #{seq2seq_forward.2} parent=0 // pred_check_branch
    %2190 = sbr.rel (0) target = $region29
  $region28: #{seq2seq_forward.2} parent=0 // pred_region
    _
  $region29: #{seq2seq_forward.2} parent=0 // pred_fallthru
    _

</llo_original>
